<compile_context>
chip_gen: v7x
topology: tpu7x:2x2x1
jax: 0.10.0
libtpu: 0.0.40
codegen_flags: <defaults>
</compile_context>

<pallas_src>
import jax
import jax.numpy as jnp
import numpy as np
from jax.experimental import pallas as pl
from jax.experimental.pallas import tpu as pltpu

LEAK = 0.2


# --------------------------- kernel 1: style MLP ----------------------------
def _style_kernel(wt_ref, weight_ref, w1s_ref, w2s_ref, w1h_ref, w2h_ref,
                  sw_ref, shift_ref):
    # wt_ref, weight_ref: (C, 1).  w*_ref: (C, C), original Conv2d (out, in)
    # orientation — nothing is transposed or concatenated anywhere.
    wt = wt_ref[...]                                                       # (C, 1)

    def branch(w1_ref, w2_ref):
        h = jnp.dot(w1_ref[...], wt, preferred_element_type=jnp.float32)   # (C, 1)
        h = jnp.where(h > 0, h, LEAK * h)                                  # LeakyReLU(0.2)
        return jnp.dot(w2_ref[...], h, preferred_element_type=jnp.float32) # (C, 1)

    # Fold self.weight into the scale so the hot loop sees exactly two
    # per-channel (C, 1) vectors.
    sw_ref[...] = branch(w1s_ref, w2s_ref) * weight_ref[...]
    shift_ref[...] = branch(w1h_ref, w2h_ref)


# ----------------------- kernel 2: elementwise hot path ---------------------
def _apply_noise_kernel(x_ref, noise_ref, sw_ref, shift_ref, o_ref):
    # x_ref: (1, tc, tl)   noise_ref: (1, 1, tl)   sw_ref/shift_ref: (tc, 1)
    sw = sw_ref[...][None, :, :]       # (1, tc, 1)  broadcast along lanes
    sh = shift_ref[...][None, :, :]    # (1, tc, 1)
    o_ref[...] = (x_ref[...] + sw * noise_ref[...] + sh).astype(o_ref.dtype)


# ------------------------------- tiling logic --------------------------------
def _vmem_budgets():
    """Per-generation (block_budget_bytes, vmem_limit_bytes) for the hot kernel.

    v5e/v6e: 128 MiB physical VMEM -> 8 MiB blocks, 64 MiB scoped limit.
    v7x:      64 MiB physical VMEM -> 4 MiB blocks, 48 MiB scoped limit.
    Unknown: conservative defaults that are safe on every generation.
    """
    try:
        cap = pltpu.get_tpu_info().vmem_capacity_bytes
    except Exception:
        cap = None
    if cap is None:
        return 2 << 20, None
    if cap <= (64 << 20):            # v7x-class
        return 4 << 20, 48 << 20
    return 8 << 20, 64 << 20         # v5e / v6e-class


def _pick_tiles(N, C, HW, elem_bytes, block_budget):
    """(channel tile, spatial tile) for the (N, C, HW) layout.

    Keeps the last two block dims (8, 128)-aligned (or full extent), fits one
    x block in `block_budget`, and guarantees >= 2 grid steps so both v7x
    TensorCores get work even at batch 1.
    """
    if HW % 128 == 0:
        tl = HW
        while tl % 256 == 0 and C * tl * elem_bytes > block_budget:
            tl //= 2
    else:
        tl = HW                      # full-extent lane dim (odd spatial sizes)
    tc = C
    while tc % 16 == 0 and tc * tl * elem_bytes > block_budget:
        tc //= 2                     # fallback for large HW not divisible by 128
    # v7x megacore: ensure at least 2 parallel grid steps when possible.
    if N * (C // tc) * (HW // tl) < 2:
        if tl % 256 == 0:
            tl //= 2
        elif tc % 16 == 0:
            tc //= 2
    assert C % tc == 0 and (tc % 8 == 0 or tc == C)
    assert HW % tl == 0 and (tl % 128 == 0 or tl == HW)
    return tc, tl


# --------------------------------- wrapper -----------------------------------
def apply_noise(x_nchw, w_t, weight, w1s, w2s, w1h, w2h, noise_n1hw, *,
                donate_x=True):
    N, C, H, W = x_nchw.shape
    HW = H * W
    f32 = jnp.float32

    # ---- style MLP: one tiny pallas_call, empty grid (single invocation,
    # single-buffered ~4 MiB of weights), no transposed/concatenated copies,
    # outputs emitted directly as (C, 1) columns for the hot kernel.
    sw_col, shift_col = pl.pallas_call(
        _style_kernel,
        out_shape=(jax.ShapeDtypeStruct((C, 1), f32),
                   jax.ShapeDtypeStruct((C, 1), f32)),
    )(w_t.reshape(C, 1).astype(f32),
      weight.reshape(C, 1).astype(f32),
      w1s, w2s, w1h, w2h)

    # ---- hot elementwise path: NCHW-native, merge H,W into the lane dim
    # (free reshape, no NCHW<->NHWC transposes).
    x3 = x_nchw.reshape(N, C, HW)
    noise3 = noise_n1hw.reshape(N, 1, HW).astype(x3.dtype)

    block_budget, vmem_limit = _vmem_budgets()
    tc, tl = _pick_tiles(N, C, HW, x3.dtype.itemsize, block_budget)
    gc, gl = C // tc, HW // tl

    if gc == 1 and gl == 1:
        # Degenerate tile axes collapsed: one block covers all of (C, HW).
        grid = (N,)
        x_spec = pl.BlockSpec((1, C, HW), lambda n: (n, 0, 0))
        nz_spec = pl.BlockSpec((1, 1, HW), lambda n: (n, 0, 0))
        col_spec = pl.BlockSpec((C, 1), lambda n: (0, 0))
        out_spec = pl.BlockSpec((1, C, HW), lambda n: (n, 0, 0))
        dims = ("parallel",)
    else:
        grid = (N, gc, gl)
        x_spec = pl.BlockSpec((1, tc, tl), lambda n, i, j: (n, i, j))
        nz_spec = pl.BlockSpec((1, 1, tl), lambda n, i, j: (n, 0, j))
        col_spec = pl.BlockSpec((tc, 1), lambda n, i, j: (i, 0))
        out_spec = pl.BlockSpec((1, tc, tl), lambda n, i, j: (n, i, j))
        dims = ("parallel", "parallel", "parallel")

    out3 = pl.pallas_call(
        _apply_noise_kernel,
        out_shape=jax.ShapeDtypeStruct((N, C, HW), x3.dtype),
        grid=grid,
        in_specs=[x_spec, nz_spec, col_spec, col_spec],
        out_specs=out_spec,
        input_output_aliases=({0: 0} if donate_x else {}),
        compiler_params=pltpu.CompilerParams(
            dimension_semantics=dims,
            vmem_limit_bytes=vmem_limit),
    )(x3, noise3, sw_col, shift_col)

    return out3.reshape(N, C, H, W)


# --------------------------------- reference ---------------------------------
def reference(x, w_t, weight, w1s, w2s, w1h, w2h, noise):
    # Pure-JAX reproduction of the PyTorch forward (NCHW, bias-free 1x1 convs).
    def seq(w1, w2, v):
        h = w1 @ v
        h = jnp.where(h > 0, h, LEAK * h)
        return w2 @ h
    sv = seq(w1s, w2s, w_t)
    hv = seq(w1h, w2h, w_t)
    n = weight[None, :, None, None] * noise                 # (N,C,H,W)
    n = sv[None, :, None, None] * n + hv[None, :, None, None]
    return x + n


if __name__ == "__main__":
    # forward hardcodes w_t.view(1, 512, 1, 1)  =>  channels = 512
    C, N, H, W = 512, 2, 16, 16
    key = jax.random.PRNGKey(0)
    k = jax.random.split(key, 7)

    x = jax.random.normal(k[0], (N, C, H, W), jnp.float32)
    w_t = jax.random.normal(k[1], (C,), jnp.float32)

    # Parameters (deterministic, synthetic).  The module's __init__ zero-inits
    # `weight`; a nonzero deterministic vector is used so the noise path is
    # actually exercised.
    weight = jnp.linspace(-0.5, 0.5, C, dtype=jnp.float32)
    w1s = 0.02 * jax.random.normal(k[2], (C, C), jnp.float32)   # Conv2d (out,in,1,1) squeezed
    w2s = 0.02 * jax.random.normal(k[3], (C, C), jnp.float32)
    w1h = 0.02 * jax.random.normal(k[4], (C, C), jnp.float32)
    w2h = 0.02 * jax.random.normal(k[5], (C, C), jnp.float32)

    # torch.randn(N,1,H,W) inside forward -> generated here in the wrapper.
    noise = jax.random.normal(k[6], (N, 1, H, W), jnp.float32)

    out = apply_noise(x, w_t, weight, w1s, w2s, w1h, w2h, noise)
    out = jax.block_until_ready(out)

    ref = reference(x, w_t, weight, w1s, w2s, w1h, w2h, noise)
    np.testing.assert_allclose(np.asarray(out), np.asarray(ref), rtol=1e-4, atol=1e-4)
    print("KERNEL_OK")
</pallas_src>

<mosaic_0001>
module attributes {stable_mosaic.version = 11 : i64} {
  func.func @_style_kernel(%arg0: memref<512x1xf32, #tpu.memory_space<vmem>>, %arg1: memref<512x1xf32, #tpu.memory_space<vmem>>, %arg2: memref<512x512xf32, #tpu.memory_space<vmem>>, %arg3: memref<512x512xf32, #tpu.memory_space<vmem>>, %arg4: memref<512x512xf32, #tpu.memory_space<vmem>>, %arg5: memref<512x512xf32, #tpu.memory_space<vmem>>, %arg6: memref<512x1xf32, #tpu.memory_space<vmem>>, %arg7: memref<512x1xf32, #tpu.memory_space<vmem>>) attributes {dimension_semantics = [], scalar_prefetch = 0 : i64, scratch_operands = 0 : i64, tpu.core_type = #tpu.core_type<tc>} {
    %c0 = arith.constant 0 : index
    %c0_0 = arith.constant 0 : index
    %0 = vector.load %arg0[%c0, %c0_0] : memref<512x1xf32, #tpu.memory_space<vmem>>, vector<512x1xf32>
    %c0_1 = arith.constant 0 : index
    %c0_2 = arith.constant 0 : index
    %1 = vector.load %arg2[%c0_1, %c0_2] : memref<512x512xf32, #tpu.memory_space<vmem>>, vector<512x512xf32>
    %cst = arith.constant dense<0.000000e+00> : vector<512x1xf32>
    %2 = tpu.matmul %1, %0, %cst {dimension_numbers = #tpu.dot_dimension_numbers<[1], [0], [0], [1], [0, 0, 1, 1], [], []>} : vector<512x512xf32>, vector<512x1xf32>, vector<512x1xf32> -> vector<512x1xf32>
    %cst_3 = arith.constant 0.000000e+00 : f32
    %3 = vector.broadcast %cst_3 : f32 to vector<512x1xf32>
    %4 = arith.cmpf ogt, %2, %3 : vector<512x1xf32>
    %cst_4 = arith.constant 2.000000e-01 : f32
    %5 = vector.broadcast %cst_4 : f32 to vector<512x1xf32>
    %6 = arith.mulf %5, %2 : vector<512x1xf32>
    %7 = arith.select %4, %2, %6 : vector<512x1xi1>, vector<512x1xf32>
    %c0_5 = arith.constant 0 : index
    %c0_6 = arith.constant 0 : index
    %8 = vector.load %arg3[%c0_5, %c0_6] : memref<512x512xf32, #tpu.memory_space<vmem>>, vector<512x512xf32>
    %cst_7 = arith.constant dense<0.000000e+00> : vector<512x1xf32>
    %9 = tpu.matmul %8, %7, %cst_7 {dimension_numbers = #tpu.dot_dimension_numbers<[1], [0], [0], [1], [0, 0, 1, 1], [], []>} : vector<512x512xf32>, vector<512x1xf32>, vector<512x1xf32> -> vector<512x1xf32>
    %c0_8 = arith.constant 0 : index
    %c0_9 = arith.constant 0 : index
    %10 = vector.load %arg1[%c0_8, %c0_9] : memref<512x1xf32, #tpu.memory_space<vmem>>, vector<512x1xf32>
    %11 = arith.mulf %9, %10 : vector<512x1xf32>
    %c0_10 = arith.constant 0 : index
    %c0_11 = arith.constant 0 : index
    %12 = vector.load %arg6[%c0_10, %c0_11] : memref<512x1xf32, #tpu.memory_space<vmem>>, vector<512x1xf32>
    tpu.vector_store %arg6[%c0_10, %c0_11], %11 {strides = array<i32>} : memref<512x1xf32, #tpu.memory_space<vmem>>, vector<512x1xf32>,
    %c0_12 = arith.constant 0 : index
    %c0_13 = arith.constant 0 : index
    %13 = vector.load %arg4[%c0_12, %c0_13] : memref<512x512xf32, #tpu.memory_space<vmem>>, vector<512x512xf32>
    %cst_14 = arith.constant dense<0.000000e+00> : vector<512x1xf32>
    %14 = tpu.matmul %13, %0, %cst_14 {dimension_numbers = #tpu.dot_dimension_numbers<[1], [0], [0], [1], [0, 0, 1, 1], [], []>} : vector<512x512xf32>, vector<512x1xf32>, vector<512x1xf32> -> vector<512x1xf32>
    %cst_15 = arith.constant 0.000000e+00 : f32
    %15 = vector.broadcast %cst_15 : f32 to vector<512x1xf32>
    %16 = arith.cmpf ogt, %14, %15 : vector<512x1xf32>
    %cst_16 = arith.constant 2.000000e-01 : f32
    %17 = vector.broadcast %cst_16 : f32 to vector<512x1xf32>
    %18 = arith.mulf %17, %14 : vector<512x1xf32>
    %19 = arith.select %16, %14, %18 : vector<512x1xi1>, vector<512x1xf32>
    %c0_17 = arith.constant 0 : index
    %c0_18 = arith.constant 0 : index
    %20 = vector.load %arg5[%c0_17, %c0_18] : memref<512x512xf32, #tpu.memory_space<vmem>>, vector<512x512xf32>
    %cst_19 = arith.constant dense<0.000000e+00> : vector<512x1xf32>
    %21 = tpu.matmul %20, %19, %cst_19 {dimension_numbers = #tpu.dot_dimension_numbers<[1], [0], [0], [1], [0, 0, 1, 1], [], []>} : vector<512x512xf32>, vector<512x1xf32>, vector<512x1xf32> -> vector<512x1xf32>
    %c0_20 = arith.constant 0 : index
    %c0_21 = arith.constant 0 : index
    %22 = vector.load %arg7[%c0_20, %c0_21] : memref<512x1xf32, #tpu.memory_space<vmem>>, vector<512x1xf32>
    tpu.vector_store %arg7[%c0_20, %c0_21], %21 {strides = array<i32>} : memref<512x1xf32, #tpu.memory_space<vmem>>, vector<512x1xf32>,
    return
  }
}

</mosaic_0001>

<llo_original>
// kernel: tpu_custom_call.1
$region0: #{tpu_custom_call.1}
  #allocation0 [shape = 'u32[]', space=smem, size = 0x4, offset = 0x4, fixed_abs, tag = 'smem constant byte address 0x4 - core index']
  #allocation1 [shape = 'u32[144,128]{1,0:T(1,128)}', space=vmem, size = 0x12000, scoped, tag = 'internal scratch']
  %s0 = inlined_call_operand.vmem [shape: f32[512,1], index: 0, kind: input, shape index: {}]
  %s1 = inlined_call_operand.vmem [shape: f32[512,1], index: 1, kind: input, shape index: {}]
  %s2 = inlined_call_operand.hbm [shape: f32[512,512], index: 2, kind: input, shape index: {}]
  %s3 = inlined_call_operand.hbm [shape: f32[512,512], index: 3, kind: input, shape index: {}]
  %s4 = inlined_call_operand.hbm [shape: f32[512,512], index: 4, kind: input, shape index: {}]
  %s5 = inlined_call_operand.hbm [shape: f32[512,512], index: 5, kind: input, shape index: {}]
  %s6 = inlined_call_operand.vmem [shape: f32[512,1], index: 6, kind: output, shape index: {0}]
  %s7 = inlined_call_operand.vmem [shape: f32[512,1], index: 7, kind: output, shape index: {1}]
  %8 = xla_tuple %s6, %s7
  %s9 = sld [smem:[#allocation0]]
  $region58: #{tpu_custom_call.1} parent=0
    _
  %s11 = ssub.s32 1, %s9
  %s12 = scalar_select 0, %s11, %s9
  $region1: #{tpu_custom_call.1} parent=0
    #allocation2 [shape = 'u8[1048576]{0}', space=vmem, size = 0x100000, scoped, tag = 'input window, operand 2, single buffered']
    #allocation3 [shape = 's32[1]{0}', space=sflag, size = 0x4, scoped, tag = 'scoped memory for tpu_custom_call.1']
    #allocation4 [shape = 'u8[1048576]{0}', space=vmem, size = 0x100000, scoped, tag = 'input window, operand 3, single buffered']
    #allocation5 [shape = 's32[1]{0}', space=sflag, size = 0x4, scoped, tag = 'scoped memory for tpu_custom_call.1']
    #allocation6 [shape = 'u8[1048576]{0}', space=vmem, size = 0x100000, scoped, tag = 'input window, operand 4, single buffered']
    #allocation7 [shape = 'u8[1048576]{0}', space=vmem, size = 0x100000, scoped, tag = 'input window, operand 5, single buffered']
    #allocation8 [shape = 's32[1]{0}', space=sflag, size = 0x4, scoped, tag = 'scoped memory for tpu_custom_call.1']
    %13 = vsyncpa [#allocation3], 0
    %14 = vsyncpa [#allocation5], 0
    %15 = vsyncpa [#allocation8], 0
    // Predicated region
    $region2: #{tpu_custom_call.1} parent=1 // pred_check
      _
    $region3: #{tpu_custom_call.1} parent=1 // pred_check_branch
      %17 = sbr.rel (0) target = $region5
    $region4: #{tpu_custom_call.1} parent=1 // pred_region
      _
    $region5: #{tpu_custom_call.1} parent=1 // pred_fallthru
      _
    // Predicated region
    $region6: #{tpu_custom_call.1} parent=1 // pred_check
      _
    $region7: #{tpu_custom_call.1} parent=1 // pred_check_branch
      %19 = sbr.rel (0) target = $region9
    $region8: #{tpu_custom_call.1} parent=1 // pred_region
      _
    $region9: #{tpu_custom_call.1} parent=1 // pred_fallthru
      _
    // Predicated region
    $region10: #{tpu_custom_call.1} parent=1 // pred_check
      _
    $region11: #{tpu_custom_call.1} parent=1 // pred_check_branch
      %21 = sbr.rel (0) target = $region13
    $region12: #{tpu_custom_call.1} parent=1 // pred_region
      %s23 = ssub.s32 32768, 32768
      %24 = vsyncadd [#allocation3], %s23
      %s25 = sshll.u32 [#allocation2], 4
      %s26 = int_to_ptr.vmem [resolvable:$true] %s25
      %31 = dma.hbm_to_vmem [thread:$0]  %s2, 32768, %s26, [#allocation3], 512, 512, 32
    $region13: #{tpu_custom_call.1} parent=1 // pred_fallthru
      _
    // Predicated region
    $region14: #{tpu_custom_call.1} parent=1 // pred_check
      _
    $region15: #{tpu_custom_call.1} parent=1 // pred_check_branch
      %33 = sbr.rel (0) target = $region17
    $region16: #{tpu_custom_call.1} parent=1 // pred_region
      %s35 = ssub.s32 32768, 32768
      %36 = vsyncadd [#allocation5], %s35
      %s37 = sshll.u32 [#allocation4], 4
      %s38 = int_to_ptr.vmem [resolvable:$true] %s37
      %43 = dma.hbm_to_vmem [thread:$0]  %s3, 32768, %s38, [#allocation5], 512, 512, 32
    $region17: #{tpu_custom_call.1} parent=1 // pred_fallthru
      _
    // Predicated region
    $region18: #{tpu_custom_call.1} parent=1 // pred_check
      _
    $region19: #{tpu_custom_call.1} parent=1 // pred_check_branch
      %45 = sbr.rel (0) target = $region21
    $region20: #{tpu_custom_call.1} parent=1 // pred_region
      %s47 = ssub.s32 32768, 32768
      %48 = vsyncadd [#allocation5], %s47
      %s49 = sshll.u32 [#allocation6], 4
      %s50 = int_to_ptr.vmem [resolvable:$true] %s49
      %55 = dma.hbm_to_vmem [thread:$0]  %s4, 32768, %s50, [#allocation5], 512, 512, 32
    $region21: #{tpu_custom_call.1} parent=1 // pred_fallthru
      _
    // Predicated region
    $region22: #{tpu_custom_call.1} parent=1 // pred_check
      _
    $region23: #{tpu_custom_call.1} parent=1 // pred_check_branch
      %57 = sbr.rel (0) target = $region25
    $region24: #{tpu_custom_call.1} parent=1 // pred_region
      %s59 = ssub.s32 32768, 32768
      %60 = vsyncadd [#allocation8], %s59
      %s61 = sshll.u32 [#allocation7], 4
      %s62 = int_to_ptr.vmem [resolvable:$true] %s61
      %67 = dma.hbm_to_vmem [thread:$0]  %s5, 32768, %s62, [#allocation8], 512, 512, 32
    $region25: #{tpu_custom_call.1} parent=1 // pred_fallthru
      _
    // Predicated region
    $region26: #{tpu_custom_call.1} parent=1 // pred_check
      _
    $region27: #{tpu_custom_call.1} parent=1 // pred_check_branch
      %69 = sbr.rel (0) target = $region29
    $region28: #{tpu_custom_call.1} parent=1 // pred_region
      %70 = dma.done [#allocation3], 32768
    $region29: #{tpu_custom_call.1} parent=1 // pred_fallthru
      _
    // Predicated region
    $region30: #{tpu_custom_call.1} parent=1 // pred_check
      _
    $region31: #{tpu_custom_call.1} parent=1 // pred_check_branch
      %72 = sbr.rel (0) target = $region33
    $region32: #{tpu_custom_call.1} parent=1 // pred_region
      %73 = dma.done [#allocation5], 32768
    $region33: #{tpu_custom_call.1} parent=1 // pred_fallthru
      _
    // Predicated region
    $region34: #{tpu_custom_call.1} parent=1 // pred_check
      _
    $region35: #{tpu_custom_call.1} parent=1 // pred_check_branch
      %75 = sbr.rel (0) target = $region37
    $region36: #{tpu_custom_call.1} parent=1 // pred_region
      %76 = dma.done [#allocation5], 32768
    $region37: #{tpu_custom_call.1} parent=1 // pred_fallthru
      _
    // Predicated region
    $region38: #{tpu_custom_call.1} parent=1 // pred_check
      _
    $region39: #{tpu_custom_call.1} parent=1 // pred_check_branch
      %78 = sbr.rel (0) target = $region41
    $region40: #{tpu_custom_call.1} parent=1 // pred_region
      %79 = dma.done [#allocation8], 32768
    $region41: #{tpu_custom_call.1} parent=1 // pred_fallthru
      _
    %v80 = vld [vmem:[%s0] sm:$0xff]
    %v81 = vld [vmem:[%s0 + $0x8] sm:$0xff]
    %v82 = vld [vmem:[%s0 + $0x10] sm:$0xff]
    %v83 = vld [vmem:[%s0 + $0x18] sm:$0xff]
    %v84 = vld [vmem:[%s0 + $0x20] sm:$0xff]
    %v85 = vld [vmem:[%s0 + $0x28] sm:$0xff]
    %v86 = vld [vmem:[%s0 + $0x30] sm:$0xff]
    %v87 = vld [vmem:[%s0 + $0x38] sm:$0xff]
    %v88 = vld [vmem:[%s0 + $0x40] sm:$0xff]
    %v89 = vld [vmem:[%s0 + $0x48] sm:$0xff]
    %v90 = vld [vmem:[%s0 + $0x50] sm:$0xff]
    %v91 = vld [vmem:[%s0 + $0x58] sm:$0xff]
    %v92 = vld [vmem:[%s0 + $0x60] sm:$0xff]
    %v93 = vld [vmem:[%s0 + $0x68] sm:$0xff]
    %v94 = vld [vmem:[%s0 + $0x70] sm:$0xff]
    %v95 = vld [vmem:[%s0 + $0x78] sm:$0xff]
    %v96 = vld [vmem:[%s0 + $0x80] sm:$0xff]
    %v97 = vld [vmem:[%s0 + $0x88] sm:$0xff]
    %v98 = vld [vmem:[%s0 + $0x90] sm:$0xff]
    %v99 = vld [vmem:[%s0 + $0x98] sm:$0xff]
    %v100 = vld [vmem:[%s0 + $0xa0] sm:$0xff]
    %v101 = vld [vmem:[%s0 + $0xa8] sm:$0xff]
    %v102 = vld [vmem:[%s0 + $0xb0] sm:$0xff]
    %v103 = vld [vmem:[%s0 + $0xb8] sm:$0xff]
    %v104 = vld [vmem:[%s0 + $0xc0] sm:$0xff]
    %v105 = vld [vmem:[%s0 + $0xc8] sm:$0xff]
    %v106 = vld [vmem:[%s0 + $0xd0] sm:$0xff]
    %v107 = vld [vmem:[%s0 + $0xd8] sm:$0xff]
    %v108 = vld [vmem:[%s0 + $0xe0] sm:$0xff]
    %v109 = vld [vmem:[%s0 + $0xe8] sm:$0xff]
    %v110 = vld [vmem:[%s0 + $0xf0] sm:$0xff]
    %v111 = vld [vmem:[%s0 + $0xf8] sm:$0xff]
    %v112 = vld [vmem:[%s0 + $0x100] sm:$0xff]
    %v113 = vld [vmem:[%s0 + $0x108] sm:$0xff]
    %v114 = vld [vmem:[%s0 + $0x110] sm:$0xff]
    %v115 = vld [vmem:[%s0 + $0x118] sm:$0xff]
    %v116 = vld [vmem:[%s0 + $0x120] sm:$0xff]
    %v117 = vld [vmem:[%s0 + $0x128] sm:$0xff]
    %v118 = vld [vmem:[%s0 + $0x130] sm:$0xff]
    %v119 = vld [vmem:[%s0 + $0x138] sm:$0xff]
    %v120 = vld [vmem:[%s0 + $0x140] sm:$0xff]
    %v121 = vld [vmem:[%s0 + $0x148] sm:$0xff]
    %v122 = vld [vmem:[%s0 + $0x150] sm:$0xff]
    %v123 = vld [vmem:[%s0 + $0x158] sm:$0xff]
    %v124 = vld [vmem:[%s0 + $0x160] sm:$0xff]
    %v125 = vld [vmem:[%s0 + $0x168] sm:$0xff]
    %v126 = vld [vmem:[%s0 + $0x170] sm:$0xff]
    %v127 = vld [vmem:[%s0 + $0x178] sm:$0xff]
    %v128 = vld [vmem:[%s0 + $0x180] sm:$0xff]
    %v129 = vld [vmem:[%s0 + $0x188] sm:$0xff]
    %v130 = vld [vmem:[%s0 + $0x190] sm:$0xff]
    %v131 = vld [vmem:[%s0 + $0x198] sm:$0xff]
    %v132 = vld [vmem:[%s0 + $0x1a0] sm:$0xff]
    %v133 = vld [vmem:[%s0 + $0x1a8] sm:$0xff]
    %v134 = vld [vmem:[%s0 + $0x1b0] sm:$0xff]
    %v135 = vld [vmem:[%s0 + $0x1b8] sm:$0xff]
    %v136 = vld [vmem:[%s0 + $0x1c0] sm:$0xff]
    %v137 = vld [vmem:[%s0 + $0x1c8] sm:$0xff]
    %v138 = vld [vmem:[%s0 + $0x1d0] sm:$0xff]
    %v139 = vld [vmem:[%s0 + $0x1d8] sm:$0xff]
    %v140 = vld [vmem:[%s0 + $0x1e0] sm:$0xff]
    %v141 = vld [vmem:[%s0 + $0x1e8] sm:$0xff]
    %v142 = vld [vmem:[%s0 + $0x1f0] sm:$0xff]
    %v143 = vld [vmem:[%s0 + $0x1f8] sm:$0xff]
    %v144 = vld [vmem:[#allocation2] sm:$0xff]
    %v145 = vld [vmem:[#allocation2 + $0x8] sm:$0xff]
    %v146 = vld [vmem:[#allocation2 + $0x10] sm:$0xff]
    %v147 = vld [vmem:[#allocation2 + $0x18] sm:$0xff]
    %v148 = vld [vmem:[#allocation2 + $0x20] sm:$0xff]
    %v149 = vld [vmem:[#allocation2 + $0x28] sm:$0xff]
    %v150 = vld [vmem:[#allocation2 + $0x30] sm:$0xff]
    %v151 = vld [vmem:[#allocation2 + $0x38] sm:$0xff]
    %v152 = vld [vmem:[#allocation2 + $0x40] sm:$0xff]
    %v153 = vld [vmem:[#allocation2 + $0x48] sm:$0xff]
    %v154 = vld [vmem:[#allocation2 + $0x50] sm:$0xff]
    %v155 = vld [vmem:[#allocation2 + $0x58] sm:$0xff]
    %v156 = vld [vmem:[#allocation2 + $0x60] sm:$0xff]
    %v157 = vld [vmem:[#allocation2 + $0x68] sm:$0xff]
    %v158 = vld [vmem:[#allocation2 + $0x70] sm:$0xff]
    %v159 = vld [vmem:[#allocation2 + $0x78] sm:$0xff]
    %v160 = vld [vmem:[#allocation2 + $0x80] sm:$0xff]
    %v161 = vld [vmem:[#allocation2 + $0x88] sm:$0xff]
    %v162 = vld [vmem:[#allocation2 + $0x90] sm:$0xff]
    %v163 = vld [vmem:[#allocation2 + $0x98] sm:$0xff]
    %v164 = vld [vmem:[#allocation2 + $0xa0] sm:$0xff]
    %v165 = vld [vmem:[#allocation2 + $0xa8] sm:$0xff]
    %v166 = vld [vmem:[#allocation2 + $0xb0] sm:$0xff]
    %v167 = vld [vmem:[#allocation2 + $0xb8] sm:$0xff]
    %v168 = vld [vmem:[#allocation2 + $0xc0] sm:$0xff]
    %v169 = vld [vmem:[#allocation2 + $0xc8] sm:$0xff]
    %v170 = vld [vmem:[#allocation2 + $0xd0] sm:$0xff]
    %v171 = vld [vmem:[#allocation2 + $0xd8] sm:$0xff]
    %v172 = vld [vmem:[#allocation2 + $0xe0] sm:$0xff]
    %v173 = vld [vmem:[#allocation2 + $0xe8] sm:$0xff]
    %v174 = vld [vmem:[#allocation2 + $0xf0] sm:$0xff]
    %v175 = vld [vmem:[#allocation2 + $0xf8] sm:$0xff]
    %v176 = vld [vmem:[#allocation2 + $0x100] sm:$0xff]
    %v177 = vld [vmem:[#allocation2 + $0x108] sm:$0xff]
    %v178 = vld [vmem:[#allocation2 + $0x110] sm:$0xff]
    %v179 = vld [vmem:[#allocation2 + $0x118] sm:$0xff]
    %v180 = vld [vmem:[#allocation2 + $0x120] sm:$0xff]
    %v181 = vld [vmem:[#allocation2 + $0x128] sm:$0xff]
    %v182 = vld [vmem:[#allocation2 + $0x130] sm:$0xff]
    %v183 = vld [vmem:[#allocation2 + $0x138] sm:$0xff]
    %v184 = vld [vmem:[#allocation2 + $0x140] sm:$0xff]
    %v185 = vld [vmem:[#allocation2 + $0x148] sm:$0xff]
    %v186 = vld [vmem:[#allocation2 + $0x150] sm:$0xff]
    %v187 = vld [vmem:[#allocation2 + $0x158] sm:$0xff]
    %v188 = vld [vmem:[#allocation2 + $0x160] sm:$0xff]
    %v189 = vld [vmem:[#allocation2 + $0x168] sm:$0xff]
    %v190 = vld [vmem:[#allocation2 + $0x170] sm:$0xff]
    %v191 = vld [vmem:[#allocation2 + $0x178] sm:$0xff]
    %v192 = vld [vmem:[#allocation2 + $0x180] sm:$0xff]
    %v193 = vld [vmem:[#allocation2 + $0x188] sm:$0xff]
    %v194 = vld [vmem:[#allocation2 + $0x190] sm:$0xff]
    %v195 = vld [vmem:[#allocation2 + $0x198] sm:$0xff]
    %v196 = vld [vmem:[#allocation2 + $0x1a0] sm:$0xff]
    %v197 = vld [vmem:[#allocation2 + $0x1a8] sm:$0xff]
    %v198 = vld [vmem:[#allocation2 + $0x1b0] sm:$0xff]
    %v199 = vld [vmem:[#allocation2 + $0x1b8] sm:$0xff]
    %v200 = vld [vmem:[#allocation2 + $0x1c0] sm:$0xff]
    %v201 = vld [vmem:[#allocation2 + $0x1c8] sm:$0xff]
    %v202 = vld [vmem:[#allocation2 + $0x1d0] sm:$0xff]
    %v203 = vld [vmem:[#allocation2 + $0x1d8] sm:$0xff]
    %v204 = vld [vmem:[#allocation2 + $0x1e0] sm:$0xff]
    %v205 = vld [vmem:[#allocation2 + $0x1e8] sm:$0xff]
    %v206 = vld [vmem:[#allocation2 + $0x1f0] sm:$0xff]
    %v207 = vld [vmem:[#allocation2 + $0x1f8] sm:$0xff]
    %v208 = vld [vmem:[#allocation2 + $0x200] sm:$0xff]
    %v209 = vld [vmem:[#allocation2 + $0x208] sm:$0xff]
    %v210 = vld [vmem:[#allocation2 + $0x210] sm:$0xff]
    %v211 = vld [vmem:[#allocation2 + $0x218] sm:$0xff]
    %v212 = vld [vmem:[#allocation2 + $0x220] sm:$0xff]
    %v213 = vld [vmem:[#allocation2 + $0x228] sm:$0xff]
    %v214 = vld [vmem:[#allocation2 + $0x230] sm:$0xff]
    %v215 = vld [vmem:[#allocation2 + $0x238] sm:$0xff]
    %v216 = vld [vmem:[#allocation2 + $0x240] sm:$0xff]
    %v217 = vld [vmem:[#allocation2 + $0x248] sm:$0xff]
    %v218 = vld [vmem:[#allocation2 + $0x250] sm:$0xff]
    %v219 = vld [vmem:[#allocation2 + $0x258] sm:$0xff]
    %v220 = vld [vmem:[#allocation2 + $0x260] sm:$0xff]
    %v221 = vld [vmem:[#allocation2 + $0x268] sm:$0xff]
    %v222 = vld [vmem:[#allocation2 + $0x270] sm:$0xff]
    %v223 = vld [vmem:[#allocation2 + $0x278] sm:$0xff]
    %v224 = vld [vmem:[#allocation2 + $0x280] sm:$0xff]
    %v225 = vld [vmem:[#allocation2 + $0x288] sm:$0xff]
    %v226 = vld [vmem:[#allocation2 + $0x290] sm:$0xff]
    %v227 = vld [vmem:[#allocation2 + $0x298] sm:$0xff]
    %v228 = vld [vmem:[#allocation2 + $0x2a0] sm:$0xff]
    %v229 = vld [vmem:[#allocation2 + $0x2a8] sm:$0xff]
    %v230 = vld [vmem:[#allocation2 + $0x2b0] sm:$0xff]
    %v231 = vld [vmem:[#allocation2 + $0x2b8] sm:$0xff]
    %v232 = vld [vmem:[#allocation2 + $0x2c0] sm:$0xff]
    %v233 = vld [vmem:[#allocation2 + $0x2c8] sm:$0xff]
    %v234 = vld [vmem:[#allocation2 + $0x2d0] sm:$0xff]
    %v235 = vld [vmem:[#allocation2 + $0x2d8] sm:$0xff]
    %v236 = vld [vmem:[#allocation2 + $0x2e0] sm:$0xff]
    %v237 = vld [vmem:[#allocation2 + $0x2e8] sm:$0xff]
    %v238 = vld [vmem:[#allocation2 + $0x2f0] sm:$0xff]
    %v239 = vld [vmem:[#allocation2 + $0x2f8] sm:$0xff]
    %v240 = vld [vmem:[#allocation2 + $0x300] sm:$0xff]
    %v241 = vld [vmem:[#allocation2 + $0x308] sm:$0xff]
    %v242 = vld [vmem:[#allocation2 + $0x310] sm:$0xff]
    %v243 = vld [vmem:[#allocation2 + $0x318] sm:$0xff]
    %v244 = vld [vmem:[#allocation2 + $0x320] sm:$0xff]
    %v245 = vld [vmem:[#allocation2 + $0x328] sm:$0xff]
    %v246 = vld [vmem:[#allocation2 + $0x330] sm:$0xff]
    %v247 = vld [vmem:[#allocation2 + $0x338] sm:$0xff]
    %v248 = vld [vmem:[#allocation2 + $0x340] sm:$0xff]
    %v249 = vld [vmem:[#allocation2 + $0x348] sm:$0xff]
    %v250 = vld [vmem:[#allocation2 + $0x350] sm:$0xff]
    %v251 = vld [vmem:[#allocation2 + $0x358] sm:$0xff]
    %v252 = vld [vmem:[#allocation2 + $0x360] sm:$0xff]
    %v253 = vld [vmem:[#allocation2 + $0x368] sm:$0xff]
    %v254 = vld [vmem:[#allocation2 + $0x370] sm:$0xff]
    %v255 = vld [vmem:[#allocation2 + $0x378] sm:$0xff]
    %v256 = vld [vmem:[#allocation2 + $0x380] sm:$0xff]
    %v257 = vld [vmem:[#allocation2 + $0x388] sm:$0xff]
    %v258 = vld [vmem:[#allocation2 + $0x390] sm:$0xff]
    %v259 = vld [vmem:[#allocation2 + $0x398] sm:$0xff]
    %v260 = vld [vmem:[#allocation2 + $0x3a0] sm:$0xff]
    %v261 = vld [vmem:[#allocation2 + $0x3a8] sm:$0xff]
    %v262 = vld [vmem:[#allocation2 + $0x3b0] sm:$0xff]
    %v263 = vld [vmem:[#allocation2 + $0x3b8] sm:$0xff]
    %v264 = vld [vmem:[#allocation2 + $0x3c0] sm:$0xff]
    %v265 = vld [vmem:[#allocation2 + $0x3c8] sm:$0xff]
    %v266 = vld [vmem:[#allocation2 + $0x3d0] sm:$0xff]
    %v267 = vld [vmem:[#allocation2 + $0x3d8] sm:$0xff]
    %v268 = vld [vmem:[#allocation2 + $0x3e0] sm:$0xff]
    %v269 = vld [vmem:[#allocation2 + $0x3e8] sm:$0xff]
    %v270 = vld [vmem:[#allocation2 + $0x3f0] sm:$0xff]
    %v271 = vld [vmem:[#allocation2 + $0x3f8] sm:$0xff]
    %v272 = vld [vmem:[#allocation2 + $0x400] sm:$0xff]
    %v273 = vld [vmem:[#allocation2 + $0x408] sm:$0xff]
    %v274 = vld [vmem:[#allocation2 + $0x410] sm:$0xff]
    %v275 = vld [vmem:[#allocation2 + $0x418] sm:$0xff]
    %v276 = vld [vmem:[#allocation2 + $0x420] sm:$0xff]
    %v277 = vld [vmem:[#allocation2 + $0x428] sm:$0xff]
    %v278 = vld [vmem:[#allocation2 + $0x430] sm:$0xff]
    %v279 = vld [vmem:[#allocation2 + $0x438] sm:$0xff]
    %v280 = vld [vmem:[#allocation2 + $0x440] sm:$0xff]
    %v281 = vld [vmem:[#allocation2 + $0x448] sm:$0xff]
    %v282 = vld [vmem:[#allocation2 + $0x450] sm:$0xff]
    %v283 = vld [vmem:[#allocation2 + $0x458] sm:$0xff]
    %v284 = vld [vmem:[#allocation2 + $0x460] sm:$0xff]
    %v285 = vld [vmem:[#allocation2 + $0x468] sm:$0xff]
    %v286 = vld [vmem:[#allocation2 + $0x470] sm:$0xff]
    %v287 = vld [vmem:[#allocation2 + $0x478] sm:$0xff]
    %v288 = vld [vmem:[#allocation2 + $0x480] sm:$0xff]
    %v289 = vld [vmem:[#allocation2 + $0x488] sm:$0xff]
    %v290 = vld [vmem:[#allocation2 + $0x490] sm:$0xff]
    %v291 = vld [vmem:[#allocation2 + $0x498] sm:$0xff]
    %v292 = vld [vmem:[#allocation2 + $0x4a0] sm:$0xff]
    %v293 = vld [vmem:[#allocation2 + $0x4a8] sm:$0xff]
    %v294 = vld [vmem:[#allocation2 + $0x4b0] sm:$0xff]
    %v295 = vld [vmem:[#allocation2 + $0x4b8] sm:$0xff]
    %v296 = vld [vmem:[#allocation2 + $0x4c0] sm:$0xff]
    %v297 = vld [vmem:[#allocation2 + $0x4c8] sm:$0xff]
    %v298 = vld [vmem:[#allocation2 + $0x4d0] sm:$0xff]
    %v299 = vld [vmem:[#allocation2 + $0x4d8] sm:$0xff]
    %v300 = vld [vmem:[#allocation2 + $0x4e0] sm:$0xff]
    %v301 = vld [vmem:[#allocation2 + $0x4e8] sm:$0xff]
    %v302 = vld [vmem:[#allocation2 + $0x4f0] sm:$0xff]
    %v303 = vld [vmem:[#allocation2 + $0x4f8] sm:$0xff]
    %v304 = vld [vmem:[#allocation2 + $0x500] sm:$0xff]
    %v305 = vld [vmem:[#allocation2 + $0x508] sm:$0xff]
    %v306 = vld [vmem:[#allocation2 + $0x510] sm:$0xff]
    %v307 = vld [vmem:[#allocation2 + $0x518] sm:$0xff]
    %v308 = vld [vmem:[#allocation2 + $0x520] sm:$0xff]
    %v309 = vld [vmem:[#allocation2 + $0x528] sm:$0xff]
    %v310 = vld [vmem:[#allocation2 + $0x530] sm:$0xff]
    %v311 = vld [vmem:[#allocation2 + $0x538] sm:$0xff]
    %v312 = vld [vmem:[#allocation2 + $0x540] sm:$0xff]
    %v313 = vld [vmem:[#allocation2 + $0x548] sm:$0xff]
    %v314 = vld [vmem:[#allocation2 + $0x550] sm:$0xff]
    %v315 = vld [vmem:[#allocation2 + $0x558] sm:$0xff]
    %v316 = vld [vmem:[#allocation2 + $0x560] sm:$0xff]
    %v317 = vld [vmem:[#allocation2 + $0x568] sm:$0xff]
    %v318 = vld [vmem:[#allocation2 + $0x570] sm:$0xff]
    %v319 = vld [vmem:[#allocation2 + $0x578] sm:$0xff]
    %v320 = vld [vmem:[#allocation2 + $0x580] sm:$0xff]
    %v321 = vld [vmem:[#allocation2 + $0x588] sm:$0xff]
    %v322 = vld [vmem:[#allocation2 + $0x590] sm:$0xff]
    %v323 = vld [vmem:[#allocation2 + $0x598] sm:$0xff]
    %v324 = vld [vmem:[#allocation2 + $0x5a0] sm:$0xff]
    %v325 = vld [vmem:[#allocation2 + $0x5a8] sm:$0xff]
    %v326 = vld [vmem:[#allocation2 + $0x5b0] sm:$0xff]
    %v327 = vld [vmem:[#allocation2 + $0x5b8] sm:$0xff]
    %v328 = vld [vmem:[#allocation2 + $0x5c0] sm:$0xff]
    %v329 = vld [vmem:[#allocation2 + $0x5c8] sm:$0xff]
    %v330 = vld [vmem:[#allocation2 + $0x5d0] sm:$0xff]
    %v331 = vld [vmem:[#allocation2 + $0x5d8] sm:$0xff]
    %v332 = vld [vmem:[#allocation2 + $0x5e0] sm:$0xff]
    %v333 = vld [vmem:[#allocation2 + $0x5e8] sm:$0xff]
    %v334 = vld [vmem:[#allocation2 + $0x5f0] sm:$0xff]
    %v335 = vld [vmem:[#allocation2 + $0x5f8] sm:$0xff]
    %v336 = vld [vmem:[#allocation2 + $0x600] sm:$0xff]
    %v337 = vld [vmem:[#allocation2 + $0x608] sm:$0xff]
    %v338 = vld [vmem:[#allocation2 + $0x610] sm:$0xff]
    %v339 = vld [vmem:[#allocation2 + $0x618] sm:$0xff]
    %v340 = vld [vmem:[#allocation2 + $0x620] sm:$0xff]
    %v341 = vld [vmem:[#allocation2 + $0x628] sm:$0xff]
    %v342 = vld [vmem:[#allocation2 + $0x630] sm:$0xff]
    %v343 = vld [vmem:[#allocation2 + $0x638] sm:$0xff]
    %v344 = vld [vmem:[#allocation2 + $0x640] sm:$0xff]
    %v345 = vld [vmem:[#allocation2 + $0x648] sm:$0xff]
    %v346 = vld [vmem:[#allocation2 + $0x650] sm:$0xff]
    %v347 = vld [vmem:[#allocation2 + $0x658] sm:$0xff]
    %v348 = vld [vmem:[#allocation2 + $0x660] sm:$0xff]
    %v349 = vld [vmem:[#allocation2 + $0x668] sm:$0xff]
    %v350 = vld [vmem:[#allocation2 + $0x670] sm:$0xff]
    %v351 = vld [vmem:[#allocation2 + $0x678] sm:$0xff]
    %v352 = vld [vmem:[#allocation2 + $0x680] sm:$0xff]
    %v353 = vld [vmem:[#allocation2 + $0x688] sm:$0xff]
    %v354 = vld [vmem:[#allocation2 + $0x690] sm:$0xff]
    %v355 = vld [vmem:[#allocation2 + $0x698] sm:$0xff]
    %v356 = vld [vmem:[#allocation2 + $0x6a0] sm:$0xff]
    %v357 = vld [vmem:[#allocation2 + $0x6a8] sm:$0xff]
    %v358 = vld [vmem:[#allocation2 + $0x6b0] sm:$0xff]
    %v359 = vld [vmem:[#allocation2 + $0x6b8] sm:$0xff]
    %v360 = vld [vmem:[#allocation2 + $0x6c0] sm:$0xff]
    %v361 = vld [vmem:[#allocation2 + $0x6c8] sm:$0xff]
    %v362 = vld [vmem:[#allocation2 + $0x6d0] sm:$0xff]
    %v363 = vld [vmem:[#allocation2 + $0x6d8] sm:$0xff]
    %v364 = vld [vmem:[#allocation2 + $0x6e0] sm:$0xff]
    %v365 = vld [vmem:[#allocation2 + $0x6e8] sm:$0xff]
    %v366 = vld [vmem:[#allocation2 + $0x6f0] sm:$0xff]
    %v367 = vld [vmem:[#allocation2 + $0x6f8] sm:$0xff]
    %v368 = vld [vmem:[#allocation2 + $0x700] sm:$0xff]
    %v369 = vld [vmem:[#allocation2 + $0x708] sm:$0xff]
    %v370 = vld [vmem:[#allocation2 + $0x710] sm:$0xff]
    %v371 = vld [vmem:[#allocation2 + $0x718] sm:$0xff]
    %v372 = vld [vmem:[#allocation2 + $0x720] sm:$0xff]
    %v373 = vld [vmem:[#allocation2 + $0x728] sm:$0xff]
    %v374 = vld [vmem:[#allocation2 + $0x730] sm:$0xff]
    %v375 = vld [vmem:[#allocation2 + $0x738] sm:$0xff]
    %v376 = vld [vmem:[#allocation2 + $0x740] sm:$0xff]
    %v377 = vld [vmem:[#allocation2 + $0x748] sm:$0xff]
    %v378 = vld [vmem:[#allocation2 + $0x750] sm:$0xff]
    %v379 = vld [vmem:[#allocation2 + $0x758] sm:$0xff]
    %v380 = vld [vmem:[#allocation2 + $0x760] sm:$0xff]
    %v381 = vld [vmem:[#allocation2 + $0x768] sm:$0xff]
    %v382 = vld [vmem:[#allocation2 + $0x770] sm:$0xff]
    %v383 = vld [vmem:[#allocation2 + $0x778] sm:$0xff]
    %v384 = vld [vmem:[#allocation2 + $0x780] sm:$0xff]
    %v385 = vld [vmem:[#allocation2 + $0x788] sm:$0xff]
    %v386 = vld [vmem:[#allocation2 + $0x790] sm:$0xff]
    %v387 = vld [vmem:[#allocation2 + $0x798] sm:$0xff]
    %v388 = vld [vmem:[#allocation2 + $0x7a0] sm:$0xff]
    %v389 = vld [vmem:[#allocation2 + $0x7a8] sm:$0xff]
    %v390 = vld [vmem:[#allocation2 + $0x7b0] sm:$0xff]
    %v391 = vld [vmem:[#allocation2 + $0x7b8] sm:$0xff]
    %v392 = vld [vmem:[#allocation2 + $0x7c0] sm:$0xff]
    %v393 = vld [vmem:[#allocation2 + $0x7c8] sm:$0xff]
    %v394 = vld [vmem:[#allocation2 + $0x7d0] sm:$0xff]
    %v395 = vld [vmem:[#allocation2 + $0x7d8] sm:$0xff]
    %v396 = vld [vmem:[#allocation2 + $0x7e0] sm:$0xff]
    %v397 = vld [vmem:[#allocation2 + $0x7e8] sm:$0xff]
    %v398 = vld [vmem:[#allocation2 + $0x7f0] sm:$0xff]
    %v399 = vld [vmem:[#allocation2 + $0x7f8] sm:$0xff]
    %400 = vmatprep.subr.mxu0 0.0
    %401 = vmatpush1.msra.mxu0 %v80
    %402 = vmatprep.subr.mxu0 0.0
    %403 = vmatpush1.msra.mxu0 %v81
    %404 = vmatprep.subr.mxu0 0.0
    %405 = vmatpush1.msra.mxu0 %v82
    %406 = vmatprep.subr.mxu0 0.0
    %407 = vmatpush1.msra.mxu0 %v83
    %408 = vmatprep.subr.mxu0 0.0
    %409 = vmatpush1.msra.mxu0 %v84
    %410 = vmatprep.subr.mxu0 0.0
    %411 = vmatpush1.msra.mxu0 %v85
    %412 = vmatprep.subr.mxu0 0.0
    %413 = vmatpush1.msra.mxu0 %v86
    %414 = vmatprep.subr.mxu0 0.0
    %415 = vmatpush1.msra.mxu0 %v87
    %416 = vmatprep.subr.mxu0 0.0
    %417 = vmatpush1.msra.mxu0 %v88
    %418 = vmatprep.subr.mxu0 0.0
    %419 = vmatpush1.msra.mxu0 %v89
    %420 = vmatprep.subr.mxu0 0.0
    %421 = vmatpush1.msra.mxu0 %v90
    %422 = vmatprep.subr.mxu0 0.0
    %423 = vmatpush1.msra.mxu0 %v91
    %424 = vmatprep.subr.mxu0 0.0
    %425 = vmatpush1.msra.mxu0 %v92
    %426 = vmatprep.subr.mxu0 0.0
    %427 = vmatpush1.msra.mxu0 %v93
    %428 = vmatprep.subr.mxu0 0.0
    %429 = vmatpush1.msra.mxu0 %v94
    %430 = vmatprep.subr.mxu0 0.0
    %431 = vmatpush1.msra.mxu0 %v95
    %432 = vmatprep.subr.mxu0 0.0
    %433 = vmatpush1.msra.mxu0 %v96
    %434 = vmatprep.subr.mxu0 0.0
    %435 = vmatpush1.msra.mxu0 %v97
    %436 = vmatprep.subr.mxu0 0.0
    %437 = vmatpush1.msra.mxu0 %v98
    %438 = vmatprep.subr.mxu0 0.0
    %439 = vmatpush1.msra.mxu0 %v99
    %440 = vmatprep.subr.mxu0 0.0
    %441 = vmatpush1.msra.mxu0 %v100
    %442 = vmatprep.subr.mxu0 0.0
    %443 = vmatpush1.msra.mxu0 %v101
    %444 = vmatprep.subr.mxu0 0.0
    %445 = vmatpush1.msra.mxu0 %v102
    %446 = vmatprep.subr.mxu0 0.0
    %447 = vmatpush1.msra.mxu0 %v103
    %448 = vmatprep.subr.mxu0 0.0
    %449 = vmatpush1.msra.mxu0 %v104
    %450 = vmatprep.subr.mxu0 0.0
    %451 = vmatpush1.msra.mxu0 %v105
    %452 = vmatprep.subr.mxu0 0.0
    %453 = vmatpush1.msra.mxu0 %v106
    %454 = vmatprep.subr.mxu0 0.0
    %455 = vmatpush1.msra.mxu0 %v107
    %456 = vmatprep.subr.mxu0 0.0
    %457 = vmatpush1.msra.mxu0 %v108
    %458 = vmatprep.subr.mxu0 0.0
    %459 = vmatpush1.msra.mxu0 %v109
    %460 = vmatprep.subr.mxu0 0.0
    %461 = vmatpush1.msra.mxu0 %v110
    %462 = vmatprep.subr.mxu0 0.0
    %463 = vmatpush1.msra.mxu0 %v111
    %464 = vmatprep.mubr.f32.mxu0 %v145
    %465 = vmatmul.mubr.f32.gmra.mrb[0].mxu0 %v144
    %v466 = vpop.f32.mrb[0].mxu0
    %v467 = vadd.f32 0.0, %v466
    %v468 = vpop.f32.mrb[0].mxu0
    %469 = vmatprep.mubr.f32.mxu0 %v149
    %470 = vmatmul.mubr.f32.gmra.mrb[0].mxu0 %v148
    %v471 = vpop.f32.mrb[0].mxu0
    %v472 = vadd.f32 0.0, %v471
    %v473 = vpop.f32.mrb[0].mxu0
    %474 = vmatprep.mubr.f32.mxu0 %v153
    %475 = vmatmul.mubr.f32.gmra.mrb[0].mxu0 %v152
    %v476 = vpop.f32.mrb[0].mxu0
    %v477 = vadd.f32 0.0, %v476
    %v478 = vpop.f32.mrb[0].mxu0
    %479 = vmatprep.mubr.f32.mxu0 %v157
    %480 = vmatmul.mubr.f32.gmra.mrb[0].mxu0 %v156
    %v481 = vpop.f32.mrb[0].mxu0
    %v482 = vadd.f32 0.0, %v481
    %v483 = vpop.f32.mrb[0].mxu0
    %484 = vmatprep.mubr.f32.mxu0 %v161
    %485 = vmatmul.mubr.f32.gmra.mrb[0].mxu0 %v160
    %v486 = vpop.f32.mrb[0].mxu0
    %v487 = vadd.f32 0.0, %v486
    %v488 = vpop.f32.mrb[0].mxu0
    %489 = vmatprep.mubr.f32.mxu0 %v165
    %490 = vmatmul.mubr.f32.gmra.mrb[0].mxu0 %v164
    %v491 = vpop.f32.mrb[0].mxu0
    %v492 = vadd.f32 0.0, %v491
    %v493 = vpop.f32.mrb[0].mxu0
    %494 = vmatprep.mubr.f32.mxu0 %v169
    %495 = vmatmul.mubr.f32.gmra.mrb[0].mxu0 %v168
    %v496 = vpop.f32.mrb[0].mxu0
    %v497 = vadd.f32 0.0, %v496
    %v498 = vpop.f32.mrb[0].mxu0
    %499 = vmatprep.mubr.f32.mxu0 %v173
    %500 = vmatmul.mubr.f32.gmra.mrb[0].mxu0 %v172
    %v501 = vpop.f32.mrb[0].mxu0
    %v502 = vadd.f32 0.0, %v501
    %v503 = vpop.f32.mrb[0].mxu0
    %504 = vmatprep.mubr.f32.mxu0 %v177
    %505 = vmatmul.mubr.f32.gmra.mrb[0].mxu0 %v176
    %v506 = vpop.f32.mrb[0].mxu0
    %v507 = vadd.f32 0.0, %v506
    %v508 = vpop.f32.mrb[0].mxu0
    %509 = vmatprep.mubr.f32.mxu0 %v181
    %510 = vmatmul.mubr.f32.gmra.mrb[0].mxu0 %v180
    %v511 = vpop.f32.mrb[0].mxu0
    %v512 = vadd.f32 0.0, %v511
    %v513 = vpop.f32.mrb[0].mxu0
    %514 = vmatprep.mubr.f32.mxu0 %v185
    %515 = vmatmul.mubr.f32.gmra.mrb[0].mxu0 %v184
    %v516 = vpop.f32.mrb[0].mxu0
    %v517 = vadd.f32 0.0, %v516
    %v518 = vpop.f32.mrb[0].mxu0
    %519 = vmatprep.mubr.f32.mxu0 %v189
    %520 = vmatmul.mubr.f32.gmra.mrb[0].mxu0 %v188
    %v521 = vpop.f32.mrb[0].mxu0
    %v522 = vadd.f32 0.0, %v521
    %v523 = vpop.f32.mrb[0].mxu0
    %524 = vmatprep.mubr.f32.mxu0 %v193
    %525 = vmatmul.mubr.f32.gmra.mrb[0].mxu0 %v192
    %v526 = vpop.f32.mrb[0].mxu0
    %v527 = vadd.f32 0.0, %v526
    %v528 = vpop.f32.mrb[0].mxu0
    %529 = vmatprep.mubr.f32.mxu0 %v197
    %530 = vmatmul.mubr.f32.gmra.mrb[0].mxu0 %v196
    %v531 = vpop.f32.mrb[0].mxu0
    %v532 = vadd.f32 0.0, %v531
    %v533 = vpop.f32.mrb[0].mxu0
    %534 = vmatprep.mubr.f32.mxu0 %v201
    %535 = vmatmul.mubr.f32.gmra.mrb[0].mxu0 %v200
    %v536 = vpop.f32.mrb[0].mxu0
    %v537 = vadd.f32 0.0, %v536
    %v538 = vpop.f32.mrb[0].mxu0
    %539 = vmatprep.mubr.f32.mxu0 %v205
    %540 = vmatmul.mubr.f32.gmra.mrb[0].mxu0 %v204
    %v541 = vpop.f32.mrb[0].mxu0
    %v542 = vadd.f32 0.0, %v541
    %v543 = vpop.f32.mrb[0].mxu0
    %544 = vmatprep.mubr.f32.mxu0 %v209
    %545 = vmatmul.mubr.f32.gmra.mrb[0].mxu0 %v208
    %v546 = vpop.f32.mrb[0].mxu0
    %v547 = vadd.f32 0.0, %v546
    %v548 = vpop.f32.mrb[0].mxu0
    %549 = vmatprep.mubr.f32.mxu0 %v213
    %550 = vmatmul.mubr.f32.gmra.mrb[0].mxu0 %v212
    %v551 = vpop.f32.mrb[0].mxu0
    %v552 = vadd.f32 0.0, %v551
    %v553 = vpop.f32.mrb[0].mxu0
    %554 = vmatprep.mubr.f32.mxu0 %v217
    %555 = vmatmul.mubr.f32.gmra.mrb[0].mxu0 %v216
    %v556 = vpop.f32.mrb[0].mxu0
    %v557 = vadd.f32 0.0, %v556
    %v558 = vpop.f32.mrb[0].mxu0
    %559 = vmatprep.mubr.f32.mxu0 %v221
    %560 = vmatmul.mubr.f32.gmra.mrb[0].mxu0 %v220
    %v561 = vpop.f32.mrb[0].mxu0
    %v562 = vadd.f32 0.0, %v561
    %v563 = vpop.f32.mrb[0].mxu0
    %564 = vmatprep.mubr.f32.mxu0 %v225
    %565 = vmatmul.mubr.f32.gmra.mrb[0].mxu0 %v224
    %v566 = vpop.f32.mrb[0].mxu0
    %v567 = vadd.f32 0.0, %v566
    %v568 = vpop.f32.mrb[0].mxu0
    %569 = vmatprep.mubr.f32.mxu0 %v229
    %570 = vmatmul.mubr.f32.gmra.mrb[0].mxu0 %v228
    %v571 = vpop.f32.mrb[0].mxu0
    %v572 = vadd.f32 0.0, %v571
    %v573 = vpop.f32.mrb[0].mxu0
    %574 = vmatprep.mubr.f32.mxu0 %v233
    %575 = vmatmul.mubr.f32.gmra.mrb[0].mxu0 %v232
    %v576 = vpop.f32.mrb[0].mxu0
    %v577 = vadd.f32 0.0, %v576
    %v578 = vpop.f32.mrb[0].mxu0
    %579 = vmatprep.mubr.f32.mxu0 %v237
    %580 = vmatmul.mubr.f32.gmra.mrb[0].mxu0 %v236
    %v581 = vpop.f32.mrb[0].mxu0
    %v582 = vadd.f32 0.0, %v581
    %v583 = vpop.f32.mrb[0].mxu0
    %584 = vmatprep.mubr.f32.mxu0 %v241
    %585 = vmatmul.mubr.f32.gmra.mrb[0].mxu0 %v240
    %v586 = vpop.f32.mrb[0].mxu0
    %v587 = vadd.f32 0.0, %v586
    %v588 = vpop.f32.mrb[0].mxu0
    %589 = vmatprep.mubr.f32.mxu0 %v245
    %590 = vmatmul.mubr.f32.gmra.mrb[0].mxu0 %v244
    %v591 = vpop.f32.mrb[0].mxu0
    %v592 = vadd.f32 0.0, %v591
    %v593 = vpop.f32.mrb[0].mxu0
    %594 = vmatprep.mubr.f32.mxu0 %v249
    %595 = vmatmul.mubr.f32.gmra.mrb[0].mxu0 %v248
    %v596 = vpop.f32.mrb[0].mxu0
    %v597 = vadd.f32 0.0, %v596
    %v598 = vpop.f32.mrb[0].mxu0
    %599 = vmatprep.mubr.f32.mxu0 %v253
    %600 = vmatmul.mubr.f32.gmra.mrb[0].mxu0 %v252
    %v601 = vpop.f32.mrb[0].mxu0
    %v602 = vadd.f32 0.0, %v601
    %v603 = vpop.f32.mrb[0].mxu0
    %604 = vmatprep.mubr.f32.mxu0 %v257
    %605 = vmatmul.mubr.f32.gmra.mrb[0].mxu0 %v256
    %v606 = vpop.f32.mrb[0].mxu0
    %v607 = vadd.f32 0.0, %v606
    %v608 = vpop.f32.mrb[0].mxu0
    %609 = vmatprep.mubr.f32.mxu0 %v261
    %610 = vmatmul.mubr.f32.gmra.mrb[0].mxu0 %v260
    %v611 = vpop.f32.mrb[0].mxu0
    %v612 = vadd.f32 0.0, %v611
    %v613 = vpop.f32.mrb[0].mxu0
    %614 = vmatprep.mubr.f32.mxu0 %v265
    %615 = vmatmul.mubr.f32.gmra.mrb[0].mxu0 %v264
    %v616 = vpop.f32.mrb[0].mxu0
    %v617 = vadd.f32 0.0, %v616
    %v618 = vpop.f32.mrb[0].mxu0
    %619 = vmatprep.mubr.f32.mxu0 %v269
    %620 = vmatmul.mubr.f32.gmra.mrb[0].mxu0 %v268
    %v621 = vpop.f32.mrb[0].mxu0
    %v622 = vadd.f32 0.0, %v621
    %v623 = vpop.f32.mrb[0].mxu0
    %624 = vmatprep.mubr.f32.mxu0 %v273
    %625 = vmatmul.mubr.f32.gmra.mrb[0].mxu0 %v272
    %v626 = vpop.f32.mrb[0].mxu0
    %v627 = vadd.f32 0.0, %v626
    %v628 = vpop.f32.mrb[0].mxu0
    %629 = vmatprep.mubr.f32.mxu0 %v277
    %630 = vmatmul.mubr.f32.gmra.mrb[0].mxu0 %v276
    %v631 = vpop.f32.mrb[0].mxu0
    %v632 = vadd.f32 0.0, %v631
    %v633 = vpop.f32.mrb[0].mxu0
    %634 = vmatprep.mubr.f32.mxu0 %v281
    %635 = vmatmul.mubr.f32.gmra.mrb[0].mxu0 %v280
    %v636 = vpop.f32.mrb[0].mxu0
    %v637 = vadd.f32 0.0, %v636
    %v638 = vpop.f32.mrb[0].mxu0
    %639 = vmatprep.mubr.f32.mxu0 %v285
    %640 = vmatmul.mubr.f32.gmra.mrb[0].mxu0 %v284
    %v641 = vpop.f32.mrb[0].mxu0
    %v642 = vadd.f32 0.0, %v641
    %v643 = vpop.f32.mrb[0].mxu0
    %644 = vmatprep.mubr.f32.mxu0 %v289
    %645 = vmatmul.mubr.f32.gmra.mrb[0].mxu0 %v288
    %v646 = vpop.f32.mrb[0].mxu0
    %v647 = vadd.f32 0.0, %v646
    %v648 = vpop.f32.mrb[0].mxu0
    %649 = vmatprep.mubr.f32.mxu0 %v293
    %650 = vmatmul.mubr.f32.gmra.mrb[0].mxu0 %v292
    %v651 = vpop.f32.mrb[0].mxu0
    %v652 = vadd.f32 0.0, %v651
    %v653 = vpop.f32.mrb[0].mxu0
    %654 = vmatprep.mubr.f32.mxu0 %v297
    %655 = vmatmul.mubr.f32.gmra.mrb[0].mxu0 %v296
    %v656 = vpop.f32.mrb[0].mxu0
    %v657 = vadd.f32 0.0, %v656
    %v658 = vpop.f32.mrb[0].mxu0
    %659 = vmatprep.mubr.f32.mxu0 %v301
    %660 = vmatmul.mubr.f32.gmra.mrb[0].mxu0 %v300
    %v661 = vpop.f32.mrb[0].mxu0
    %v662 = vadd.f32 0.0, %v661
    %v663 = vpop.f32.mrb[0].mxu0
    %664 = vmatprep.mubr.f32.mxu0 %v305
    %665 = vmatmul.mubr.f32.gmra.mrb[0].mxu0 %v304
    %v666 = vpop.f32.mrb[0].mxu0
    %v667 = vadd.f32 0.0, %v666
    %v668 = vpop.f32.mrb[0].mxu0
    %669 = vmatprep.mubr.f32.mxu0 %v309
    %670 = vmatmul.mubr.f32.gmra.mrb[0].mxu0 %v308
    %v671 = vpop.f32.mrb[0].mxu0
    %v672 = vadd.f32 0.0, %v671
    %v673 = vpop.f32.mrb[0].mxu0
    %674 = vmatprep.mubr.f32.mxu0 %v313
    %675 = vmatmul.mubr.f32.gmra.mrb[0].mxu0 %v312
    %v676 = vpop.f32.mrb[0].mxu0
    %v677 = vadd.f32 0.0, %v676
    %v678 = vpop.f32.mrb[0].mxu0
    %679 = vmatprep.mubr.f32.mxu0 %v317
    %680 = vmatmul.mubr.f32.gmra.mrb[0].mxu0 %v316
    %v681 = vpop.f32.mrb[0].mxu0
    %v682 = vadd.f32 0.0, %v681
    %v683 = vpop.f32.mrb[0].mxu0
    %684 = vmatprep.mubr.f32.mxu0 %v321
    %685 = vmatmul.mubr.f32.gmra.mrb[0].mxu0 %v320
    %v686 = vpop.f32.mrb[0].mxu0
    %v687 = vadd.f32 0.0, %v686
    %v688 = vpop.f32.mrb[0].mxu0
    %689 = vmatprep.mubr.f32.mxu0 %v325
    %690 = vmatmul.mubr.f32.gmra.mrb[0].mxu0 %v324
    %v691 = vpop.f32.mrb[0].mxu0
    %v692 = vadd.f32 0.0, %v691
    %v693 = vpop.f32.mrb[0].mxu0
    %694 = vmatprep.mubr.f32.mxu0 %v329
    %695 = vmatmul.mubr.f32.gmra.mrb[0].mxu0 %v328
    %v696 = vpop.f32.mrb[0].mxu0
    %v697 = vadd.f32 0.0, %v696
    %v698 = vpop.f32.mrb[0].mxu0
    %699 = vmatprep.mubr.f32.mxu0 %v333
    %700 = vmatmul.mubr.f32.gmra.mrb[0].mxu0 %v332
    %v701 = vpop.f32.mrb[0].mxu0
    %v702 = vadd.f32 0.0, %v701
    %v703 = vpop.f32.mrb[0].mxu0
    %704 = vmatprep.mubr.f32.mxu0 %v337
    %705 = vmatmul.mubr.f32.gmra.mrb[0].mxu0 %v336
    %v706 = vpop.f32.mrb[0].mxu0
    %v707 = vadd.f32 0.0, %v706
    %v708 = vpop.f32.mrb[0].mxu0
    %709 = vmatprep.mubr.f32.mxu0 %v341
    %710 = vmatmul.mubr.f32.gmra.mrb[0].mxu0 %v340
    %v711 = vpop.f32.mrb[0].mxu0
    %v712 = vadd.f32 0.0, %v711
    %v713 = vpop.f32.mrb[0].mxu0
    %714 = vmatprep.mubr.f32.mxu0 %v345
    %715 = vmatmul.mubr.f32.gmra.mrb[0].mxu0 %v344
    %v716 = vpop.f32.mrb[0].mxu0
    %v717 = vadd.f32 0.0, %v716
    %v718 = vpop.f32.mrb[0].mxu0
    %719 = vmatprep.mubr.f32.mxu0 %v349
    %720 = vmatmul.mubr.f32.gmra.mrb[0].mxu0 %v348
    %v721 = vpop.f32.mrb[0].mxu0
    %v722 = vadd.f32 0.0, %v721
    %v723 = vpop.f32.mrb[0].mxu0
    %724 = vmatprep.mubr.f32.mxu0 %v353
    %725 = vmatmul.mubr.f32.gmra.mrb[0].mxu0 %v352
    %v726 = vpop.f32.mrb[0].mxu0
    %v727 = vadd.f32 0.0, %v726
    %v728 = vpop.f32.mrb[0].mxu0
    %729 = vmatprep.mubr.f32.mxu0 %v357
    %730 = vmatmul.mubr.f32.gmra.mrb[0].mxu0 %v356
    %v731 = vpop.f32.mrb[0].mxu0
    %v732 = vadd.f32 0.0, %v731
    %v733 = vpop.f32.mrb[0].mxu0
    %734 = vmatprep.mubr.f32.mxu0 %v361
    %735 = vmatmul.mubr.f32.gmra.mrb[0].mxu0 %v360
    %v736 = vpop.f32.mrb[0].mxu0
    %v737 = vadd.f32 0.0, %v736
    %v738 = vpop.f32.mrb[0].mxu0
    %739 = vmatprep.mubr.f32.mxu0 %v365
    %740 = vmatmul.mubr.f32.gmra.mrb[0].mxu0 %v364
    %v741 = vpop.f32.mrb[0].mxu0
    %v742 = vadd.f32 0.0, %v741
    %v743 = vpop.f32.mrb[0].mxu0
    %744 = vmatprep.mubr.f32.mxu0 %v369
    %745 = vmatmul.mubr.f32.gmra.mrb[0].mxu0 %v368
    %v746 = vpop.f32.mrb[0].mxu0
    %v747 = vadd.f32 0.0, %v746
    %v748 = vpop.f32.mrb[0].mxu0
    %749 = vmatprep.mubr.f32.mxu0 %v373
    %750 = vmatmul.mubr.f32.gmra.mrb[0].mxu0 %v372
    %v751 = vpop.f32.mrb[0].mxu0
    %v752 = vadd.f32 0.0, %v751
    %v753 = vpop.f32.mrb[0].mxu0
    %754 = vmatprep.mubr.f32.mxu0 %v377
    %755 = vmatmul.mubr.f32.gmra.mrb[0].mxu0 %v376
    %v756 = vpop.f32.mrb[0].mxu0
    %v757 = vadd.f32 0.0, %v756
    %v758 = vpop.f32.mrb[0].mxu0
    %759 = vmatprep.mubr.f32.mxu0 %v381
    %760 = vmatmul.mubr.f32.gmra.mrb[0].mxu0 %v380
    %v761 = vpop.f32.mrb[0].mxu0
    %v762 = vadd.f32 0.0, %v761
    %v763 = vpop.f32.mrb[0].mxu0
    %764 = vmatprep.mubr.f32.mxu0 %v385
    %765 = vmatmul.mubr.f32.gmra.mrb[0].mxu0 %v384
    %v766 = vpop.f32.mrb[0].mxu0
    %v767 = vadd.f32 0.0, %v766
    %v768 = vpop.f32.mrb[0].mxu0
    %769 = vmatprep.mubr.f32.mxu0 %v389
    %770 = vmatmul.mubr.f32.gmra.mrb[0].mxu0 %v388
    %v771 = vpop.f32.mrb[0].mxu0
    %v772 = vadd.f32 0.0, %v771
    %v773 = vpop.f32.mrb[0].mxu0
    %774 = vmatprep.mubr.f32.mxu0 %v393
    %775 = vmatmul.mubr.f32.gmra.mrb[0].mxu0 %v392
    %v776 = vpop.f32.mrb[0].mxu0
    %v777 = vadd.f32 0.0, %v776
    %v778 = vpop.f32.mrb[0].mxu0
    %779 = vmatprep.mubr.f32.mxu0 %v397
    %780 = vmatmul.mubr.f32.gmra.mrb[0].mxu0 %v396
    %v781 = vpop.f32.mrb[0].mxu0
    %v782 = vadd.f32 0.0, %v781
    %v783 = vpop.f32.mrb[0].mxu0
    %784 = vdwg.mxu0
    %785 = vmatprep.subr.mxu0 0.0
    %786 = vmatpush1.msra.mxu0 %v112
    %787 = vmatprep.subr.mxu0 0.0
    %788 = vmatpush1.msra.mxu0 %v113
    %789 = vmatprep.subr.mxu0 0.0
    %790 = vmatpush1.msra.mxu0 %v114
    %791 = vmatprep.subr.mxu0 0.0
    %792 = vmatpush1.msra.mxu0 %v115
    %793 = vmatprep.subr.mxu0 0.0
    %794 = vmatpush1.msra.mxu0 %v116
    %795 = vmatprep.subr.mxu0 0.0
    %796 = vmatpush1.msra.mxu0 %v117
    %797 = vmatprep.subr.mxu0 0.0
    %798 = vmatpush1.msra.mxu0 %v118
    %799 = vmatprep.subr.mxu0 0.0
    %800 = vmatpush1.msra.mxu0 %v119
    %801 = vmatprep.subr.mxu0 0.0
    %802 = vmatpush1.msra.mxu0 %v120
    %803 = vmatprep.subr.mxu0 0.0
    %804 = vmatpush1.msra.mxu0 %v121
    %805 = vmatprep.subr.mxu0 0.0
    %806 = vmatpush1.msra.mxu0 %v122
    %807 = vmatprep.subr.mxu0 0.0
    %808 = vmatpush1.msra.mxu0 %v123
    %809 = vmatprep.subr.mxu0 0.0
    %810 = vmatpush1.msra.mxu0 %v124
    %811 = vmatprep.subr.mxu0 0.0
    %812 = vmatpush1.msra.mxu0 %v125
    %813 = vmatprep.subr.mxu0 0.0
    %814 = vmatpush1.msra.mxu0 %v126
    %815 = vmatprep.subr.mxu0 0.0
    %816 = vmatpush1.msra.mxu0 %v127
    %817 = vmatprep.subr.mxu0 0.0
    %818 = vmatpush1.msra.mxu0 %v128
    %819 = vmatprep.subr.mxu0 0.0
    %820 = vmatpush1.msra.mxu0 %v129
    %821 = vmatprep.subr.mxu0 0.0
    %822 = vmatpush1.msra.mxu0 %v130
    %823 = vmatprep.subr.mxu0 0.0
    %824 = vmatpush1.msra.mxu0 %v131
    %825 = vmatprep.subr.mxu0 0.0
    %826 = vmatpush1.msra.mxu0 %v132
    %827 = vmatprep.subr.mxu0 0.0
    %828 = vmatpush1.msra.mxu0 %v133
    %829 = vmatprep.subr.mxu0 0.0
    %830 = vmatpush1.msra.mxu0 %v134
    %831 = vmatprep.subr.mxu0 0.0
    %832 = vmatpush1.msra.mxu0 %v135
    %833 = vmatprep.subr.mxu0 0.0
    %834 = vmatpush1.msra.mxu0 %v136
    %835 = vmatprep.subr.mxu0 0.0
    %836 = vmatpush1.msra.mxu0 %v137
    %837 = vmatprep.subr.mxu0 0.0
    %838 = vmatpush1.msra.mxu0 %v138
    %839 = vmatprep.subr.mxu0 0.0
    %840 = vmatpush1.msra.mxu0 %v139
    %841 = vmatprep.subr.mxu0 0.0
    %842 = vmatpush1.msra.mxu0 %v140
    %843 = vmatprep.subr.mxu0 0.0
    %844 = vmatpush1.msra.mxu0 %v141
    %845 = vmatprep.subr.mxu0 0.0
    %846 = vmatpush1.msra.mxu0 %v142
    %847 = vmatprep.subr.mxu0 0.0
    %848 = vmatpush1.msra.mxu0 %v143
    %849 = vmatprep.mubr.f32.mxu0 %v147
    %850 = vmatmul.mubr.f32.gmra.mrb[0].mxu0 %v146
    %v851 = vpop.f32.mrb[0].mxu0
    %v852 = vadd.f32 %v467, %v851
    %v853 = vpop.f32.mrb[0].mxu0
    %854 = vmatprep.mubr.f32.mxu0 %v151
    %855 = vmatmul.mubr.f32.gmra.mrb[0].mxu0 %v150
    %v856 = vpop.f32.mrb[0].mxu0
    %v857 = vadd.f32 %v472, %v856
    %v858 = vpop.f32.mrb[0].mxu0
    %859 = vmatprep.mubr.f32.mxu0 %v155
    %860 = vmatmul.mubr.f32.gmra.mrb[0].mxu0 %v154
    %v861 = vpop.f32.mrb[0].mxu0
    %v862 = vadd.f32 %v477, %v861
    %v863 = vpop.f32.mrb[0].mxu0
    %864 = vmatprep.mubr.f32.mxu0 %v159
    %865 = vmatmul.mubr.f32.gmra.mrb[0].mxu0 %v158
    %v866 = vpop.f32.mrb[0].mxu0
    %v867 = vadd.f32 %v482, %v866
    %v868 = vpop.f32.mrb[0].mxu0
    %869 = vmatprep.mubr.f32.mxu0 %v163
    %870 = vmatmul.mubr.f32.gmra.mrb[0].mxu0 %v162
    %v871 = vpop.f32.mrb[0].mxu0
    %v872 = vadd.f32 %v487, %v871
    %v873 = vpop.f32.mrb[0].mxu0
    %874 = vmatprep.mubr.f32.mxu0 %v167
    %875 = vmatmul.mubr.f32.gmra.mrb[0].mxu0 %v166
    %v876 = vpop.f32.mrb[0].mxu0
    %v877 = vadd.f32 %v492, %v876
    %v878 = vpop.f32.mrb[0].mxu0
    %879 = vmatprep.mubr.f32.mxu0 %v171
    %880 = vmatmul.mubr.f32.gmra.mrb[0].mxu0 %v170
    %v881 = vpop.f32.mrb[0].mxu0
    %v882 = vadd.f32 %v497, %v881
    %v883 = vpop.f32.mrb[0].mxu0
    %884 = vmatprep.mubr.f32.mxu0 %v175
    %885 = vmatmul.mubr.f32.gmra.mrb[0].mxu0 %v174
    %v886 = vpop.f32.mrb[0].mxu0
    %v887 = vadd.f32 %v502, %v886
    %v888 = vpop.f32.mrb[0].mxu0
    %889 = vmatprep.mubr.f32.mxu0 %v179
    %890 = vmatmul.mubr.f32.gmra.mrb[0].mxu0 %v178
    %v891 = vpop.f32.mrb[0].mxu0
    %v892 = vadd.f32 %v507, %v891
    %v893 = vpop.f32.mrb[0].mxu0
    %894 = vmatprep.mubr.f32.mxu0 %v183
    %895 = vmatmul.mubr.f32.gmra.mrb[0].mxu0 %v182
    %v896 = vpop.f32.mrb[0].mxu0
    %v897 = vadd.f32 %v512, %v896
    %v898 = vpop.f32.mrb[0].mxu0
    %899 = vmatprep.mubr.f32.mxu0 %v187
    %900 = vmatmul.mubr.f32.gmra.mrb[0].mxu0 %v186
    %v901 = vpop.f32.mrb[0].mxu0
    %v902 = vadd.f32 %v517, %v901
    %v903 = vpop.f32.mrb[0].mxu0
    %904 = vmatprep.mubr.f32.mxu0 %v191
    %905 = vmatmul.mubr.f32.gmra.mrb[0].mxu0 %v190
    %v906 = vpop.f32.mrb[0].mxu0
    %v907 = vadd.f32 %v522, %v906
    %v908 = vpop.f32.mrb[0].mxu0
    %909 = vmatprep.mubr.f32.mxu0 %v195
    %910 = vmatmul.mubr.f32.gmra.mrb[0].mxu0 %v194
    %v911 = vpop.f32.mrb[0].mxu0
    %v912 = vadd.f32 %v527, %v911
    %v913 = vpop.f32.mrb[0].mxu0
    %914 = vmatprep.mubr.f32.mxu0 %v199
    %915 = vmatmul.mubr.f32.gmra.mrb[0].mxu0 %v198
    %v916 = vpop.f32.mrb[0].mxu0
    %v917 = vadd.f32 %v532, %v916
    %v918 = vpop.f32.mrb[0].mxu0
    %919 = vmatprep.mubr.f32.mxu0 %v203
    %920 = vmatmul.mubr.f32.gmra.mrb[0].mxu0 %v202
    %v921 = vpop.f32.mrb[0].mxu0
    %v922 = vadd.f32 %v537, %v921
    %v923 = vpop.f32.mrb[0].mxu0
    %924 = vmatprep.mubr.f32.mxu0 %v207
    %925 = vmatmul.mubr.f32.gmra.mrb[0].mxu0 %v206
    %v926 = vpop.f32.mrb[0].mxu0
    %v927 = vadd.f32 %v542, %v926
    %v928 = vpop.f32.mrb[0].mxu0
    %929 = vmatprep.mubr.f32.mxu0 %v211
    %930 = vmatmul.mubr.f32.gmra.mrb[0].mxu0 %v210
    %v931 = vpop.f32.mrb[0].mxu0
    %v932 = vadd.f32 %v547, %v931
    %v933 = vpop.f32.mrb[0].mxu0
    %934 = vmatprep.mubr.f32.mxu0 %v215
    %935 = vmatmul.mubr.f32.gmra.mrb[0].mxu0 %v214
    %v936 = vpop.f32.mrb[0].mxu0
    %v937 = vadd.f32 %v552, %v936
    %v938 = vpop.f32.mrb[0].mxu0
    %939 = vmatprep.mubr.f32.mxu0 %v219
    %940 = vmatmul.mubr.f32.gmra.mrb[0].mxu0 %v218
    %v941 = vpop.f32.mrb[0].mxu0
    %v942 = vadd.f32 %v557, %v941
    %v943 = vpop.f32.mrb[0].mxu0
    %944 = vmatprep.mubr.f32.mxu0 %v223
    %945 = vmatmul.mubr.f32.gmra.mrb[0].mxu0 %v222
    %v946 = vpop.f32.mrb[0].mxu0
    %v947 = vadd.f32 %v562, %v946
    %v948 = vpop.f32.mrb[0].mxu0
    %949 = vmatprep.mubr.f32.mxu0 %v227
    %950 = vmatmul.mubr.f32.gmra.mrb[0].mxu0 %v226
    %v951 = vpop.f32.mrb[0].mxu0
    %v952 = vadd.f32 %v567, %v951
    %v953 = vpop.f32.mrb[0].mxu0
    %954 = vmatprep.mubr.f32.mxu0 %v231
    %955 = vmatmul.mubr.f32.gmra.mrb[0].mxu0 %v230
    %v956 = vpop.f32.mrb[0].mxu0
    %v957 = vadd.f32 %v572, %v956
    %v958 = vpop.f32.mrb[0].mxu0
    %959 = vmatprep.mubr.f32.mxu0 %v235
    %960 = vmatmul.mubr.f32.gmra.mrb[0].mxu0 %v234
    %v961 = vpop.f32.mrb[0].mxu0
    %v962 = vadd.f32 %v577, %v961
    %v963 = vpop.f32.mrb[0].mxu0
    %964 = vmatprep.mubr.f32.mxu0 %v239
    %965 = vmatmul.mubr.f32.gmra.mrb[0].mxu0 %v238
    %v966 = vpop.f32.mrb[0].mxu0
    %v967 = vadd.f32 %v582, %v966
    %v968 = vpop.f32.mrb[0].mxu0
    %969 = vmatprep.mubr.f32.mxu0 %v243
    %970 = vmatmul.mubr.f32.gmra.mrb[0].mxu0 %v242
    %v971 = vpop.f32.mrb[0].mxu0
    %v972 = vadd.f32 %v587, %v971
    %v973 = vpop.f32.mrb[0].mxu0
    %974 = vmatprep.mubr.f32.mxu0 %v247
    %975 = vmatmul.mubr.f32.gmra.mrb[0].mxu0 %v246
    %v976 = vpop.f32.mrb[0].mxu0
    %v977 = vadd.f32 %v592, %v976
    %v978 = vpop.f32.mrb[0].mxu0
    %979 = vmatprep.mubr.f32.mxu0 %v251
    %980 = vmatmul.mubr.f32.gmra.mrb[0].mxu0 %v250
    %v981 = vpop.f32.mrb[0].mxu0
    %v982 = vadd.f32 %v597, %v981
    %v983 = vpop.f32.mrb[0].mxu0
    %984 = vmatprep.mubr.f32.mxu0 %v255
    %985 = vmatmul.mubr.f32.gmra.mrb[0].mxu0 %v254
    %v986 = vpop.f32.mrb[0].mxu0
    %v987 = vadd.f32 %v602, %v986
    %v988 = vpop.f32.mrb[0].mxu0
    %989 = vmatprep.mubr.f32.mxu0 %v259
    %990 = vmatmul.mubr.f32.gmra.mrb[0].mxu0 %v258
    %v991 = vpop.f32.mrb[0].mxu0
    %v992 = vadd.f32 %v607, %v991
    %v993 = vpop.f32.mrb[0].mxu0
    %994 = vmatprep.mubr.f32.mxu0 %v263
    %995 = vmatmul.mubr.f32.gmra.mrb[0].mxu0 %v262
    %v996 = vpop.f32.mrb[0].mxu0
    %v997 = vadd.f32 %v612, %v996
    %v998 = vpop.f32.mrb[0].mxu0
    %999 = vmatprep.mubr.f32.mxu0 %v267
    %1000 = vmatmul.mubr.f32.gmra.mrb[0].mxu0 %v266
    %v1001 = vpop.f32.mrb[0].mxu0
    %v1002 = vadd.f32 %v617, %v1001
    %v1003 = vpop.f32.mrb[0].mxu0
    %1004 = vmatprep.mubr.f32.mxu0 %v271
    %1005 = vmatmul.mubr.f32.gmra.mrb[0].mxu0 %v270
    %v1006 = vpop.f32.mrb[0].mxu0
    %v1007 = vadd.f32 %v622, %v1006
    %v1008 = vpop.f32.mrb[0].mxu0
    %1009 = vmatprep.mubr.f32.mxu0 %v275
    %1010 = vmatmul.mubr.f32.gmra.mrb[0].mxu0 %v274
    %v1011 = vpop.f32.mrb[0].mxu0
    %v1012 = vadd.f32 %v627, %v1011
    %v1013 = vpop.f32.mrb[0].mxu0
    %1014 = vmatprep.mubr.f32.mxu0 %v279
    %1015 = vmatmul.mubr.f32.gmra.mrb[0].mxu0 %v278
    %v1016 = vpop.f32.mrb[0].mxu0
    %v1017 = vadd.f32 %v632, %v1016
    %v1018 = vpop.f32.mrb[0].mxu0
    %1019 = vmatprep.mubr.f32.mxu0 %v283
    %1020 = vmatmul.mubr.f32.gmra.mrb[0].mxu0 %v282
    %v1021 = vpop.f32.mrb[0].mxu0
    %v1022 = vadd.f32 %v637, %v1021
    %v1023 = vpop.f32.mrb[0].mxu0
    %1024 = vmatprep.mubr.f32.mxu0 %v287
    %1025 = vmatmul.mubr.f32.gmra.mrb[0].mxu0 %v286
    %v1026 = vpop.f32.mrb[0].mxu0
    %v1027 = vadd.f32 %v642, %v1026
    %v1028 = vpop.f32.mrb[0].mxu0
    %1029 = vmatprep.mubr.f32.mxu0 %v291
    %1030 = vmatmul.mubr.f32.gmra.mrb[0].mxu0 %v290
    %v1031 = vpop.f32.mrb[0].mxu0
    %v1032 = vadd.f32 %v647, %v1031
    %v1033 = vpop.f32.mrb[0].mxu0
    %1034 = vmatprep.mubr.f32.mxu0 %v295
    %1035 = vmatmul.mubr.f32.gmra.mrb[0].mxu0 %v294
    %v1036 = vpop.f32.mrb[0].mxu0
    %v1037 = vadd.f32 %v652, %v1036
    %v1038 = vpop.f32.mrb[0].mxu0
    %1039 = vmatprep.mubr.f32.mxu0 %v299
    %1040 = vmatmul.mubr.f32.gmra.mrb[0].mxu0 %v298
    %v1041 = vpop.f32.mrb[0].mxu0
    %v1042 = vadd.f32 %v657, %v1041
    %v1043 = vpop.f32.mrb[0].mxu0
    %1044 = vmatprep.mubr.f32.mxu0 %v303
    %1045 = vmatmul.mubr.f32.gmra.mrb[0].mxu0 %v302
    %v1046 = vpop.f32.mrb[0].mxu0
    %v1047 = vadd.f32 %v662, %v1046
    %v1048 = vpop.f32.mrb[0].mxu0
    %1049 = vmatprep.mubr.f32.mxu0 %v307
    %1050 = vmatmul.mubr.f32.gmra.mrb[0].mxu0 %v306
    %v1051 = vpop.f32.mrb[0].mxu0
    %v1052 = vadd.f32 %v667, %v1051
    %v1053 = vpop.f32.mrb[0].mxu0
    %1054 = vmatprep.mubr.f32.mxu0 %v311
    %1055 = vmatmul.mubr.f32.gmra.mrb[0].mxu0 %v310
    %v1056 = vpop.f32.mrb[0].mxu0
    %v1057 = vadd.f32 %v672, %v1056
    %v1058 = vpop.f32.mrb[0].mxu0
    %1059 = vmatprep.mubr.f32.mxu0 %v315
    %1060 = vmatmul.mubr.f32.gmra.mrb[0].mxu0 %v314
    %v1061 = vpop.f32.mrb[0].mxu0
    %v1062 = vadd.f32 %v677, %v1061
    %v1063 = vpop.f32.mrb[0].mxu0
    %1064 = vmatprep.mubr.f32.mxu0 %v319
    %1065 = vmatmul.mubr.f32.gmra.mrb[0].mxu0 %v318
    %v1066 = vpop.f32.mrb[0].mxu0
    %v1067 = vadd.f32 %v682, %v1066
    %v1068 = vpop.f32.mrb[0].mxu0
    %1069 = vmatprep.mubr.f32.mxu0 %v323
    %1070 = vmatmul.mubr.f32.gmra.mrb[0].mxu0 %v322
    %v1071 = vpop.f32.mrb[0].mxu0
    %v1072 = vadd.f32 %v687, %v1071
    %v1073 = vpop.f32.mrb[0].mxu0
    %1074 = vmatprep.mubr.f32.mxu0 %v327
    %1075 = vmatmul.mubr.f32.gmra.mrb[0].mxu0 %v326
    %v1076 = vpop.f32.mrb[0].mxu0
    %v1077 = vadd.f32 %v692, %v1076
    %v1078 = vpop.f32.mrb[0].mxu0
    %1079 = vmatprep.mubr.f32.mxu0 %v331
    %1080 = vmatmul.mubr.f32.gmra.mrb[0].mxu0 %v330
    %v1081 = vpop.f32.mrb[0].mxu0
    %v1082 = vadd.f32 %v697, %v1081
    %v1083 = vpop.f32.mrb[0].mxu0
    %1084 = vmatprep.mubr.f32.mxu0 %v335
    %1085 = vmatmul.mubr.f32.gmra.mrb[0].mxu0 %v334
    %v1086 = vpop.f32.mrb[0].mxu0
    %v1087 = vadd.f32 %v702, %v1086
    %v1088 = vpop.f32.mrb[0].mxu0
    %1089 = vmatprep.mubr.f32.mxu0 %v339
    %1090 = vmatmul.mubr.f32.gmra.mrb[0].mxu0 %v338
    %v1091 = vpop.f32.mrb[0].mxu0
    %v1092 = vadd.f32 %v707, %v1091
    %v1093 = vpop.f32.mrb[0].mxu0
    %1094 = vmatprep.mubr.f32.mxu0 %v343
    %1095 = vmatmul.mubr.f32.gmra.mrb[0].mxu0 %v342
    %v1096 = vpop.f32.mrb[0].mxu0
    %v1097 = vadd.f32 %v712, %v1096
    %v1098 = vpop.f32.mrb[0].mxu0
    %1099 = vmatprep.mubr.f32.mxu0 %v347
    %1100 = vmatmul.mubr.f32.gmra.mrb[0].mxu0 %v346
    %v1101 = vpop.f32.mrb[0].mxu0
    %v1102 = vadd.f32 %v717, %v1101
    %v1103 = vpop.f32.mrb[0].mxu0
    %1104 = vmatprep.mubr.f32.mxu0 %v351
    %1105 = vmatmul.mubr.f32.gmra.mrb[0].mxu0 %v350
    %v1106 = vpop.f32.mrb[0].mxu0
    %v1107 = vadd.f32 %v722, %v1106
    %v1108 = vpop.f32.mrb[0].mxu0
    %1109 = vmatprep.mubr.f32.mxu0 %v355
    %1110 = vmatmul.mubr.f32.gmra.mrb[0].mxu0 %v354
    %v1111 = vpop.f32.mrb[0].mxu0
    %v1112 = vadd.f32 %v727, %v1111
    %v1113 = vpop.f32.mrb[0].mxu0
    %1114 = vmatprep.mubr.f32.mxu0 %v359
    %1115 = vmatmul.mubr.f32.gmra.mrb[0].mxu0 %v358
    %v1116 = vpop.f32.mrb[0].mxu0
    %v1117 = vadd.f32 %v732, %v1116
    %v1118 = vpop.f32.mrb[0].mxu0
    %1119 = vmatprep.mubr.f32.mxu0 %v363
    %1120 = vmatmul.mubr.f32.gmra.mrb[0].mxu0 %v362
    %v1121 = vpop.f32.mrb[0].mxu0
    %v1122 = vadd.f32 %v737, %v1121
    %v1123 = vpop.f32.mrb[0].mxu0
    %1124 = vmatprep.mubr.f32.mxu0 %v367
    %1125 = vmatmul.mubr.f32.gmra.mrb[0].mxu0 %v366
    %v1126 = vpop.f32.mrb[0].mxu0
    %v1127 = vadd.f32 %v742, %v1126
    %v1128 = vpop.f32.mrb[0].mxu0
    %1129 = vmatprep.mubr.f32.mxu0 %v371
    %1130 = vmatmul.mubr.f32.gmra.mrb[0].mxu0 %v370
    %v1131 = vpop.f32.mrb[0].mxu0
    %v1132 = vadd.f32 %v747, %v1131
    %v1133 = vpop.f32.mrb[0].mxu0
    %1134 = vmatprep.mubr.f32.mxu0 %v375
    %1135 = vmatmul.mubr.f32.gmra.mrb[0].mxu0 %v374
    %v1136 = vpop.f32.mrb[0].mxu0
    %v1137 = vadd.f32 %v752, %v1136
    %v1138 = vpop.f32.mrb[0].mxu0
    %1139 = vmatprep.mubr.f32.mxu0 %v379
    %1140 = vmatmul.mubr.f32.gmra.mrb[0].mxu0 %v378
    %v1141 = vpop.f32.mrb[0].mxu0
    %v1142 = vadd.f32 %v757, %v1141
    %v1143 = vpop.f32.mrb[0].mxu0
    %1144 = vmatprep.mubr.f32.mxu0 %v383
    %1145 = vmatmul.mubr.f32.gmra.mrb[0].mxu0 %v382
    %v1146 = vpop.f32.mrb[0].mxu0
    %v1147 = vadd.f32 %v762, %v1146
    %v1148 = vpop.f32.mrb[0].mxu0
    %1149 = vmatprep.mubr.f32.mxu0 %v387
    %1150 = vmatmul.mubr.f32.gmra.mrb[0].mxu0 %v386
    %v1151 = vpop.f32.mrb[0].mxu0
    %v1152 = vadd.f32 %v767, %v1151
    %v1153 = vpop.f32.mrb[0].mxu0
    %1154 = vmatprep.mubr.f32.mxu0 %v391
    %1155 = vmatmul.mubr.f32.gmra.mrb[0].mxu0 %v390
    %v1156 = vpop.f32.mrb[0].mxu0
    %v1157 = vadd.f32 %v772, %v1156
    %v1158 = vpop.f32.mrb[0].mxu0
    %1159 = vmatprep.mubr.f32.mxu0 %v395
    %1160 = vmatmul.mubr.f32.gmra.mrb[0].mxu0 %v394
    %v1161 = vpop.f32.mrb[0].mxu0
    %v1162 = vadd.f32 %v777, %v1161
    %v1163 = vpop.f32.mrb[0].mxu0
    %1164 = vmatprep.mubr.f32.mxu0 %v399
    %1165 = vmatmul.mubr.f32.gmra.mrb[0].mxu0 %v398
    %v1166 = vpop.f32.mrb[0].mxu0
    %v1167 = vadd.f32 %v782, %v1166
    %v1168 = vpop.f32.mrb[0].mxu0
    %1169 = vdwg.mxu0
    %vm1170 = vcmp.gt.f32.partialorder %v852, 0.0
    %vm1171 = vcmp.gt.f32.partialorder %v857, 0.0
    %vm1172 = vcmp.gt.f32.partialorder %v862, 0.0
    %vm1173 = vcmp.gt.f32.partialorder %v867, 0.0
    %vm1174 = vcmp.gt.f32.partialorder %v872, 0.0
    %vm1175 = vcmp.gt.f32.partialorder %v877, 0.0
    %vm1176 = vcmp.gt.f32.partialorder %v882, 0.0
    %vm1177 = vcmp.gt.f32.partialorder %v887, 0.0
    %vm1178 = vcmp.gt.f32.partialorder %v892, 0.0
    %vm1179 = vcmp.gt.f32.partialorder %v897, 0.0
    %vm1180 = vcmp.gt.f32.partialorder %v902, 0.0
    %vm1181 = vcmp.gt.f32.partialorder %v907, 0.0
    %vm1182 = vcmp.gt.f32.partialorder %v912, 0.0
    %vm1183 = vcmp.gt.f32.partialorder %v917, 0.0
    %vm1184 = vcmp.gt.f32.partialorder %v922, 0.0
    %vm1185 = vcmp.gt.f32.partialorder %v927, 0.0
    %vm1186 = vcmp.gt.f32.partialorder %v932, 0.0
    %vm1187 = vcmp.gt.f32.partialorder %v937, 0.0
    %vm1188 = vcmp.gt.f32.partialorder %v942, 0.0
    %vm1189 = vcmp.gt.f32.partialorder %v947, 0.0
    %vm1190 = vcmp.gt.f32.partialorder %v952, 0.0
    %vm1191 = vcmp.gt.f32.partialorder %v957, 0.0
    %vm1192 = vcmp.gt.f32.partialorder %v962, 0.0
    %vm1193 = vcmp.gt.f32.partialorder %v967, 0.0
    %vm1194 = vcmp.gt.f32.partialorder %v972, 0.0
    %vm1195 = vcmp.gt.f32.partialorder %v977, 0.0
    %vm1196 = vcmp.gt.f32.partialorder %v982, 0.0
    %vm1197 = vcmp.gt.f32.partialorder %v987, 0.0
    %vm1198 = vcmp.gt.f32.partialorder %v992, 0.0
    %vm1199 = vcmp.gt.f32.partialorder %v997, 0.0
    %vm1200 = vcmp.gt.f32.partialorder %v1002, 0.0
    %vm1201 = vcmp.gt.f32.partialorder %v1007, 0.0
    %vm1202 = vcmp.gt.f32.partialorder %v1012, 0.0
    %vm1203 = vcmp.gt.f32.partialorder %v1017, 0.0
    %vm1204 = vcmp.gt.f32.partialorder %v1022, 0.0
    %vm1205 = vcmp.gt.f32.partialorder %v1027, 0.0
    %vm1206 = vcmp.gt.f32.partialorder %v1032, 0.0
    %vm1207 = vcmp.gt.f32.partialorder %v1037, 0.0
    %vm1208 = vcmp.gt.f32.partialorder %v1042, 0.0
    %vm1209 = vcmp.gt.f32.partialorder %v1047, 0.0
    %vm1210 = vcmp.gt.f32.partialorder %v1052, 0.0
    %vm1211 = vcmp.gt.f32.partialorder %v1057, 0.0
    %vm1212 = vcmp.gt.f32.partialorder %v1062, 0.0
    %vm1213 = vcmp.gt.f32.partialorder %v1067, 0.0
    %vm1214 = vcmp.gt.f32.partialorder %v1072, 0.0
    %vm1215 = vcmp.gt.f32.partialorder %v1077, 0.0
    %vm1216 = vcmp.gt.f32.partialorder %v1082, 0.0
    %vm1217 = vcmp.gt.f32.partialorder %v1087, 0.0
    %vm1218 = vcmp.gt.f32.partialorder %v1092, 0.0
    %vm1219 = vcmp.gt.f32.partialorder %v1097, 0.0
    %vm1220 = vcmp.gt.f32.partialorder %v1102, 0.0
    %vm1221 = vcmp.gt.f32.partialorder %v1107, 0.0
    %vm1222 = vcmp.gt.f32.partialorder %v1112, 0.0
    %vm1223 = vcmp.gt.f32.partialorder %v1117, 0.0
    %vm1224 = vcmp.gt.f32.partialorder %v1122, 0.0
    %vm1225 = vcmp.gt.f32.partialorder %v1127, 0.0
    %vm1226 = vcmp.gt.f32.partialorder %v1132, 0.0
    %vm1227 = vcmp.gt.f32.partialorder %v1137, 0.0
    %vm1228 = vcmp.gt.f32.partialorder %v1142, 0.0
    %vm1229 = vcmp.gt.f32.partialorder %v1147, 0.0
    %vm1230 = vcmp.gt.f32.partialorder %v1152, 0.0
    %vm1231 = vcmp.gt.f32.partialorder %v1157, 0.0
    %vm1232 = vcmp.gt.f32.partialorder %v1162, 0.0
    %vm1233 = vcmp.gt.f32.partialorder %v1167, 0.0
    %v1234 = vmul.f32 %v852, 0.2
    %v1235 = vmul.f32 %v857, 0.2
    %v1236 = vmul.f32 %v862, 0.2
    %v1237 = vmul.f32 %v867, 0.2
    %v1238 = vmul.f32 %v872, 0.2
    %v1239 = vmul.f32 %v877, 0.2
    %v1240 = vmul.f32 %v882, 0.2
    %v1241 = vmul.f32 %v887, 0.2
    %v1242 = vmul.f32 %v892, 0.2
    %v1243 = vmul.f32 %v897, 0.2
    %v1244 = vmul.f32 %v902, 0.2
    %v1245 = vmul.f32 %v907, 0.2
    %v1246 = vmul.f32 %v912, 0.2
    %v1247 = vmul.f32 %v917, 0.2
    %v1248 = vmul.f32 %v922, 0.2
    %v1249 = vmul.f32 %v927, 0.2
    %v1250 = vmul.f32 %v932, 0.2
    %v1251 = vmul.f32 %v937, 0.2
    %v1252 = vmul.f32 %v942, 0.2
    %v1253 = vmul.f32 %v947, 0.2
    %v1254 = vmul.f32 %v952, 0.2
    %v1255 = vmul.f32 %v957, 0.2
    %v1256 = vmul.f32 %v962, 0.2
    %v1257 = vmul.f32 %v967, 0.2
    %v1258 = vmul.f32 %v972, 0.2
    %v1259 = vmul.f32 %v977, 0.2
    %v1260 = vmul.f32 %v982, 0.2
    %v1261 = vmul.f32 %v987, 0.2
    %v1262 = vmul.f32 %v992, 0.2
    %v1263 = vmul.f32 %v997, 0.2
    %v1264 = vmul.f32 %v1002, 0.2
    %v1265 = vmul.f32 %v1007, 0.2
    %v1266 = vmul.f32 %v1012, 0.2
    %v1267 = vmul.f32 %v1017, 0.2
    %v1268 = vmul.f32 %v1022, 0.2
    %v1269 = vmul.f32 %v1027, 0.2
    %v1270 = vmul.f32 %v1032, 0.2
    %v1271 = vmul.f32 %v1037, 0.2
    %v1272 = vmul.f32 %v1042, 0.2
    %v1273 = vmul.f32 %v1047, 0.2
    %v1274 = vmul.f32 %v1052, 0.2
    %v1275 = vmul.f32 %v1057, 0.2
    %v1276 = vmul.f32 %v1062, 0.2
    %v1277 = vmul.f32 %v1067, 0.2
    %v1278 = vmul.f32 %v1072, 0.2
    %v1279 = vmul.f32 %v1077, 0.2
    %v1280 = vmul.f32 %v1082, 0.2
    %v1281 = vmul.f32 %v1087, 0.2
    %v1282 = vmul.f32 %v1092, 0.2
    %v1283 = vmul.f32 %v1097, 0.2
    %v1284 = vmul.f32 %v1102, 0.2
    %v1285 = vmul.f32 %v1107, 0.2
    %v1286 = vmul.f32 %v1112, 0.2
    %v1287 = vmul.f32 %v1117, 0.2
    %v1288 = vmul.f32 %v1122, 0.2
    %v1289 = vmul.f32 %v1127, 0.2
    %v1290 = vmul.f32 %v1132, 0.2
    %v1291 = vmul.f32 %v1137, 0.2
    %v1292 = vmul.f32 %v1142, 0.2
    %v1293 = vmul.f32 %v1147, 0.2
    %v1294 = vmul.f32 %v1152, 0.2
    %v1295 = vmul.f32 %v1157, 0.2
    %v1296 = vmul.f32 %v1162, 0.2
    %v1297 = vmul.f32 %v1167, 0.2
    %v1298 = vsel %vm1170, %v852, %v1234
    %v1299 = vsel %vm1171, %v857, %v1235
    %v1300 = vsel %vm1172, %v862, %v1236
    %v1301 = vsel %vm1173, %v867, %v1237
    %v1302 = vsel %vm1174, %v872, %v1238
    %v1303 = vsel %vm1175, %v877, %v1239
    %v1304 = vsel %vm1176, %v882, %v1240
    %v1305 = vsel %vm1177, %v887, %v1241
    %v1306 = vsel %vm1178, %v892, %v1242
    %v1307 = vsel %vm1179, %v897, %v1243
    %v1308 = vsel %vm1180, %v902, %v1244
    %v1309 = vsel %vm1181, %v907, %v1245
    %v1310 = vsel %vm1182, %v912, %v1246
    %v1311 = vsel %vm1183, %v917, %v1247
    %v1312 = vsel %vm1184, %v922, %v1248
    %v1313 = vsel %vm1185, %v927, %v1249
    %v1314 = vsel %vm1186, %v932, %v1250
    %v1315 = vsel %vm1187, %v937, %v1251
    %v1316 = vsel %vm1188, %v942, %v1252
    %v1317 = vsel %vm1189, %v947, %v1253
    %v1318 = vsel %vm1190, %v952, %v1254
    %v1319 = vsel %vm1191, %v957, %v1255
    %v1320 = vsel %vm1192, %v962, %v1256
    %v1321 = vsel %vm1193, %v967, %v1257
    %v1322 = vsel %vm1194, %v972, %v1258
    %v1323 = vsel %vm1195, %v977, %v1259
    %v1324 = vsel %vm1196, %v982, %v1260
    %v1325 = vsel %vm1197, %v987, %v1261
    %v1326 = vsel %vm1198, %v992, %v1262
    %v1327 = vsel %vm1199, %v997, %v1263
    %v1328 = vsel %vm1200, %v1002, %v1264
    %v1329 = vsel %vm1201, %v1007, %v1265
    %v1330 = vsel %vm1202, %v1012, %v1266
    %v1331 = vsel %vm1203, %v1017, %v1267
    %v1332 = vsel %vm1204, %v1022, %v1268
    %v1333 = vsel %vm1205, %v1027, %v1269
    %v1334 = vsel %vm1206, %v1032, %v1270
    %v1335 = vsel %vm1207, %v1037, %v1271
    %v1336 = vsel %vm1208, %v1042, %v1272
    %v1337 = vsel %vm1209, %v1047, %v1273
    %v1338 = vsel %vm1210, %v1052, %v1274
    %v1339 = vsel %vm1211, %v1057, %v1275
    %v1340 = vsel %vm1212, %v1062, %v1276
    %v1341 = vsel %vm1213, %v1067, %v1277
    %v1342 = vsel %vm1214, %v1072, %v1278
    %v1343 = vsel %vm1215, %v1077, %v1279
    %v1344 = vsel %vm1216, %v1082, %v1280
    %v1345 = vsel %vm1217, %v1087, %v1281
    %v1346 = vsel %vm1218, %v1092, %v1282
    %v1347 = vsel %vm1219, %v1097, %v1283
    %v1348 = vsel %vm1220, %v1102, %v1284
    %v1349 = vsel %vm1221, %v1107, %v1285
    %v1350 = vsel %vm1222, %v1112, %v1286
    %v1351 = vsel %vm1223, %v1117, %v1287
    %v1352 = vsel %vm1224, %v1122, %v1288
    %v1353 = vsel %vm1225, %v1127, %v1289
    %v1354 = vsel %vm1226, %v1132, %v1290
    %v1355 = vsel %vm1227, %v1137, %v1291
    %v1356 = vsel %vm1228, %v1142, %v1292
    %v1357 = vsel %vm1229, %v1147, %v1293
    %v1358 = vsel %vm1230, %v1152, %v1294
    %v1359 = vsel %vm1231, %v1157, %v1295
    %v1360 = vsel %vm1232, %v1162, %v1296
    %v1361 = vsel %vm1233, %v1167, %v1297
    %v1362 = vld [vmem:[#allocation4] sm:$0xff]
    %v1363 = vld [vmem:[#allocation4 + $0x8] sm:$0xff]
    %v1364 = vld [vmem:[#allocation4 + $0x10] sm:$0xff]
    %v1365 = vld [vmem:[#allocation4 + $0x18] sm:$0xff]
    %v1366 = vld [vmem:[#allocation4 + $0x20] sm:$0xff]
    %v1367 = vld [vmem:[#allocation4 + $0x28] sm:$0xff]
    %v1368 = vld [vmem:[#allocation4 + $0x30] sm:$0xff]
    %v1369 = vld [vmem:[#allocation4 + $0x38] sm:$0xff]
    %v1370 = vld [vmem:[#allocation4 + $0x40] sm:$0xff]
    %v1371 = vld [vmem:[#allocation4 + $0x48] sm:$0xff]
    %v1372 = vld [vmem:[#allocation4 + $0x50] sm:$0xff]
    %v1373 = vld [vmem:[#allocation4 + $0x58] sm:$0xff]
    %v1374 = vld [vmem:[#allocation4 + $0x60] sm:$0xff]
    %v1375 = vld [vmem:[#allocation4 + $0x68] sm:$0xff]
    %v1376 = vld [vmem:[#allocation4 + $0x70] sm:$0xff]
    %v1377 = vld [vmem:[#allocation4 + $0x78] sm:$0xff]
    %v1378 = vld [vmem:[#allocation4 + $0x80] sm:$0xff]
    %v1379 = vld [vmem:[#allocation4 + $0x88] sm:$0xff]
    %v1380 = vld [vmem:[#allocation4 + $0x90] sm:$0xff]
    %v1381 = vld [vmem:[#allocation4 + $0x98] sm:$0xff]
    %v1382 = vld [vmem:[#allocation4 + $0xa0] sm:$0xff]
    %v1383 = vld [vmem:[#allocation4 + $0xa8] sm:$0xff]
    %v1384 = vld [vmem:[#allocation4 + $0xb0] sm:$0xff]
    %v1385 = vld [vmem:[#allocation4 + $0xb8] sm:$0xff]
    %v1386 = vld [vmem:[#allocation4 + $0xc0] sm:$0xff]
    %v1387 = vld [vmem:[#allocation4 + $0xc8] sm:$0xff]
    %v1388 = vld [vmem:[#allocation4 + $0xd0] sm:$0xff]
    %v1389 = vld [vmem:[#allocation4 + $0xd8] sm:$0xff]
    %v1390 = vld [vmem:[#allocation4 + $0xe0] sm:$0xff]
    %v1391 = vld [vmem:[#allocation4 + $0xe8] sm:$0xff]
    %v1392 = vld [vmem:[#allocation4 + $0xf0] sm:$0xff]
    %v1393 = vld [vmem:[#allocation4 + $0xf8] sm:$0xff]
    %v1394 = vld [vmem:[#allocation4 + $0x100] sm:$0xff]
    %v1395 = vld [vmem:[#allocation4 + $0x108] sm:$0xff]
    %v1396 = vld [vmem:[#allocation4 + $0x110] sm:$0xff]
    %v1397 = vld [vmem:[#allocation4 + $0x118] sm:$0xff]
    %v1398 = vld [vmem:[#allocation4 + $0x120] sm:$0xff]
    %v1399 = vld [vmem:[#allocation4 + $0x128] sm:$0xff]
    %v1400 = vld [vmem:[#allocation4 + $0x130] sm:$0xff]
    %v1401 = vld [vmem:[#allocation4 + $0x138] sm:$0xff]
    %v1402 = vld [vmem:[#allocation4 + $0x140] sm:$0xff]
    %v1403 = vld [vmem:[#allocation4 + $0x148] sm:$0xff]
    %v1404 = vld [vmem:[#allocation4 + $0x150] sm:$0xff]
    %v1405 = vld [vmem:[#allocation4 + $0x158] sm:$0xff]
    %v1406 = vld [vmem:[#allocation4 + $0x160] sm:$0xff]
    %v1407 = vld [vmem:[#allocation4 + $0x168] sm:$0xff]
    %v1408 = vld [vmem:[#allocation4 + $0x170] sm:$0xff]
    %v1409 = vld [vmem:[#allocation4 + $0x178] sm:$0xff]
    %v1410 = vld [vmem:[#allocation4 + $0x180] sm:$0xff]
    %v1411 = vld [vmem:[#allocation4 + $0x188] sm:$0xff]
    %v1412 = vld [vmem:[#allocation4 + $0x190] sm:$0xff]
    %v1413 = vld [vmem:[#allocation4 + $0x198] sm:$0xff]
    %v1414 = vld [vmem:[#allocation4 + $0x1a0] sm:$0xff]
    %v1415 = vld [vmem:[#allocation4 + $0x1a8] sm:$0xff]
    %v1416 = vld [vmem:[#allocation4 + $0x1b0] sm:$0xff]
    %v1417 = vld [vmem:[#allocation4 + $0x1b8] sm:$0xff]
    %v1418 = vld [vmem:[#allocation4 + $0x1c0] sm:$0xff]
    %v1419 = vld [vmem:[#allocation4 + $0x1c8] sm:$0xff]
    %v1420 = vld [vmem:[#allocation4 + $0x1d0] sm:$0xff]
    %v1421 = vld [vmem:[#allocation4 + $0x1d8] sm:$0xff]
    %v1422 = vld [vmem:[#allocation4 + $0x1e0] sm:$0xff]
    %v1423 = vld [vmem:[#allocation4 + $0x1e8] sm:$0xff]
    %v1424 = vld [vmem:[#allocation4 + $0x1f0] sm:$0xff]
    %v1425 = vld [vmem:[#allocation4 + $0x1f8] sm:$0xff]
    %v1426 = vld [vmem:[#allocation4 + $0x200] sm:$0xff]
    %v1427 = vld [vmem:[#allocation4 + $0x208] sm:$0xff]
    %v1428 = vld [vmem:[#allocation4 + $0x210] sm:$0xff]
    %v1429 = vld [vmem:[#allocation4 + $0x218] sm:$0xff]
    %v1430 = vld [vmem:[#allocation4 + $0x220] sm:$0xff]
    %v1431 = vld [vmem:[#allocation4 + $0x228] sm:$0xff]
    %v1432 = vld [vmem:[#allocation4 + $0x230] sm:$0xff]
    %v1433 = vld [vmem:[#allocation4 + $0x238] sm:$0xff]
    %v1434 = vld [vmem:[#allocation4 + $0x240] sm:$0xff]
    %v1435 = vld [vmem:[#allocation4 + $0x248] sm:$0xff]
    %v1436 = vld [vmem:[#allocation4 + $0x250] sm:$0xff]
    %v1437 = vld [vmem:[#allocation4 + $0x258] sm:$0xff]
    %v1438 = vld [vmem:[#allocation4 + $0x260] sm:$0xff]
    %v1439 = vld [vmem:[#allocation4 + $0x268] sm:$0xff]
    %v1440 = vld [vmem:[#allocation4 + $0x270] sm:$0xff]
    %v1441 = vld [vmem:[#allocation4 + $0x278] sm:$0xff]
    %v1442 = vld [vmem:[#allocation4 + $0x280] sm:$0xff]
    %v1443 = vld [vmem:[#allocation4 + $0x288] sm:$0xff]
    %v1444 = vld [vmem:[#allocation4 + $0x290] sm:$0xff]
    %v1445 = vld [vmem:[#allocation4 + $0x298] sm:$0xff]
    %v1446 = vld [vmem:[#allocation4 + $0x2a0] sm:$0xff]
    %v1447 = vld [vmem:[#allocation4 + $0x2a8] sm:$0xff]
    %v1448 = vld [vmem:[#allocation4 + $0x2b0] sm:$0xff]
    %v1449 = vld [vmem:[#allocation4 + $0x2b8] sm:$0xff]
    %v1450 = vld [vmem:[#allocation4 + $0x2c0] sm:$0xff]
    %v1451 = vld [vmem:[#allocation4 + $0x2c8] sm:$0xff]
    %v1452 = vld [vmem:[#allocation4 + $0x2d0] sm:$0xff]
    %v1453 = vld [vmem:[#allocation4 + $0x2d8] sm:$0xff]
    %v1454 = vld [vmem:[#allocation4 + $0x2e0] sm:$0xff]
    %v1455 = vld [vmem:[#allocation4 + $0x2e8] sm:$0xff]
    %v1456 = vld [vmem:[#allocation4 + $0x2f0] sm:$0xff]
    %v1457 = vld [vmem:[#allocation4 + $0x2f8] sm:$0xff]
    %v1458 = vld [vmem:[#allocation4 + $0x300] sm:$0xff]
    %v1459 = vld [vmem:[#allocation4 + $0x308] sm:$0xff]
    %v1460 = vld [vmem:[#allocation4 + $0x310] sm:$0xff]
    %v1461 = vld [vmem:[#allocation4 + $0x318] sm:$0xff]
    %v1462 = vld [vmem:[#allocation4 + $0x320] sm:$0xff]
    %v1463 = vld [vmem:[#allocation4 + $0x328] sm:$0xff]
    %v1464 = vld [vmem:[#allocation4 + $0x330] sm:$0xff]
    %v1465 = vld [vmem:[#allocation4 + $0x338] sm:$0xff]
    %v1466 = vld [vmem:[#allocation4 + $0x340] sm:$0xff]
    %v1467 = vld [vmem:[#allocation4 + $0x348] sm:$0xff]
    %v1468 = vld [vmem:[#allocation4 + $0x350] sm:$0xff]
    %v1469 = vld [vmem:[#allocation4 + $0x358] sm:$0xff]
    %v1470 = vld [vmem:[#allocation4 + $0x360] sm:$0xff]
    %v1471 = vld [vmem:[#allocation4 + $0x368] sm:$0xff]
    %v1472 = vld [vmem:[#allocation4 + $0x370] sm:$0xff]
    %v1473 = vld [vmem:[#allocation4 + $0x378] sm:$0xff]
    %v1474 = vld [vmem:[#allocation4 + $0x380] sm:$0xff]
    %v1475 = vld [vmem:[#allocation4 + $0x388] sm:$0xff]
    %v1476 = vld [vmem:[#allocation4 + $0x390] sm:$0xff]
    %v1477 = vld [vmem:[#allocation4 + $0x398] sm:$0xff]
    %v1478 = vld [vmem:[#allocation4 + $0x3a0] sm:$0xff]
    %v1479 = vld [vmem:[#allocation4 + $0x3a8] sm:$0xff]
    %v1480 = vld [vmem:[#allocation4 + $0x3b0] sm:$0xff]
    %v1481 = vld [vmem:[#allocation4 + $0x3b8] sm:$0xff]
    %v1482 = vld [vmem:[#allocation4 + $0x3c0] sm:$0xff]
    %v1483 = vld [vmem:[#allocation4 + $0x3c8] sm:$0xff]
    %v1484 = vld [vmem:[#allocation4 + $0x3d0] sm:$0xff]
    %v1485 = vld [vmem:[#allocation4 + $0x3d8] sm:$0xff]
    %v1486 = vld [vmem:[#allocation4 + $0x3e0] sm:$0xff]
    %v1487 = vld [vmem:[#allocation4 + $0x3e8] sm:$0xff]
    %v1488 = vld [vmem:[#allocation4 + $0x3f0] sm:$0xff]
    %v1489 = vld [vmem:[#allocation4 + $0x3f8] sm:$0xff]
    %v1490 = vld [vmem:[#allocation4 + $0x400] sm:$0xff]
    %v1491 = vld [vmem:[#allocation4 + $0x408] sm:$0xff]
    %v1492 = vld [vmem:[#allocation4 + $0x410] sm:$0xff]
    %v1493 = vld [vmem:[#allocation4 + $0x418] sm:$0xff]
    %v1494 = vld [vmem:[#allocation4 + $0x420] sm:$0xff]
    %v1495 = vld [vmem:[#allocation4 + $0x428] sm:$0xff]
    %v1496 = vld [vmem:[#allocation4 + $0x430] sm:$0xff]
    %v1497 = vld [vmem:[#allocation4 + $0x438] sm:$0xff]
    %v1498 = vld [vmem:[#allocation4 + $0x440] sm:$0xff]
    %v1499 = vld [vmem:[#allocation4 + $0x448] sm:$0xff]
    %v1500 = vld [vmem:[#allocation4 + $0x450] sm:$0xff]
    %v1501 = vld [vmem:[#allocation4 + $0x458] sm:$0xff]
    %v1502 = vld [vmem:[#allocation4 + $0x460] sm:$0xff]
    %v1503 = vld [vmem:[#allocation4 + $0x468] sm:$0xff]
    %v1504 = vld [vmem:[#allocation4 + $0x470] sm:$0xff]
    %v1505 = vld [vmem:[#allocation4 + $0x478] sm:$0xff]
    %v1506 = vld [vmem:[#allocation4 + $0x480] sm:$0xff]
    %v1507 = vld [vmem:[#allocation4 + $0x488] sm:$0xff]
    %v1508 = vld [vmem:[#allocation4 + $0x490] sm:$0xff]
    %v1509 = vld [vmem:[#allocation4 + $0x498] sm:$0xff]
    %v1510 = vld [vmem:[#allocation4 + $0x4a0] sm:$0xff]
    %v1511 = vld [vmem:[#allocation4 + $0x4a8] sm:$0xff]
    %v1512 = vld [vmem:[#allocation4 + $0x4b0] sm:$0xff]
    %v1513 = vld [vmem:[#allocation4 + $0x4b8] sm:$0xff]
    %v1514 = vld [vmem:[#allocation4 + $0x4c0] sm:$0xff]
    %v1515 = vld [vmem:[#allocation4 + $0x4c8] sm:$0xff]
    %v1516 = vld [vmem:[#allocation4 + $0x4d0] sm:$0xff]
    %v1517 = vld [vmem:[#allocation4 + $0x4d8] sm:$0xff]
    %v1518 = vld [vmem:[#allocation4 + $0x4e0] sm:$0xff]
    %v1519 = vld [vmem:[#allocation4 + $0x4e8] sm:$0xff]
    %v1520 = vld [vmem:[#allocation4 + $0x4f0] sm:$0xff]
    %v1521 = vld [vmem:[#allocation4 + $0x4f8] sm:$0xff]
    %v1522 = vld [vmem:[#allocation4 + $0x500] sm:$0xff]
    %v1523 = vld [vmem:[#allocation4 + $0x508] sm:$0xff]
    %v1524 = vld [vmem:[#allocation4 + $0x510] sm:$0xff]
    %v1525 = vld [vmem:[#allocation4 + $0x518] sm:$0xff]
    %v1526 = vld [vmem:[#allocation4 + $0x520] sm:$0xff]
    %v1527 = vld [vmem:[#allocation4 + $0x528] sm:$0xff]
    %v1528 = vld [vmem:[#allocation4 + $0x530] sm:$0xff]
    %v1529 = vld [vmem:[#allocation4 + $0x538] sm:$0xff]
    %v1530 = vld [vmem:[#allocation4 + $0x540] sm:$0xff]
    %v1531 = vld [vmem:[#allocation4 + $0x548] sm:$0xff]
    %v1532 = vld [vmem:[#allocation4 + $0x550] sm:$0xff]
    %v1533 = vld [vmem:[#allocation4 + $0x558] sm:$0xff]
    %v1534 = vld [vmem:[#allocation4 + $0x560] sm:$0xff]
    %v1535 = vld [vmem:[#allocation4 + $0x568] sm:$0xff]
    %v1536 = vld [vmem:[#allocation4 + $0x570] sm:$0xff]
    %v1537 = vld [vmem:[#allocation4 + $0x578] sm:$0xff]
    %v1538 = vld [vmem:[#allocation4 + $0x580] sm:$0xff]
    %v1539 = vld [vmem:[#allocation4 + $0x588] sm:$0xff]
    %v1540 = vld [vmem:[#allocation4 + $0x590] sm:$0xff]
    %v1541 = vld [vmem:[#allocation4 + $0x598] sm:$0xff]
    %v1542 = vld [vmem:[#allocation4 + $0x5a0] sm:$0xff]
    %v1543 = vld [vmem:[#allocation4 + $0x5a8] sm:$0xff]
    %v1544 = vld [vmem:[#allocation4 + $0x5b0] sm:$0xff]
    %v1545 = vld [vmem:[#allocation4 + $0x5b8] sm:$0xff]
    %v1546 = vld [vmem:[#allocation4 + $0x5c0] sm:$0xff]
    %v1547 = vld [vmem:[#allocation4 + $0x5c8] sm:$0xff]
    %v1548 = vld [vmem:[#allocation4 + $0x5d0] sm:$0xff]
    %v1549 = vld [vmem:[#allocation4 + $0x5d8] sm:$0xff]
    %v1550 = vld [vmem:[#allocation4 + $0x5e0] sm:$0xff]
    %v1551 = vld [vmem:[#allocation4 + $0x5e8] sm:$0xff]
    %v1552 = vld [vmem:[#allocation4 + $0x5f0] sm:$0xff]
    %v1553 = vld [vmem:[#allocation4 + $0x5f8] sm:$0xff]
    %v1554 = vld [vmem:[#allocation4 + $0x600] sm:$0xff]
    %v1555 = vld [vmem:[#allocation4 + $0x608] sm:$0xff]
    %v1556 = vld [vmem:[#allocation4 + $0x610] sm:$0xff]
    %v1557 = vld [vmem:[#allocation4 + $0x618] sm:$0xff]
    %v1558 = vld [vmem:[#allocation4 + $0x620] sm:$0xff]
    %v1559 = vld [vmem:[#allocation4 + $0x628] sm:$0xff]
    %v1560 = vld [vmem:[#allocation4 + $0x630] sm:$0xff]
    %v1561 = vld [vmem:[#allocation4 + $0x638] sm:$0xff]
    %v1562 = vld [vmem:[#allocation4 + $0x640] sm:$0xff]
    %v1563 = vld [vmem:[#allocation4 + $0x648] sm:$0xff]
    %v1564 = vld [vmem:[#allocation4 + $0x650] sm:$0xff]
    %v1565 = vld [vmem:[#allocation4 + $0x658] sm:$0xff]
    %v1566 = vld [vmem:[#allocation4 + $0x660] sm:$0xff]
    %v1567 = vld [vmem:[#allocation4 + $0x668] sm:$0xff]
    %v1568 = vld [vmem:[#allocation4 + $0x670] sm:$0xff]
    %v1569 = vld [vmem:[#allocation4 + $0x678] sm:$0xff]
    %v1570 = vld [vmem:[#allocation4 + $0x680] sm:$0xff]
    %v1571 = vld [vmem:[#allocation4 + $0x688] sm:$0xff]
    %v1572 = vld [vmem:[#allocation4 + $0x690] sm:$0xff]
    %v1573 = vld [vmem:[#allocation4 + $0x698] sm:$0xff]
    %v1574 = vld [vmem:[#allocation4 + $0x6a0] sm:$0xff]
    %v1575 = vld [vmem:[#allocation4 + $0x6a8] sm:$0xff]
    %v1576 = vld [vmem:[#allocation4 + $0x6b0] sm:$0xff]
    %v1577 = vld [vmem:[#allocation4 + $0x6b8] sm:$0xff]
    %v1578 = vld [vmem:[#allocation4 + $0x6c0] sm:$0xff]
    %v1579 = vld [vmem:[#allocation4 + $0x6c8] sm:$0xff]
    %v1580 = vld [vmem:[#allocation4 + $0x6d0] sm:$0xff]
    %v1581 = vld [vmem:[#allocation4 + $0x6d8] sm:$0xff]
    %v1582 = vld [vmem:[#allocation4 + $0x6e0] sm:$0xff]
    %v1583 = vld [vmem:[#allocation4 + $0x6e8] sm:$0xff]
    %v1584 = vld [vmem:[#allocation4 + $0x6f0] sm:$0xff]
    %v1585 = vld [vmem:[#allocation4 + $0x6f8] sm:$0xff]
    %v1586 = vld [vmem:[#allocation4 + $0x700] sm:$0xff]
    %v1587 = vld [vmem:[#allocation4 + $0x708] sm:$0xff]
    %v1588 = vld [vmem:[#allocation4 + $0x710] sm:$0xff]
    %v1589 = vld [vmem:[#allocation4 + $0x718] sm:$0xff]
    %v1590 = vld [vmem:[#allocation4 + $0x720] sm:$0xff]
    %v1591 = vld [vmem:[#allocation4 + $0x728] sm:$0xff]
    %v1592 = vld [vmem:[#allocation4 + $0x730] sm:$0xff]
    %v1593 = vld [vmem:[#allocation4 + $0x738] sm:$0xff]
    %v1594 = vld [vmem:[#allocation4 + $0x740] sm:$0xff]
    %v1595 = vld [vmem:[#allocation4 + $0x748] sm:$0xff]
    %v1596 = vld [vmem:[#allocation4 + $0x750] sm:$0xff]
    %v1597 = vld [vmem:[#allocation4 + $0x758] sm:$0xff]
    %v1598 = vld [vmem:[#allocation4 + $0x760] sm:$0xff]
    %v1599 = vld [vmem:[#allocation4 + $0x768] sm:$0xff]
    %v1600 = vld [vmem:[#allocation4 + $0x770] sm:$0xff]
    %v1601 = vld [vmem:[#allocation4 + $0x778] sm:$0xff]
    %v1602 = vld [vmem:[#allocation4 + $0x780] sm:$0xff]
    %v1603 = vld [vmem:[#allocation4 + $0x788] sm:$0xff]
    %v1604 = vld [vmem:[#allocation4 + $0x790] sm:$0xff]
    %v1605 = vld [vmem:[#allocation4 + $0x798] sm:$0xff]
    %v1606 = vld [vmem:[#allocation4 + $0x7a0] sm:$0xff]
    %v1607 = vld [vmem:[#allocation4 + $0x7a8] sm:$0xff]
    %v1608 = vld [vmem:[#allocation4 + $0x7b0] sm:$0xff]
    %v1609 = vld [vmem:[#allocation4 + $0x7b8] sm:$0xff]
    %v1610 = vld [vmem:[#allocation4 + $0x7c0] sm:$0xff]
    %v1611 = vld [vmem:[#allocation4 + $0x7c8] sm:$0xff]
    %v1612 = vld [vmem:[#allocation4 + $0x7d0] sm:$0xff]
    %v1613 = vld [vmem:[#allocation4 + $0x7d8] sm:$0xff]
    %v1614 = vld [vmem:[#allocation4 + $0x7e0] sm:$0xff]
    %v1615 = vld [vmem:[#allocation4 + $0x7e8] sm:$0xff]
    %v1616 = vld [vmem:[#allocation4 + $0x7f0] sm:$0xff]
    %v1617 = vld [vmem:[#allocation4 + $0x7f8] sm:$0xff]
    %1618 = vmatprep.subr.mxu0 0.0
    %1619 = vmatpush1.msra.mxu0 %v1298
    %1620 = vmatprep.subr.mxu0 0.0
    %1621 = vmatpush1.msra.mxu0 %v1299
    %1622 = vmatprep.subr.mxu0 0.0
    %1623 = vmatpush1.msra.mxu0 %v1300
    %1624 = vmatprep.subr.mxu0 0.0
    %1625 = vmatpush1.msra.mxu0 %v1301
    %1626 = vmatprep.subr.mxu0 0.0
    %1627 = vmatpush1.msra.mxu0 %v1302
    %1628 = vmatprep.subr.mxu0 0.0
    %1629 = vmatpush1.msra.mxu0 %v1303
    %1630 = vmatprep.subr.mxu0 0.0
    %1631 = vmatpush1.msra.mxu0 %v1304
    %1632 = vmatprep.subr.mxu0 0.0
    %1633 = vmatpush1.msra.mxu0 %v1305
    %1634 = vmatprep.subr.mxu0 0.0
    %1635 = vmatpush1.msra.mxu0 %v1306
    %1636 = vmatprep.subr.mxu0 0.0
    %1637 = vmatpush1.msra.mxu0 %v1307
    %1638 = vmatprep.subr.mxu0 0.0
    %1639 = vmatpush1.msra.mxu0 %v1308
    %1640 = vmatprep.subr.mxu0 0.0
    %1641 = vmatpush1.msra.mxu0 %v1309
    %1642 = vmatprep.subr.mxu0 0.0
    %1643 = vmatpush1.msra.mxu0 %v1310
    %1644 = vmatprep.subr.mxu0 0.0
    %1645 = vmatpush1.msra.mxu0 %v1311
    %1646 = vmatprep.subr.mxu0 0.0
    %1647 = vmatpush1.msra.mxu0 %v1312
    %1648 = vmatprep.subr.mxu0 0.0
    %1649 = vmatpush1.msra.mxu0 %v1313
    %1650 = vmatprep.subr.mxu0 0.0
    %1651 = vmatpush1.msra.mxu0 %v1314
    %1652 = vmatprep.subr.mxu0 0.0
    %1653 = vmatpush1.msra.mxu0 %v1315
    %1654 = vmatprep.subr.mxu0 0.0
    %1655 = vmatpush1.msra.mxu0 %v1316
    %1656 = vmatprep.subr.mxu0 0.0
    %1657 = vmatpush1.msra.mxu0 %v1317
    %1658 = vmatprep.subr.mxu0 0.0
    %1659 = vmatpush1.msra.mxu0 %v1318
    %1660 = vmatprep.subr.mxu0 0.0
    %1661 = vmatpush1.msra.mxu0 %v1319
    %1662 = vmatprep.subr.mxu0 0.0
    %1663 = vmatpush1.msra.mxu0 %v1320
    %1664 = vmatprep.subr.mxu0 0.0
    %1665 = vmatpush1.msra.mxu0 %v1321
    %1666 = vmatprep.subr.mxu0 0.0
    %1667 = vmatpush1.msra.mxu0 %v1322
    %1668 = vmatprep.subr.mxu0 0.0
    %1669 = vmatpush1.msra.mxu0 %v1323
    %1670 = vmatprep.subr.mxu0 0.0
    %1671 = vmatpush1.msra.mxu0 %v1324
    %1672 = vmatprep.subr.mxu0 0.0
    %1673 = vmatpush1.msra.mxu0 %v1325
    %1674 = vmatprep.subr.mxu0 0.0
    %1675 = vmatpush1.msra.mxu0 %v1326
    %1676 = vmatprep.subr.mxu0 0.0
    %1677 = vmatpush1.msra.mxu0 %v1327
    %1678 = vmatprep.subr.mxu0 0.0
    %1679 = vmatpush1.msra.mxu0 %v1328
    %1680 = vmatprep.subr.mxu0 0.0
    %1681 = vmatpush1.msra.mxu0 %v1329
    %1682 = vmatprep.mubr.f32.mxu0 %v1363
    %1683 = vmatmul.mubr.f32.gmra.mrb[0].mxu0 %v1362
    %v1684 = vpop.f32.mrb[0].mxu0
    %v1685 = vadd.f32 0.0, %v1684
    %v1686 = vpop.f32.mrb[0].mxu0
    %1687 = vmatprep.mubr.f32.mxu0 %v1367
    %1688 = vmatmul.mubr.f32.gmra.mrb[0].mxu0 %v1366
    %v1689 = vpop.f32.mrb[0].mxu0
    %v1690 = vadd.f32 0.0, %v1689
    %v1691 = vpop.f32.mrb[0].mxu0
    %1692 = vmatprep.mubr.f32.mxu0 %v1371
    %1693 = vmatmul.mubr.f32.gmra.mrb[0].mxu0 %v1370
    %v1694 = vpop.f32.mrb[0].mxu0
    %v1695 = vadd.f32 0.0, %v1694
    %v1696 = vpop.f32.mrb[0].mxu0
    %1697 = vmatprep.mubr.f32.mxu0 %v1375
    %1698 = vmatmul.mubr.f32.gmra.mrb[0].mxu0 %v1374
    %v1699 = vpop.f32.mrb[0].mxu0
    %v1700 = vadd.f32 0.0, %v1699
    %v1701 = vpop.f32.mrb[0].mxu0
    %1702 = vmatprep.mubr.f32.mxu0 %v1379
    %1703 = vmatmul.mubr.f32.gmra.mrb[0].mxu0 %v1378
    %v1704 = vpop.f32.mrb[0].mxu0
    %v1705 = vadd.f32 0.0, %v1704
    %v1706 = vpop.f32.mrb[0].mxu0
    %1707 = vmatprep.mubr.f32.mxu0 %v1383
    %1708 = vmatmul.mubr.f32.gmra.mrb[0].mxu0 %v1382
    %v1709 = vpop.f32.mrb[0].mxu0
    %v1710 = vadd.f32 0.0, %v1709
    %v1711 = vpop.f32.mrb[0].mxu0
    %1712 = vmatprep.mubr.f32.mxu0 %v1387
    %1713 = vmatmul.mubr.f32.gmra.mrb[0].mxu0 %v1386
    %v1714 = vpop.f32.mrb[0].mxu0
    %v1715 = vadd.f32 0.0, %v1714
    %v1716 = vpop.f32.mrb[0].mxu0
    %1717 = vmatprep.mubr.f32.mxu0 %v1391
    %1718 = vmatmul.mubr.f32.gmra.mrb[0].mxu0 %v1390
    %v1719 = vpop.f32.mrb[0].mxu0
    %v1720 = vadd.f32 0.0, %v1719
    %v1721 = vpop.f32.mrb[0].mxu0
    %1722 = vmatprep.mubr.f32.mxu0 %v1395
    %1723 = vmatmul.mubr.f32.gmra.mrb[0].mxu0 %v1394
    %v1724 = vpop.f32.mrb[0].mxu0
    %v1725 = vadd.f32 0.0, %v1724
    %v1726 = vpop.f32.mrb[0].mxu0
    %1727 = vmatprep.mubr.f32.mxu0 %v1399
    %1728 = vmatmul.mubr.f32.gmra.mrb[0].mxu0 %v1398
    %v1729 = vpop.f32.mrb[0].mxu0
    %v1730 = vadd.f32 0.0, %v1729
    %v1731 = vpop.f32.mrb[0].mxu0
    %1732 = vmatprep.mubr.f32.mxu0 %v1403
    %1733 = vmatmul.mubr.f32.gmra.mrb[0].mxu0 %v1402
    %v1734 = vpop.f32.mrb[0].mxu0
    %v1735 = vadd.f32 0.0, %v1734
    %v1736 = vpop.f32.mrb[0].mxu0
    %1737 = vmatprep.mubr.f32.mxu0 %v1407
    %1738 = vmatmul.mubr.f32.gmra.mrb[0].mxu0 %v1406
    %v1739 = vpop.f32.mrb[0].mxu0
    %v1740 = vadd.f32 0.0, %v1739
    %v1741 = vpop.f32.mrb[0].mxu0
    %1742 = vmatprep.mubr.f32.mxu0 %v1411
    %1743 = vmatmul.mubr.f32.gmra.mrb[0].mxu0 %v1410
    %v1744 = vpop.f32.mrb[0].mxu0
    %v1745 = vadd.f32 0.0, %v1744
    %v1746 = vpop.f32.mrb[0].mxu0
    %1747 = vmatprep.mubr.f32.mxu0 %v1415
    %1748 = vmatmul.mubr.f32.gmra.mrb[0].mxu0 %v1414
    %v1749 = vpop.f32.mrb[0].mxu0
    %v1750 = vadd.f32 0.0, %v1749
    %v1751 = vpop.f32.mrb[0].mxu0
    %1752 = vmatprep.mubr.f32.mxu0 %v1419
    %1753 = vmatmul.mubr.f32.gmra.mrb[0].mxu0 %v1418
    %v1754 = vpop.f32.mrb[0].mxu0
    %v1755 = vadd.f32 0.0, %v1754
    %v1756 = vpop.f32.mrb[0].mxu0
    %1757 = vmatprep.mubr.f32.mxu0 %v1423
    %1758 = vmatmul.mubr.f32.gmra.mrb[0].mxu0 %v1422
    %v1759 = vpop.f32.mrb[0].mxu0
    %v1760 = vadd.f32 0.0, %v1759
    %v1761 = vpop.f32.mrb[0].mxu0
    %1762 = vmatprep.mubr.f32.mxu0 %v1427
    %1763 = vmatmul.mubr.f32.gmra.mrb[0].mxu0 %v1426
    %v1764 = vpop.f32.mrb[0].mxu0
    %v1765 = vadd.f32 0.0, %v1764
    %v1766 = vpop.f32.mrb[0].mxu0
    %1767 = vmatprep.mubr.f32.mxu0 %v1431
    %1768 = vmatmul.mubr.f32.gmra.mrb[0].mxu0 %v1430
    %v1769 = vpop.f32.mrb[0].mxu0
    %v1770 = vadd.f32 0.0, %v1769
    %v1771 = vpop.f32.mrb[0].mxu0
    %1772 = vmatprep.mubr.f32.mxu0 %v1435
    %1773 = vmatmul.mubr.f32.gmra.mrb[0].mxu0 %v1434
    %v1774 = vpop.f32.mrb[0].mxu0
    %v1775 = vadd.f32 0.0, %v1774
    %v1776 = vpop.f32.mrb[0].mxu0
    %1777 = vmatprep.mubr.f32.mxu0 %v1439
    %1778 = vmatmul.mubr.f32.gmra.mrb[0].mxu0 %v1438
    %v1779 = vpop.f32.mrb[0].mxu0
    %v1780 = vadd.f32 0.0, %v1779
    %v1781 = vpop.f32.mrb[0].mxu0
    %1782 = vmatprep.mubr.f32.mxu0 %v1443
    %1783 = vmatmul.mubr.f32.gmra.mrb[0].mxu0 %v1442
    %v1784 = vpop.f32.mrb[0].mxu0
    %v1785 = vadd.f32 0.0, %v1784
    %v1786 = vpop.f32.mrb[0].mxu0
    %1787 = vmatprep.mubr.f32.mxu0 %v1447
    %1788 = vmatmul.mubr.f32.gmra.mrb[0].mxu0 %v1446
    %v1789 = vpop.f32.mrb[0].mxu0
    %v1790 = vadd.f32 0.0, %v1789
    %v1791 = vpop.f32.mrb[0].mxu0
    %1792 = vmatprep.mubr.f32.mxu0 %v1451
    %1793 = vmatmul.mubr.f32.gmra.mrb[0].mxu0 %v1450
    %v1794 = vpop.f32.mrb[0].mxu0
    %v1795 = vadd.f32 0.0, %v1794
    %v1796 = vpop.f32.mrb[0].mxu0
    %1797 = vmatprep.mubr.f32.mxu0 %v1455
    %1798 = vmatmul.mubr.f32.gmra.mrb[0].mxu0 %v1454
    %v1799 = vpop.f32.mrb[0].mxu0
    %v1800 = vadd.f32 0.0, %v1799
    %v1801 = vpop.f32.mrb[0].mxu0
    %1802 = vmatprep.mubr.f32.mxu0 %v1459
    %1803 = vmatmul.mubr.f32.gmra.mrb[0].mxu0 %v1458
    %v1804 = vpop.f32.mrb[0].mxu0
    %v1805 = vadd.f32 0.0, %v1804
    %v1806 = vpop.f32.mrb[0].mxu0
    %1807 = vmatprep.mubr.f32.mxu0 %v1463
    %1808 = vmatmul.mubr.f32.gmra.mrb[0].mxu0 %v1462
    %v1809 = vpop.f32.mrb[0].mxu0
    %v1810 = vadd.f32 0.0, %v1809
    %v1811 = vpop.f32.mrb[0].mxu0
    %1812 = vmatprep.mubr.f32.mxu0 %v1467
    %1813 = vmatmul.mubr.f32.gmra.mrb[0].mxu0 %v1466
    %v1814 = vpop.f32.mrb[0].mxu0
    %v1815 = vadd.f32 0.0, %v1814
    %v1816 = vpop.f32.mrb[0].mxu0
    %1817 = vmatprep.mubr.f32.mxu0 %v1471
    %1818 = vmatmul.mubr.f32.gmra.mrb[0].mxu0 %v1470
    %v1819 = vpop.f32.mrb[0].mxu0
    %v1820 = vadd.f32 0.0, %v1819
    %v1821 = vpop.f32.mrb[0].mxu0
    %1822 = vmatprep.mubr.f32.mxu0 %v1475
    %1823 = vmatmul.mubr.f32.gmra.mrb[0].mxu0 %v1474
    %v1824 = vpop.f32.mrb[0].mxu0
    %v1825 = vadd.f32 0.0, %v1824
    %v1826 = vpop.f32.mrb[0].mxu0
    %1827 = vmatprep.mubr.f32.mxu0 %v1479
    %1828 = vmatmul.mubr.f32.gmra.mrb[0].mxu0 %v1478
    %v1829 = vpop.f32.mrb[0].mxu0
    %v1830 = vadd.f32 0.0, %v1829
    %v1831 = vpop.f32.mrb[0].mxu0
    %1832 = vmatprep.mubr.f32.mxu0 %v1483
    %1833 = vmatmul.mubr.f32.gmra.mrb[0].mxu0 %v1482
    %v1834 = vpop.f32.mrb[0].mxu0
    %v1835 = vadd.f32 0.0, %v1834
    %v1836 = vpop.f32.mrb[0].mxu0
    %1837 = vmatprep.mubr.f32.mxu0 %v1487
    %1838 = vmatmul.mubr.f32.gmra.mrb[0].mxu0 %v1486
    %v1839 = vpop.f32.mrb[0].mxu0
    %v1840 = vadd.f32 0.0, %v1839
    %v1841 = vpop.f32.mrb[0].mxu0
    %1842 = vmatprep.mubr.f32.mxu0 %v1491
    %1843 = vmatmul.mubr.f32.gmra.mrb[0].mxu0 %v1490
    %v1844 = vpop.f32.mrb[0].mxu0
    %v1845 = vadd.f32 0.0, %v1844
    %v1846 = vpop.f32.mrb[0].mxu0
    %1847 = vmatprep.mubr.f32.mxu0 %v1495
    %1848 = vmatmul.mubr.f32.gmra.mrb[0].mxu0 %v1494
    %v1849 = vpop.f32.mrb[0].mxu0
    %v1850 = vadd.f32 0.0, %v1849
    %v1851 = vpop.f32.mrb[0].mxu0
    %1852 = vmatprep.mubr.f32.mxu0 %v1499
    %1853 = vmatmul.mubr.f32.gmra.mrb[0].mxu0 %v1498
    %v1854 = vpop.f32.mrb[0].mxu0
    %v1855 = vadd.f32 0.0, %v1854
    %v1856 = vpop.f32.mrb[0].mxu0
    %1857 = vmatprep.mubr.f32.mxu0 %v1503
    %1858 = vmatmul.mubr.f32.gmra.mrb[0].mxu0 %v1502
    %v1859 = vpop.f32.mrb[0].mxu0
    %v1860 = vadd.f32 0.0, %v1859
    %v1861 = vpop.f32.mrb[0].mxu0
    %1862 = vmatprep.mubr.f32.mxu0 %v1507
    %1863 = vmatmul.mubr.f32.gmra.mrb[0].mxu0 %v1506
    %v1864 = vpop.f32.mrb[0].mxu0
    %v1865 = vadd.f32 0.0, %v1864
    %v1866 = vpop.f32.mrb[0].mxu0
    %1867 = vmatprep.mubr.f32.mxu0 %v1511
    %1868 = vmatmul.mubr.f32.gmra.mrb[0].mxu0 %v1510
    %v1869 = vpop.f32.mrb[0].mxu0
    %v1870 = vadd.f32 0.0, %v1869
    %v1871 = vpop.f32.mrb[0].mxu0
    %1872 = vmatprep.mubr.f32.mxu0 %v1515
    %1873 = vmatmul.mubr.f32.gmra.mrb[0].mxu0 %v1514
    %v1874 = vpop.f32.mrb[0].mxu0
    %v1875 = vadd.f32 0.0, %v1874
    %v1876 = vpop.f32.mrb[0].mxu0
    %1877 = vmatprep.mubr.f32.mxu0 %v1519
    %1878 = vmatmul.mubr.f32.gmra.mrb[0].mxu0 %v1518
    %v1879 = vpop.f32.mrb[0].mxu0
    %v1880 = vadd.f32 0.0, %v1879
    %v1881 = vpop.f32.mrb[0].mxu0
    %1882 = vmatprep.mubr.f32.mxu0 %v1523
    %1883 = vmatmul.mubr.f32.gmra.mrb[0].mxu0 %v1522
    %v1884 = vpop.f32.mrb[0].mxu0
    %v1885 = vadd.f32 0.0, %v1884
    %v1886 = vpop.f32.mrb[0].mxu0
    %1887 = vmatprep.mubr.f32.mxu0 %v1527
    %1888 = vmatmul.mubr.f32.gmra.mrb[0].mxu0 %v1526
    %v1889 = vpop.f32.mrb[0].mxu0
    %v1890 = vadd.f32 0.0, %v1889
    %v1891 = vpop.f32.mrb[0].mxu0
    %1892 = vmatprep.mubr.f32.mxu0 %v1531
    %1893 = vmatmul.mubr.f32.gmra.mrb[0].mxu0 %v1530
    %v1894 = vpop.f32.mrb[0].mxu0
    %v1895 = vadd.f32 0.0, %v1894
    %v1896 = vpop.f32.mrb[0].mxu0
    %1897 = vmatprep.mubr.f32.mxu0 %v1535
    %1898 = vmatmul.mubr.f32.gmra.mrb[0].mxu0 %v1534
    %v1899 = vpop.f32.mrb[0].mxu0
    %v1900 = vadd.f32 0.0, %v1899
    %v1901 = vpop.f32.mrb[0].mxu0
    %1902 = vmatprep.mubr.f32.mxu0 %v1539
    %1903 = vmatmul.mubr.f32.gmra.mrb[0].mxu0 %v1538
    %v1904 = vpop.f32.mrb[0].mxu0
    %v1905 = vadd.f32 0.0, %v1904
    %v1906 = vpop.f32.mrb[0].mxu0
    %1907 = vmatprep.mubr.f32.mxu0 %v1543
    %1908 = vmatmul.mubr.f32.gmra.mrb[0].mxu0 %v1542
    %v1909 = vpop.f32.mrb[0].mxu0
    %v1910 = vadd.f32 0.0, %v1909
    %v1911 = vpop.f32.mrb[0].mxu0
    %1912 = vmatprep.mubr.f32.mxu0 %v1547
    %1913 = vmatmul.mubr.f32.gmra.mrb[0].mxu0 %v1546
    %v1914 = vpop.f32.mrb[0].mxu0
    %v1915 = vadd.f32 0.0, %v1914
    %v1916 = vpop.f32.mrb[0].mxu0
    %1917 = vmatprep.mubr.f32.mxu0 %v1551
    %1918 = vmatmul.mubr.f32.gmra.mrb[0].mxu0 %v1550
    %v1919 = vpop.f32.mrb[0].mxu0
    %v1920 = vadd.f32 0.0, %v1919
    %v1921 = vpop.f32.mrb[0].mxu0
    %1922 = vmatprep.mubr.f32.mxu0 %v1555
    %1923 = vmatmul.mubr.f32.gmra.mrb[0].mxu0 %v1554
    %v1924 = vpop.f32.mrb[0].mxu0
    %v1925 = vadd.f32 0.0, %v1924
    %v1926 = vpop.f32.mrb[0].mxu0
    %1927 = vmatprep.mubr.f32.mxu0 %v1559
    %1928 = vmatmul.mubr.f32.gmra.mrb[0].mxu0 %v1558
    %v1929 = vpop.f32.mrb[0].mxu0
    %v1930 = vadd.f32 0.0, %v1929
    %v1931 = vpop.f32.mrb[0].mxu0
    %1932 = vmatprep.mubr.f32.mxu0 %v1563
    %1933 = vmatmul.mubr.f32.gmra.mrb[0].mxu0 %v1562
    %v1934 = vpop.f32.mrb[0].mxu0
    %v1935 = vadd.f32 0.0, %v1934
    %v1936 = vpop.f32.mrb[0].mxu0
    %1937 = vmatprep.mubr.f32.mxu0 %v1567
    %1938 = vmatmul.mubr.f32.gmra.mrb[0].mxu0 %v1566
    %v1939 = vpop.f32.mrb[0].mxu0
    %v1940 = vadd.f32 0.0, %v1939
    %v1941 = vpop.f32.mrb[0].mxu0
    %1942 = vmatprep.mubr.f32.mxu0 %v1571
    %1943 = vmatmul.mubr.f32.gmra.mrb[0].mxu0 %v1570
    %v1944 = vpop.f32.mrb[0].mxu0
    %v1945 = vadd.f32 0.0, %v1944
    %v1946 = vpop.f32.mrb[0].mxu0
    %1947 = vmatprep.mubr.f32.mxu0 %v1575
    %1948 = vmatmul.mubr.f32.gmra.mrb[0].mxu0 %v1574
    %v1949 = vpop.f32.mrb[0].mxu0
    %v1950 = vadd.f32 0.0, %v1949
    %v1951 = vpop.f32.mrb[0].mxu0
    %1952 = vmatprep.mubr.f32.mxu0 %v1579
    %1953 = vmatmul.mubr.f32.gmra.mrb[0].mxu0 %v1578
    %v1954 = vpop.f32.mrb[0].mxu0
    %v1955 = vadd.f32 0.0, %v1954
    %v1956 = vpop.f32.mrb[0].mxu0
    %1957 = vmatprep.mubr.f32.mxu0 %v1583
    %1958 = vmatmul.mubr.f32.gmra.mrb[0].mxu0 %v1582
    %v1959 = vpop.f32.mrb[0].mxu0
    %v1960 = vadd.f32 0.0, %v1959
    %v1961 = vpop.f32.mrb[0].mxu0
    %1962 = vmatprep.mubr.f32.mxu0 %v1587
    %1963 = vmatmul.mubr.f32.gmra.mrb[0].mxu0 %v1586
    %v1964 = vpop.f32.mrb[0].mxu0
    %v1965 = vadd.f32 0.0, %v1964
    %v1966 = vpop.f32.mrb[0].mxu0
    %1967 = vmatprep.mubr.f32.mxu0 %v1591
    %1968 = vmatmul.mubr.f32.gmra.mrb[0].mxu0 %v1590
    %v1969 = vpop.f32.mrb[0].mxu0
    %v1970 = vadd.f32 0.0, %v1969
    %v1971 = vpop.f32.mrb[0].mxu0
    %1972 = vmatprep.mubr.f32.mxu0 %v1595
    %1973 = vmatmul.mubr.f32.gmra.mrb[0].mxu0 %v1594
    %v1974 = vpop.f32.mrb[0].mxu0
    %v1975 = vadd.f32 0.0, %v1974
    %v1976 = vpop.f32.mrb[0].mxu0
    %1977 = vmatprep.mubr.f32.mxu0 %v1599
    %1978 = vmatmul.mubr.f32.gmra.mrb[0].mxu0 %v1598
    %v1979 = vpop.f32.mrb[0].mxu0
    %v1980 = vadd.f32 0.0, %v1979
    %v1981 = vpop.f32.mrb[0].mxu0
    %1982 = vmatprep.mubr.f32.mxu0 %v1603
    %1983 = vmatmul.mubr.f32.gmra.mrb[0].mxu0 %v1602
    %v1984 = vpop.f32.mrb[0].mxu0
    %v1985 = vadd.f32 0.0, %v1984
    %v1986 = vpop.f32.mrb[0].mxu0
    %1987 = vmatprep.mubr.f32.mxu0 %v1607
    %1988 = vmatmul.mubr.f32.gmra.mrb[0].mxu0 %v1606
    %v1989 = vpop.f32.mrb[0].mxu0
    %v1990 = vadd.f32 0.0, %v1989
    %v1991 = vpop.f32.mrb[0].mxu0
    %1992 = vmatprep.mubr.f32.mxu0 %v1611
    %1993 = vmatmul.mubr.f32.gmra.mrb[0].mxu0 %v1610
    %v1994 = vpop.f32.mrb[0].mxu0
    %v1995 = vadd.f32 0.0, %v1994
    %v1996 = vpop.f32.mrb[0].mxu0
    %1997 = vmatprep.mubr.f32.mxu0 %v1615
    %1998 = vmatmul.mubr.f32.gmra.mrb[0].mxu0 %v1614
    %v1999 = vpop.f32.mrb[0].mxu0
    %v2000 = vadd.f32 0.0, %v1999
    %v2001 = vpop.f32.mrb[0].mxu0
    %2002 = vdwg.mxu0
    %2003 = vmatprep.subr.mxu0 0.0
    %2004 = vmatpush1.msra.mxu0 %v1330
    %2005 = vmatprep.subr.mxu0 0.0
    %2006 = vmatpush1.msra.mxu0 %v1331
    %2007 = vmatprep.subr.mxu0 0.0
    %2008 = vmatpush1.msra.mxu0 %v1332
    %2009 = vmatprep.subr.mxu0 0.0
    %2010 = vmatpush1.msra.mxu0 %v1333
    %2011 = vmatprep.subr.mxu0 0.0
    %2012 = vmatpush1.msra.mxu0 %v1334
    %2013 = vmatprep.subr.mxu0 0.0
    %2014 = vmatpush1.msra.mxu0 %v1335
    %2015 = vmatprep.subr.mxu0 0.0
    %2016 = vmatpush1.msra.mxu0 %v1336
    %2017 = vmatprep.subr.mxu0 0.0
    %2018 = vmatpush1.msra.mxu0 %v1337
    %2019 = vmatprep.subr.mxu0 0.0
    %2020 = vmatpush1.msra.mxu0 %v1338
    %2021 = vmatprep.subr.mxu0 0.0
    %2022 = vmatpush1.msra.mxu0 %v1339
    %2023 = vmatprep.subr.mxu0 0.0
    %2024 = vmatpush1.msra.mxu0 %v1340
    %2025 = vmatprep.subr.mxu0 0.0
    %2026 = vmatpush1.msra.mxu0 %v1341
    %2027 = vmatprep.subr.mxu0 0.0
    %2028 = vmatpush1.msra.mxu0 %v1342
    %2029 = vmatprep.subr.mxu0 0.0
    %2030 = vmatpush1.msra.mxu0 %v1343
    %2031 = vmatprep.subr.mxu0 0.0
    %2032 = vmatpush1.msra.mxu0 %v1344
    %2033 = vmatprep.subr.mxu0 0.0
    %2034 = vmatpush1.msra.mxu0 %v1345
    %2035 = vmatprep.subr.mxu0 0.0
    %2036 = vmatpush1.msra.mxu0 %v1346
    %2037 = vmatprep.subr.mxu0 0.0
    %2038 = vmatpush1.msra.mxu0 %v1347
    %2039 = vmatprep.subr.mxu0 0.0
    %2040 = vmatpush1.msra.mxu0 %v1348
    %2041 = vmatprep.subr.mxu0 0.0
    %2042 = vmatpush1.msra.mxu0 %v1349
    %2043 = vmatprep.subr.mxu0 0.0
    %2044 = vmatpush1.msra.mxu0 %v1350
    %2045 = vmatprep.subr.mxu0 0.0
    %2046 = vmatpush1.msra.mxu0 %v1351
    %2047 = vmatprep.subr.mxu0 0.0
    %2048 = vmatpush1.msra.mxu0 %v1352
    %2049 = vmatprep.subr.mxu0 0.0
    %2050 = vmatpush1.msra.mxu0 %v1353
    %2051 = vmatprep.subr.mxu0 0.0
    %2052 = vmatpush1.msra.mxu0 %v1354
    %2053 = vmatprep.subr.mxu0 0.0
    %2054 = vmatpush1.msra.mxu0 %v1355
    %2055 = vmatprep.subr.mxu0 0.0
    %2056 = vmatpush1.msra.mxu0 %v1356
    %2057 = vmatprep.subr.mxu0 0.0
    %2058 = vmatpush1.msra.mxu0 %v1357
    %2059 = vmatprep.subr.mxu0 0.0
    %2060 = vmatpush1.msra.mxu0 %v1358
    %2061 = vmatprep.subr.mxu0 0.0
    %2062 = vmatpush1.msra.mxu0 %v1359
    %2063 = vmatprep.subr.mxu0 0.0
    %2064 = vmatpush1.msra.mxu0 %v1360
    %2065 = vmatprep.subr.mxu0 0.0
    %2066 = vmatpush1.msra.mxu0 %v1361
    %2067 = vmatprep.mubr.f32.mxu0 %v1365
    %2068 = vmatmul.mubr.f32.gmra.mrb[0].mxu0 %v1364
    %v2069 = vpop.f32.mrb[0].mxu0
    %v2070 = vadd.f32 %v1685, %v2069
    %v2071 = vpop.f32.mrb[0].mxu0
    %2072 = vmatprep.mubr.f32.mxu0 %v1369
    %2073 = vmatmul.mubr.f32.gmra.mrb[0].mxu0 %v1368
    %v2074 = vpop.f32.mrb[0].mxu0
    %v2075 = vadd.f32 %v1690, %v2074
    %v2076 = vpop.f32.mrb[0].mxu0
    %2077 = vmatprep.mubr.f32.mxu0 %v1373
    %2078 = vmatmul.mubr.f32.gmra.mrb[0].mxu0 %v1372
    %v2079 = vpop.f32.mrb[0].mxu0
    %v2080 = vadd.f32 %v1695, %v2079
    %v2081 = vpop.f32.mrb[0].mxu0
    %2082 = vmatprep.mubr.f32.mxu0 %v1377
    %2083 = vmatmul.mubr.f32.gmra.mrb[0].mxu0 %v1376
    %v2084 = vpop.f32.mrb[0].mxu0
    %v2085 = vadd.f32 %v1700, %v2084
    %v2086 = vpop.f32.mrb[0].mxu0
    %2087 = vmatprep.mubr.f32.mxu0 %v1381
    %2088 = vmatmul.mubr.f32.gmra.mrb[0].mxu0 %v1380
    %v2089 = vpop.f32.mrb[0].mxu0
    %v2090 = vadd.f32 %v1705, %v2089
    %v2091 = vpop.f32.mrb[0].mxu0
    %2092 = vmatprep.mubr.f32.mxu0 %v1385
    %2093 = vmatmul.mubr.f32.gmra.mrb[0].mxu0 %v1384
    %v2094 = vpop.f32.mrb[0].mxu0
    %v2095 = vadd.f32 %v1710, %v2094
    %v2096 = vpop.f32.mrb[0].mxu0
    %2097 = vmatprep.mubr.f32.mxu0 %v1389
    %2098 = vmatmul.mubr.f32.gmra.mrb[0].mxu0 %v1388
    %v2099 = vpop.f32.mrb[0].mxu0
    %v2100 = vadd.f32 %v1715, %v2099
    %v2101 = vpop.f32.mrb[0].mxu0
    %2102 = vmatprep.mubr.f32.mxu0 %v1393
    %2103 = vmatmul.mubr.f32.gmra.mrb[0].mxu0 %v1392
    %v2104 = vpop.f32.mrb[0].mxu0
    %v2105 = vadd.f32 %v1720, %v2104
    %v2106 = vpop.f32.mrb[0].mxu0
    %2107 = vmatprep.mubr.f32.mxu0 %v1397
    %2108 = vmatmul.mubr.f32.gmra.mrb[0].mxu0 %v1396
    %v2109 = vpop.f32.mrb[0].mxu0
    %v2110 = vadd.f32 %v1725, %v2109
    %v2111 = vpop.f32.mrb[0].mxu0
    %2112 = vmatprep.mubr.f32.mxu0 %v1401
    %2113 = vmatmul.mubr.f32.gmra.mrb[0].mxu0 %v1400
    %v2114 = vpop.f32.mrb[0].mxu0
    %v2115 = vadd.f32 %v1730, %v2114
    %v2116 = vpop.f32.mrb[0].mxu0
    %2117 = vmatprep.mubr.f32.mxu0 %v1405
    %2118 = vmatmul.mubr.f32.gmra.mrb[0].mxu0 %v1404
    %v2119 = vpop.f32.mrb[0].mxu0
    %v2120 = vadd.f32 %v1735, %v2119
    %v2121 = vpop.f32.mrb[0].mxu0
    %2122 = vmatprep.mubr.f32.mxu0 %v1409
    %2123 = vmatmul.mubr.f32.gmra.mrb[0].mxu0 %v1408
    %v2124 = vpop.f32.mrb[0].mxu0
    %v2125 = vadd.f32 %v1740, %v2124
    %v2126 = vpop.f32.mrb[0].mxu0
    %2127 = vmatprep.mubr.f32.mxu0 %v1413
    %2128 = vmatmul.mubr.f32.gmra.mrb[0].mxu0 %v1412
    %v2129 = vpop.f32.mrb[0].mxu0
    %v2130 = vadd.f32 %v1745, %v2129
    %v2131 = vpop.f32.mrb[0].mxu0
    %2132 = vmatprep.mubr.f32.mxu0 %v1417
    %2133 = vmatmul.mubr.f32.gmra.mrb[0].mxu0 %v1416
    %v2134 = vpop.f32.mrb[0].mxu0
    %v2135 = vadd.f32 %v1750, %v2134
    %v2136 = vpop.f32.mrb[0].mxu0
    %2137 = vmatprep.mubr.f32.mxu0 %v1421
    %2138 = vmatmul.mubr.f32.gmra.mrb[0].mxu0 %v1420
    %v2139 = vpop.f32.mrb[0].mxu0
    %v2140 = vadd.f32 %v1755, %v2139
    %v2141 = vpop.f32.mrb[0].mxu0
    %2142 = vmatprep.mubr.f32.mxu0 %v1425
    %2143 = vmatmul.mubr.f32.gmra.mrb[0].mxu0 %v1424
    %v2144 = vpop.f32.mrb[0].mxu0
    %v2145 = vadd.f32 %v1760, %v2144
    %v2146 = vpop.f32.mrb[0].mxu0
    %2147 = vmatprep.mubr.f32.mxu0 %v1429
    %2148 = vmatmul.mubr.f32.gmra.mrb[0].mxu0 %v1428
    %v2149 = vpop.f32.mrb[0].mxu0
    %v2150 = vadd.f32 %v1765, %v2149
    %v2151 = vpop.f32.mrb[0].mxu0
    %2152 = vmatprep.mubr.f32.mxu0 %v1433
    %2153 = vmatmul.mubr.f32.gmra.mrb[0].mxu0 %v1432
    %v2154 = vpop.f32.mrb[0].mxu0
    %v2155 = vadd.f32 %v1770, %v2154
    %v2156 = vpop.f32.mrb[0].mxu0
    %2157 = vmatprep.mubr.f32.mxu0 %v1437
    %2158 = vmatmul.mubr.f32.gmra.mrb[0].mxu0 %v1436
    %v2159 = vpop.f32.mrb[0].mxu0
    %v2160 = vadd.f32 %v1775, %v2159
    %v2161 = vpop.f32.mrb[0].mxu0
    %2162 = vmatprep.mubr.f32.mxu0 %v1441
    %2163 = vmatmul.mubr.f32.gmra.mrb[0].mxu0 %v1440
    %v2164 = vpop.f32.mrb[0].mxu0
    %v2165 = vadd.f32 %v1780, %v2164
    %v2166 = vpop.f32.mrb[0].mxu0
    %2167 = vmatprep.mubr.f32.mxu0 %v1445
    %2168 = vmatmul.mubr.f32.gmra.mrb[0].mxu0 %v1444
    %v2169 = vpop.f32.mrb[0].mxu0
    %v2170 = vadd.f32 %v1785, %v2169
    %v2171 = vpop.f32.mrb[0].mxu0
    %2172 = vmatprep.mubr.f32.mxu0 %v1449
    %2173 = vmatmul.mubr.f32.gmra.mrb[0].mxu0 %v1448
    %v2174 = vpop.f32.mrb[0].mxu0
    %v2175 = vadd.f32 %v1790, %v2174
    %v2176 = vpop.f32.mrb[0].mxu0
    %2177 = vmatprep.mubr.f32.mxu0 %v1453
    %2178 = vmatmul.mubr.f32.gmra.mrb[0].mxu0 %v1452
    %v2179 = vpop.f32.mrb[0].mxu0
    %v2180 = vadd.f32 %v1795, %v2179
    %v2181 = vpop.f32.mrb[0].mxu0
    %2182 = vmatprep.mubr.f32.mxu0 %v1457
    %2183 = vmatmul.mubr.f32.gmra.mrb[0].mxu0 %v1456
    %v2184 = vpop.f32.mrb[0].mxu0
    %v2185 = vadd.f32 %v1800, %v2184
    %v2186 = vpop.f32.mrb[0].mxu0
    %2187 = vmatprep.mubr.f32.mxu0 %v1461
    %2188 = vmatmul.mubr.f32.gmra.mrb[0].mxu0 %v1460
    %v2189 = vpop.f32.mrb[0].mxu0
    %v2190 = vadd.f32 %v1805, %v2189
    %v2191 = vpop.f32.mrb[0].mxu0
    %2192 = vmatprep.mubr.f32.mxu0 %v1465
    %2193 = vmatmul.mubr.f32.gmra.mrb[0].mxu0 %v1464
    %v2194 = vpop.f32.mrb[0].mxu0
    %v2195 = vadd.f32 %v1810, %v2194
    %v2196 = vpop.f32.mrb[0].mxu0
    %2197 = vmatprep.mubr.f32.mxu0 %v1469
    %2198 = vmatmul.mubr.f32.gmra.mrb[0].mxu0 %v1468
    %v2199 = vpop.f32.mrb[0].mxu0
    %v2200 = vadd.f32 %v1815, %v2199
    %v2201 = vpop.f32.mrb[0].mxu0
    %2202 = vmatprep.mubr.f32.mxu0 %v1473
    %2203 = vmatmul.mubr.f32.gmra.mrb[0].mxu0 %v1472
    %v2204 = vpop.f32.mrb[0].mxu0
    %v2205 = vadd.f32 %v1820, %v2204
    %v2206 = vpop.f32.mrb[0].mxu0
    %2207 = vmatprep.mubr.f32.mxu0 %v1477
    %2208 = vmatmul.mubr.f32.gmra.mrb[0].mxu0 %v1476
    %v2209 = vpop.f32.mrb[0].mxu0
    %v2210 = vadd.f32 %v1825, %v2209
    %v2211 = vpop.f32.mrb[0].mxu0
    %2212 = vmatprep.mubr.f32.mxu0 %v1481
    %2213 = vmatmul.mubr.f32.gmra.mrb[0].mxu0 %v1480
    %v2214 = vpop.f32.mrb[0].mxu0
    %v2215 = vadd.f32 %v1830, %v2214
    %v2216 = vpop.f32.mrb[0].mxu0
    %2217 = vmatprep.mubr.f32.mxu0 %v1485
    %2218 = vmatmul.mubr.f32.gmra.mrb[0].mxu0 %v1484
    %v2219 = vpop.f32.mrb[0].mxu0
    %v2220 = vadd.f32 %v1835, %v2219
    %v2221 = vpop.f32.mrb[0].mxu0
    %2222 = vmatprep.mubr.f32.mxu0 %v1489
    %2223 = vmatmul.mubr.f32.gmra.mrb[0].mxu0 %v1488
    %v2224 = vpop.f32.mrb[0].mxu0
    %v2225 = vadd.f32 %v1840, %v2224
    %v2226 = vpop.f32.mrb[0].mxu0
    %2227 = vmatprep.mubr.f32.mxu0 %v1493
    %2228 = vmatmul.mubr.f32.gmra.mrb[0].mxu0 %v1492
    %v2229 = vpop.f32.mrb[0].mxu0
    %v2230 = vadd.f32 %v1845, %v2229
    %v2231 = vpop.f32.mrb[0].mxu0
    %2232 = vmatprep.mubr.f32.mxu0 %v1497
    %2233 = vmatmul.mubr.f32.gmra.mrb[0].mxu0 %v1496
    %v2234 = vpop.f32.mrb[0].mxu0
    %v2235 = vadd.f32 %v1850, %v2234
    %v2236 = vpop.f32.mrb[0].mxu0
    %2237 = vmatprep.mubr.f32.mxu0 %v1501
    %2238 = vmatmul.mubr.f32.gmra.mrb[0].mxu0 %v1500
    %v2239 = vpop.f32.mrb[0].mxu0
    %v2240 = vadd.f32 %v1855, %v2239
    %v2241 = vpop.f32.mrb[0].mxu0
    %2242 = vmatprep.mubr.f32.mxu0 %v1505
    %2243 = vmatmul.mubr.f32.gmra.mrb[0].mxu0 %v1504
    %v2244 = vpop.f32.mrb[0].mxu0
    %v2245 = vadd.f32 %v1860, %v2244
    %v2246 = vpop.f32.mrb[0].mxu0
    %2247 = vmatprep.mubr.f32.mxu0 %v1509
    %2248 = vmatmul.mubr.f32.gmra.mrb[0].mxu0 %v1508
    %v2249 = vpop.f32.mrb[0].mxu0
    %v2250 = vadd.f32 %v1865, %v2249
    %v2251 = vpop.f32.mrb[0].mxu0
    %2252 = vmatprep.mubr.f32.mxu0 %v1513
    %2253 = vmatmul.mubr.f32.gmra.mrb[0].mxu0 %v1512
    %v2254 = vpop.f32.mrb[0].mxu0
    %v2255 = vadd.f32 %v1870, %v2254
    %v2256 = vpop.f32.mrb[0].mxu0
    %2257 = vmatprep.mubr.f32.mxu0 %v1517
    %2258 = vmatmul.mubr.f32.gmra.mrb[0].mxu0 %v1516
    %v2259 = vpop.f32.mrb[0].mxu0
    %v2260 = vadd.f32 %v1875, %v2259
    %v2261 = vpop.f32.mrb[0].mxu0
    %2262 = vmatprep.mubr.f32.mxu0 %v1521
    %2263 = vmatmul.mubr.f32.gmra.mrb[0].mxu0 %v1520
    %v2264 = vpop.f32.mrb[0].mxu0
    %v2265 = vadd.f32 %v1880, %v2264
    %v2266 = vpop.f32.mrb[0].mxu0
    %2267 = vmatprep.mubr.f32.mxu0 %v1525
    %2268 = vmatmul.mubr.f32.gmra.mrb[0].mxu0 %v1524
    %v2269 = vpop.f32.mrb[0].mxu0
    %v2270 = vadd.f32 %v1885, %v2269
    %v2271 = vpop.f32.mrb[0].mxu0
    %2272 = vmatprep.mubr.f32.mxu0 %v1529
    %2273 = vmatmul.mubr.f32.gmra.mrb[0].mxu0 %v1528
    %v2274 = vpop.f32.mrb[0].mxu0
    %v2275 = vadd.f32 %v1890, %v2274
    %v2276 = vpop.f32.mrb[0].mxu0
    %2277 = vmatprep.mubr.f32.mxu0 %v1533
    %2278 = vmatmul.mubr.f32.gmra.mrb[0].mxu0 %v1532
    %v2279 = vpop.f32.mrb[0].mxu0
    %v2280 = vadd.f32 %v1895, %v2279
    %v2281 = vpop.f32.mrb[0].mxu0
    %2282 = vmatprep.mubr.f32.mxu0 %v1537
    %2283 = vmatmul.mubr.f32.gmra.mrb[0].mxu0 %v1536
    %v2284 = vpop.f32.mrb[0].mxu0
    %v2285 = vadd.f32 %v1900, %v2284
    %v2286 = vpop.f32.mrb[0].mxu0
    %2287 = vmatprep.mubr.f32.mxu0 %v1541
    %2288 = vmatmul.mubr.f32.gmra.mrb[0].mxu0 %v1540
    %v2289 = vpop.f32.mrb[0].mxu0
    %v2290 = vadd.f32 %v1905, %v2289
    %v2291 = vpop.f32.mrb[0].mxu0
    %2292 = vmatprep.mubr.f32.mxu0 %v1545
    %2293 = vmatmul.mubr.f32.gmra.mrb[0].mxu0 %v1544
    %v2294 = vpop.f32.mrb[0].mxu0
    %v2295 = vadd.f32 %v1910, %v2294
    %v2296 = vpop.f32.mrb[0].mxu0
    %2297 = vmatprep.mubr.f32.mxu0 %v1549
    %2298 = vmatmul.mubr.f32.gmra.mrb[0].mxu0 %v1548
    %v2299 = vpop.f32.mrb[0].mxu0
    %v2300 = vadd.f32 %v1915, %v2299
    %v2301 = vpop.f32.mrb[0].mxu0
    %2302 = vmatprep.mubr.f32.mxu0 %v1553
    %2303 = vmatmul.mubr.f32.gmra.mrb[0].mxu0 %v1552
    %v2304 = vpop.f32.mrb[0].mxu0
    %v2305 = vadd.f32 %v1920, %v2304
    %v2306 = vpop.f32.mrb[0].mxu0
    %2307 = vmatprep.mubr.f32.mxu0 %v1557
    %2308 = vmatmul.mubr.f32.gmra.mrb[0].mxu0 %v1556
    %v2309 = vpop.f32.mrb[0].mxu0
    %v2310 = vadd.f32 %v1925, %v2309
    %v2311 = vpop.f32.mrb[0].mxu0
    %2312 = vmatprep.mubr.f32.mxu0 %v1561
    %2313 = vmatmul.mubr.f32.gmra.mrb[0].mxu0 %v1560
    %v2314 = vpop.f32.mrb[0].mxu0
    %v2315 = vadd.f32 %v1930, %v2314
    %v2316 = vpop.f32.mrb[0].mxu0
    %2317 = vmatprep.mubr.f32.mxu0 %v1565
    %2318 = vmatmul.mubr.f32.gmra.mrb[0].mxu0 %v1564
    %v2319 = vpop.f32.mrb[0].mxu0
    %v2320 = vadd.f32 %v1935, %v2319
    %v2321 = vpop.f32.mrb[0].mxu0
    %2322 = vmatprep.mubr.f32.mxu0 %v1569
    %2323 = vmatmul.mubr.f32.gmra.mrb[0].mxu0 %v1568
    %v2324 = vpop.f32.mrb[0].mxu0
    %v2325 = vadd.f32 %v1940, %v2324
    %v2326 = vpop.f32.mrb[0].mxu0
    %2327 = vmatprep.mubr.f32.mxu0 %v1573
    %2328 = vmatmul.mubr.f32.gmra.mrb[0].mxu0 %v1572
    %v2329 = vpop.f32.mrb[0].mxu0
    %v2330 = vadd.f32 %v1945, %v2329
    %v2331 = vpop.f32.mrb[0].mxu0
    %2332 = vmatprep.mubr.f32.mxu0 %v1577
    %2333 = vmatmul.mubr.f32.gmra.mrb[0].mxu0 %v1576
    %v2334 = vpop.f32.mrb[0].mxu0
    %v2335 = vadd.f32 %v1950, %v2334
    %v2336 = vpop.f32.mrb[0].mxu0
    %2337 = vmatprep.mubr.f32.mxu0 %v1581
    %2338 = vmatmul.mubr.f32.gmra.mrb[0].mxu0 %v1580
    %v2339 = vpop.f32.mrb[0].mxu0
    %v2340 = vadd.f32 %v1955, %v2339
    %v2341 = vpop.f32.mrb[0].mxu0
    %2342 = vmatprep.mubr.f32.mxu0 %v1585
    %2343 = vmatmul.mubr.f32.gmra.mrb[0].mxu0 %v1584
    %v2344 = vpop.f32.mrb[0].mxu0
    %v2345 = vadd.f32 %v1960, %v2344
    %v2346 = vpop.f32.mrb[0].mxu0
    %2347 = vmatprep.mubr.f32.mxu0 %v1589
    %2348 = vmatmul.mubr.f32.gmra.mrb[0].mxu0 %v1588
    %v2349 = vpop.f32.mrb[0].mxu0
    %v2350 = vadd.f32 %v1965, %v2349
    %v2351 = vpop.f32.mrb[0].mxu0
    %2352 = vmatprep.mubr.f32.mxu0 %v1593
    %2353 = vmatmul.mubr.f32.gmra.mrb[0].mxu0 %v1592
    %v2354 = vpop.f32.mrb[0].mxu0
    %v2355 = vadd.f32 %v1970, %v2354
    %v2356 = vpop.f32.mrb[0].mxu0
    %2357 = vmatprep.mubr.f32.mxu0 %v1597
    %2358 = vmatmul.mubr.f32.gmra.mrb[0].mxu0 %v1596
    %v2359 = vpop.f32.mrb[0].mxu0
    %v2360 = vadd.f32 %v1975, %v2359
    %v2361 = vpop.f32.mrb[0].mxu0
    %2362 = vmatprep.mubr.f32.mxu0 %v1601
    %2363 = vmatmul.mubr.f32.gmra.mrb[0].mxu0 %v1600
    %v2364 = vpop.f32.mrb[0].mxu0
    %v2365 = vadd.f32 %v1980, %v2364
    %v2366 = vpop.f32.mrb[0].mxu0
    %2367 = vmatprep.mubr.f32.mxu0 %v1605
    %2368 = vmatmul.mubr.f32.gmra.mrb[0].mxu0 %v1604
    %v2369 = vpop.f32.mrb[0].mxu0
    %v2370 = vadd.f32 %v1985, %v2369
    %v2371 = vpop.f32.mrb[0].mxu0
    %2372 = vmatprep.mubr.f32.mxu0 %v1609
    %2373 = vmatmul.mubr.f32.gmra.mrb[0].mxu0 %v1608
    %v2374 = vpop.f32.mrb[0].mxu0
    %v2375 = vadd.f32 %v1990, %v2374
    %v2376 = vpop.f32.mrb[0].mxu0
    %2377 = vmatprep.mubr.f32.mxu0 %v1613
    %2378 = vmatmul.mubr.f32.gmra.mrb[0].mxu0 %v1612
    %v2379 = vpop.f32.mrb[0].mxu0
    %v2380 = vadd.f32 %v1995, %v2379
    %v2381 = vpop.f32.mrb[0].mxu0
    %2382 = vmatprep.mubr.f32.mxu0 %v1617
    %2383 = vmatmul.mubr.f32.gmra.mrb[0].mxu0 %v1616
    %v2384 = vpop.f32.mrb[0].mxu0
    %v2385 = vadd.f32 %v2000, %v2384
    %v2386 = vpop.f32.mrb[0].mxu0
    %2387 = vdwg.mxu0
    %v2388 = vld [vmem:[%s1] sm:$0xff]
    %v2389 = vld [vmem:[%s1 + $0x8] sm:$0xff]
    %v2390 = vld [vmem:[%s1 + $0x10] sm:$0xff]
    %v2391 = vld [vmem:[%s1 + $0x18] sm:$0xff]
    %v2392 = vld [vmem:[%s1 + $0x20] sm:$0xff]
    %v2393 = vld [vmem:[%s1 + $0x28] sm:$0xff]
    %v2394 = vld [vmem:[%s1 + $0x30] sm:$0xff]
    %v2395 = vld [vmem:[%s1 + $0x38] sm:$0xff]
    %v2396 = vld [vmem:[%s1 + $0x40] sm:$0xff]
    %v2397 = vld [vmem:[%s1 + $0x48] sm:$0xff]
    %v2398 = vld [vmem:[%s1 + $0x50] sm:$0xff]
    %v2399 = vld [vmem:[%s1 + $0x58] sm:$0xff]
    %v2400 = vld [vmem:[%s1 + $0x60] sm:$0xff]
    %v2401 = vld [vmem:[%s1 + $0x68] sm:$0xff]
    %v2402 = vld [vmem:[%s1 + $0x70] sm:$0xff]
    %v2403 = vld [vmem:[%s1 + $0x78] sm:$0xff]
    %v2404 = vld [vmem:[%s1 + $0x80] sm:$0xff]
    %v2405 = vld [vmem:[%s1 + $0x88] sm:$0xff]
    %v2406 = vld [vmem:[%s1 + $0x90] sm:$0xff]
    %v2407 = vld [vmem:[%s1 + $0x98] sm:$0xff]
    %v2408 = vld [vmem:[%s1 + $0xa0] sm:$0xff]
    %v2409 = vld [vmem:[%s1 + $0xa8] sm:$0xff]
    %v2410 = vld [vmem:[%s1 + $0xb0] sm:$0xff]
    %v2411 = vld [vmem:[%s1 + $0xb8] sm:$0xff]
    %v2412 = vld [vmem:[%s1 + $0xc0] sm:$0xff]
    %v2413 = vld [vmem:[%s1 + $0xc8] sm:$0xff]
    %v2414 = vld [vmem:[%s1 + $0xd0] sm:$0xff]
    %v2415 = vld [vmem:[%s1 + $0xd8] sm:$0xff]
    %v2416 = vld [vmem:[%s1 + $0xe0] sm:$0xff]
    %v2417 = vld [vmem:[%s1 + $0xe8] sm:$0xff]
    %v2418 = vld [vmem:[%s1 + $0xf0] sm:$0xff]
    %v2419 = vld [vmem:[%s1 + $0xf8] sm:$0xff]
    %v2420 = vld [vmem:[%s1 + $0x100] sm:$0xff]
    %v2421 = vld [vmem:[%s1 + $0x108] sm:$0xff]
    %v2422 = vld [vmem:[%s1 + $0x110] sm:$0xff]
    %v2423 = vld [vmem:[%s1 + $0x118] sm:$0xff]
    %v2424 = vld [vmem:[%s1 + $0x120] sm:$0xff]
    %v2425 = vld [vmem:[%s1 + $0x128] sm:$0xff]
    %v2426 = vld [vmem:[%s1 + $0x130] sm:$0xff]
    %v2427 = vld [vmem:[%s1 + $0x138] sm:$0xff]
    %v2428 = vld [vmem:[%s1 + $0x140] sm:$0xff]
    %v2429 = vld [vmem:[%s1 + $0x148] sm:$0xff]
    %v2430 = vld [vmem:[%s1 + $0x150] sm:$0xff]
    %v2431 = vld [vmem:[%s1 + $0x158] sm:$0xff]
    %v2432 = vld [vmem:[%s1 + $0x160] sm:$0xff]
    %v2433 = vld [vmem:[%s1 + $0x168] sm:$0xff]
    %v2434 = vld [vmem:[%s1 + $0x170] sm:$0xff]
    %v2435 = vld [vmem:[%s1 + $0x178] sm:$0xff]
    %v2436 = vld [vmem:[%s1 + $0x180] sm:$0xff]
    %v2437 = vld [vmem:[%s1 + $0x188] sm:$0xff]
    %v2438 = vld [vmem:[%s1 + $0x190] sm:$0xff]
    %v2439 = vld [vmem:[%s1 + $0x198] sm:$0xff]
    %v2440 = vld [vmem:[%s1 + $0x1a0] sm:$0xff]
    %v2441 = vld [vmem:[%s1 + $0x1a8] sm:$0xff]
    %v2442 = vld [vmem:[%s1 + $0x1b0] sm:$0xff]
    %v2443 = vld [vmem:[%s1 + $0x1b8] sm:$0xff]
    %v2444 = vld [vmem:[%s1 + $0x1c0] sm:$0xff]
    %v2445 = vld [vmem:[%s1 + $0x1c8] sm:$0xff]
    %v2446 = vld [vmem:[%s1 + $0x1d0] sm:$0xff]
    %v2447 = vld [vmem:[%s1 + $0x1d8] sm:$0xff]
    %v2448 = vld [vmem:[%s1 + $0x1e0] sm:$0xff]
    %v2449 = vld [vmem:[%s1 + $0x1e8] sm:$0xff]
    %v2450 = vld [vmem:[%s1 + $0x1f0] sm:$0xff]
    %v2451 = vld [vmem:[%s1 + $0x1f8] sm:$0xff]
    %v2452 = vmul.f32 %v2070, %v2388
    %v2453 = vmul.f32 %v2075, %v2389
    %v2454 = vmul.f32 %v2080, %v2390
    %v2455 = vmul.f32 %v2085, %v2391
    %v2456 = vmul.f32 %v2090, %v2392
    %v2457 = vmul.f32 %v2095, %v2393
    %v2458 = vmul.f32 %v2100, %v2394
    %v2459 = vmul.f32 %v2105, %v2395
    %v2460 = vmul.f32 %v2110, %v2396
    %v2461 = vmul.f32 %v2115, %v2397
    %v2462 = vmul.f32 %v2120, %v2398
    %v2463 = vmul.f32 %v2125, %v2399
    %v2464 = vmul.f32 %v2130, %v2400
    %v2465 = vmul.f32 %v2135, %v2401
    %v2466 = vmul.f32 %v2140, %v2402
    %v2467 = vmul.f32 %v2145, %v2403
    %v2468 = vmul.f32 %v2150, %v2404
    %v2469 = vmul.f32 %v2155, %v2405
    %v2470 = vmul.f32 %v2160, %v2406
    %v2471 = vmul.f32 %v2165, %v2407
    %v2472 = vmul.f32 %v2170, %v2408
    %v2473 = vmul.f32 %v2175, %v2409
    %v2474 = vmul.f32 %v2180, %v2410
    %v2475 = vmul.f32 %v2185, %v2411
    %v2476 = vmul.f32 %v2190, %v2412
    %v2477 = vmul.f32 %v2195, %v2413
    %v2478 = vmul.f32 %v2200, %v2414
    %v2479 = vmul.f32 %v2205, %v2415
    %v2480 = vmul.f32 %v2210, %v2416
    %v2481 = vmul.f32 %v2215, %v2417
    %v2482 = vmul.f32 %v2220, %v2418
    %v2483 = vmul.f32 %v2225, %v2419
    %v2484 = vmul.f32 %v2230, %v2420
    %v2485 = vmul.f32 %v2235, %v2421
    %v2486 = vmul.f32 %v2240, %v2422
    %v2487 = vmul.f32 %v2245, %v2423
    %v2488 = vmul.f32 %v2250, %v2424
    %v2489 = vmul.f32 %v2255, %v2425
    %v2490 = vmul.f32 %v2260, %v2426
    %v2491 = vmul.f32 %v2265, %v2427
    %v2492 = vmul.f32 %v2270, %v2428
    %v2493 = vmul.f32 %v2275, %v2429
    %v2494 = vmul.f32 %v2280, %v2430
    %v2495 = vmul.f32 %v2285, %v2431
    %v2496 = vmul.f32 %v2290, %v2432
    %v2497 = vmul.f32 %v2295, %v2433
    %v2498 = vmul.f32 %v2300, %v2434
    %v2499 = vmul.f32 %v2305, %v2435
    %v2500 = vmul.f32 %v2310, %v2436
    %v2501 = vmul.f32 %v2315, %v2437
    %v2502 = vmul.f32 %v2320, %v2438
    %v2503 = vmul.f32 %v2325, %v2439
    %v2504 = vmul.f32 %v2330, %v2440
    %v2505 = vmul.f32 %v2335, %v2441
    %v2506 = vmul.f32 %v2340, %v2442
    %v2507 = vmul.f32 %v2345, %v2443
    %v2508 = vmul.f32 %v2350, %v2444
    %v2509 = vmul.f32 %v2355, %v2445
    %v2510 = vmul.f32 %v2360, %v2446
    %v2511 = vmul.f32 %v2365, %v2447
    %v2512 = vmul.f32 %v2370, %v2448
    %v2513 = vmul.f32 %v2375, %v2449
    %v2514 = vmul.f32 %v2380, %v2450
    %v2515 = vmul.f32 %v2385, %v2451
    %vm2516 = vcmask 7168
    %2517 = vst.msk [vmem:[%s6] sm:$0xff] %vm2516, %v2452
    %2518 = vst.msk [vmem:[%s6 + $0x8] sm:$0xff] %vm2516, %v2453
    %2519 = vst.msk [vmem:[%s6 + $0x10] sm:$0xff] %vm2516, %v2454
    %2520 = vst.msk [vmem:[%s6 + $0x18] sm:$0xff] %vm2516, %v2455
    %2521 = vst.msk [vmem:[%s6 + $0x20] sm:$0xff] %vm2516, %v2456
    %2522 = vst.msk [vmem:[%s6 + $0x28] sm:$0xff] %vm2516, %v2457
    %2523 = vst.msk [vmem:[%s6 + $0x30] sm:$0xff] %vm2516, %v2458
    %2524 = vst.msk [vmem:[%s6 + $0x38] sm:$0xff] %vm2516, %v2459
    %2525 = vst.msk [vmem:[%s6 + $0x40] sm:$0xff] %vm2516, %v2460
    %2526 = vst.msk [vmem:[%s6 + $0x48] sm:$0xff] %vm2516, %v2461
    %2527 = vst.msk [vmem:[%s6 + $0x50] sm:$0xff] %vm2516, %v2462
    %2528 = vst.msk [vmem:[%s6 + $0x58] sm:$0xff] %vm2516, %v2463
    %2529 = vst.msk [vmem:[%s6 + $0x60] sm:$0xff] %vm2516, %v2464
    %2530 = vst.msk [vmem:[%s6 + $0x68] sm:$0xff] %vm2516, %v2465
    %2531 = vst.msk [vmem:[%s6 + $0x70] sm:$0xff] %vm2516, %v2466
    %2532 = vst.msk [vmem:[%s6 + $0x78] sm:$0xff] %vm2516, %v2467
    %2533 = vst.msk [vmem:[%s6 + $0x80] sm:$0xff] %vm2516, %v2468
    %2534 = vst.msk [vmem:[%s6 + $0x88] sm:$0xff] %vm2516, %v2469
    %2535 = vst.msk [vmem:[%s6 + $0x90] sm:$0xff] %vm2516, %v2470
    %2536 = vst.msk [vmem:[%s6 + $0x98] sm:$0xff] %vm2516, %v2471
    %2537 = vst.msk [vmem:[%s6 + $0xa0] sm:$0xff] %vm2516, %v2472
    %2538 = vst.msk [vmem:[%s6 + $0xa8] sm:$0xff] %vm2516, %v2473
    %2539 = vst.msk [vmem:[%s6 + $0xb0] sm:$0xff] %vm2516, %v2474
    %2540 = vst.msk [vmem:[%s6 + $0xb8] sm:$0xff] %vm2516, %v2475
    %2541 = vst.msk [vmem:[%s6 + $0xc0] sm:$0xff] %vm2516, %v2476
    %2542 = vst.msk [vmem:[%s6 + $0xc8] sm:$0xff] %vm2516, %v2477
    %2543 = vst.msk [vmem:[%s6 + $0xd0] sm:$0xff] %vm2516, %v2478
    %2544 = vst.msk [vmem:[%s6 + $0xd8] sm:$0xff] %vm2516, %v2479
    %2545 = vst.msk [vmem:[%s6 + $0xe0] sm:$0xff] %vm2516, %v2480
    %2546 = vst.msk [vmem:[%s6 + $0xe8] sm:$0xff] %vm2516, %v2481
    %2547 = vst.msk [vmem:[%s6 + $0xf0] sm:$0xff] %vm2516, %v2482
    %2548 = vst.msk [vmem:[%s6 + $0xf8] sm:$0xff] %vm2516, %v2483
    %2549 = vst.msk [vmem:[%s6 + $0x100] sm:$0xff] %vm2516, %v2484
    %2550 = vst.msk [vmem:[%s6 + $0x108] sm:$0xff] %vm2516, %v2485
    %2551 = vst.msk [vmem:[%s6 + $0x110] sm:$0xff] %vm2516, %v2486
    %2552 = vst.msk [vmem:[%s6 + $0x118] sm:$0xff] %vm2516, %v2487
    %2553 = vst.msk [vmem:[%s6 + $0x120] sm:$0xff] %vm2516, %v2488
    %2554 = vst.msk [vmem:[%s6 + $0x128] sm:$0xff] %vm2516, %v2489
    %2555 = vst.msk [vmem:[%s6 + $0x130] sm:$0xff] %vm2516, %v2490
    %2556 = vst.msk [vmem:[%s6 + $0x138] sm:$0xff] %vm2516, %v2491
    %2557 = vst.msk [vmem:[%s6 + $0x140] sm:$0xff] %vm2516, %v2492
    %2558 = vst.msk [vmem:[%s6 + $0x148] sm:$0xff] %vm2516, %v2493
    %2559 = vst.msk [vmem:[%s6 + $0x150] sm:$0xff] %vm2516, %v2494
    %2560 = vst.msk [vmem:[%s6 + $0x158] sm:$0xff] %vm2516, %v2495
    %2561 = vst.msk [vmem:[%s6 + $0x160] sm:$0xff] %vm2516, %v2496
    %2562 = vst.msk [vmem:[%s6 + $0x168] sm:$0xff] %vm2516, %v2497
    %2563 = vst.msk [vmem:[%s6 + $0x170] sm:$0xff] %vm2516, %v2498
    %2564 = vst.msk [vmem:[%s6 + $0x178] sm:$0xff] %vm2516, %v2499
    %2565 = vst.msk [vmem:[%s6 + $0x180] sm:$0xff] %vm2516, %v2500
    %2566 = vst.msk [vmem:[%s6 + $0x188] sm:$0xff] %vm2516, %v2501
    %2567 = vst.msk [vmem:[%s6 + $0x190] sm:$0xff] %vm2516, %v2502
    %2568 = vst.msk [vmem:[%s6 + $0x198] sm:$0xff] %vm2516, %v2503
    %2569 = vst.msk [vmem:[%s6 + $0x1a0] sm:$0xff] %vm2516, %v2504
    %2570 = vst.msk [vmem:[%s6 + $0x1a8] sm:$0xff] %vm2516, %v2505
    %2571 = vst.msk [vmem:[%s6 + $0x1b0] sm:$0xff] %vm2516, %v2506
    %2572 = vst.msk [vmem:[%s6 + $0x1b8] sm:$0xff] %vm2516, %v2507
    %2573 = vst.msk [vmem:[%s6 + $0x1c0] sm:$0xff] %vm2516, %v2508
    %2574 = vst.msk [vmem:[%s6 + $0x1c8] sm:$0xff] %vm2516, %v2509
    %2575 = vst.msk [vmem:[%s6 + $0x1d0] sm:$0xff] %vm2516, %v2510
    %2576 = vst.msk [vmem:[%s6 + $0x1d8] sm:$0xff] %vm2516, %v2511
    %2577 = vst.msk [vmem:[%s6 + $0x1e0] sm:$0xff] %vm2516, %v2512
    %2578 = vst.msk [vmem:[%s6 + $0x1e8] sm:$0xff] %vm2516, %v2513
    %2579 = vst.msk [vmem:[%s6 + $0x1f0] sm:$0xff] %vm2516, %v2514
    %2580 = vst.msk [vmem:[%s6 + $0x1f8] sm:$0xff] %vm2516, %v2515
    %v2581 = vld [vmem:[#allocation6] sm:$0xff]
    %v2582 = vld [vmem:[#allocation6 + $0x8] sm:$0xff]
    %v2583 = vld [vmem:[#allocation6 + $0x10] sm:$0xff]
    %v2584 = vld [vmem:[#allocation6 + $0x18] sm:$0xff]
    %v2585 = vld [vmem:[#allocation6 + $0x20] sm:$0xff]
    %v2586 = vld [vmem:[#allocation6 + $0x28] sm:$0xff]
    %v2587 = vld [vmem:[#allocation6 + $0x30] sm:$0xff]
    %v2588 = vld [vmem:[#allocation6 + $0x38] sm:$0xff]
    %v2589 = vld [vmem:[#allocation6 + $0x40] sm:$0xff]
    %v2590 = vld [vmem:[#allocation6 + $0x48] sm:$0xff]
    %v2591 = vld [vmem:[#allocation6 + $0x50] sm:$0xff]
    %v2592 = vld [vmem:[#allocation6 + $0x58] sm:$0xff]
    %v2593 = vld [vmem:[#allocation6 + $0x60] sm:$0xff]
    %v2594 = vld [vmem:[#allocation6 + $0x68] sm:$0xff]
    %v2595 = vld [vmem:[#allocation6 + $0x70] sm:$0xff]
    %v2596 = vld [vmem:[#allocation6 + $0x78] sm:$0xff]
    %v2597 = vld [vmem:[#allocation6 + $0x80] sm:$0xff]
    %v2598 = vld [vmem:[#allocation6 + $0x88] sm:$0xff]
    %v2599 = vld [vmem:[#allocation6 + $0x90] sm:$0xff]
    %v2600 = vld [vmem:[#allocation6 + $0x98] sm:$0xff]
    %v2601 = vld [vmem:[#allocation6 + $0xa0] sm:$0xff]
    %v2602 = vld [vmem:[#allocation6 + $0xa8] sm:$0xff]
    %v2603 = vld [vmem:[#allocation6 + $0xb0] sm:$0xff]
    %v2604 = vld [vmem:[#allocation6 + $0xb8] sm:$0xff]
    %v2605 = vld [vmem:[#allocation6 + $0xc0] sm:$0xff]
    %v2606 = vld [vmem:[#allocation6 + $0xc8] sm:$0xff]
    %v2607 = vld [vmem:[#allocation6 + $0xd0] sm:$0xff]
    %v2608 = vld [vmem:[#allocation6 + $0xd8] sm:$0xff]
    %v2609 = vld [vmem:[#allocation6 + $0xe0] sm:$0xff]
    %v2610 = vld [vmem:[#allocation6 + $0xe8] sm:$0xff]
    %v2611 = vld [vmem:[#allocation6 + $0xf0] sm:$0xff]
    %v2612 = vld [vmem:[#allocation6 + $0xf8] sm:$0xff]
    %v2613 = vld [vmem:[#allocation6 + $0x100] sm:$0xff]
    %v2614 = vld [vmem:[#allocation6 + $0x108] sm:$0xff]
    %v2615 = vld [vmem:[#allocation6 + $0x110] sm:$0xff]
    %v2616 = vld [vmem:[#allocation6 + $0x118] sm:$0xff]
    %v2617 = vld [vmem:[#allocation6 + $0x120] sm:$0xff]
    %v2618 = vld [vmem:[#allocation6 + $0x128] sm:$0xff]
    %v2619 = vld [vmem:[#allocation6 + $0x130] sm:$0xff]
    %v2620 = vld [vmem:[#allocation6 + $0x138] sm:$0xff]
    %v2621 = vld [vmem:[#allocation6 + $0x140] sm:$0xff]
    %v2622 = vld [vmem:[#allocation6 + $0x148] sm:$0xff]
    %v2623 = vld [vmem:[#allocation6 + $0x150] sm:$0xff]
    %v2624 = vld [vmem:[#allocation6 + $0x158] sm:$0xff]
    %v2625 = vld [vmem:[#allocation6 + $0x160] sm:$0xff]
    %v2626 = vld [vmem:[#allocation6 + $0x168] sm:$0xff]
    %v2627 = vld [vmem:[#allocation6 + $0x170] sm:$0xff]
    %v2628 = vld [vmem:[#allocation6 + $0x178] sm:$0xff]
    %v2629 = vld [vmem:[#allocation6 + $0x180] sm:$0xff]
    %v2630 = vld [vmem:[#allocation6 + $0x188] sm:$0xff]
    %v2631 = vld [vmem:[#allocation6 + $0x190] sm:$0xff]
    %v2632 = vld [vmem:[#allocation6 + $0x198] sm:$0xff]
    %v2633 = vld [vmem:[#allocation6 + $0x1a0] sm:$0xff]
    %v2634 = vld [vmem:[#allocation6 + $0x1a8] sm:$0xff]
    %v2635 = vld [vmem:[#allocation6 + $0x1b0] sm:$0xff]
    %v2636 = vld [vmem:[#allocation6 + $0x1b8] sm:$0xff]
    %v2637 = vld [vmem:[#allocation6 + $0x1c0] sm:$0xff]
    %v2638 = vld [vmem:[#allocation6 + $0x1c8] sm:$0xff]
    %v2639 = vld [vmem:[#allocation6 + $0x1d0] sm:$0xff]
    %v2640 = vld [vmem:[#allocation6 + $0x1d8] sm:$0xff]
    %v2641 = vld [vmem:[#allocation6 + $0x1e0] sm:$0xff]
    %v2642 = vld [vmem:[#allocation6 + $0x1e8] sm:$0xff]
    %v2643 = vld [vmem:[#allocation6 + $0x1f0] sm:$0xff]
    %v2644 = vld [vmem:[#allocation6 + $0x1f8] sm:$0xff]
    %v2645 = vld [vmem:[#allocation6 + $0x200] sm:$0xff]
    %v2646 = vld [vmem:[#allocation6 + $0x208] sm:$0xff]
    %v2647 = vld [vmem:[#allocation6 + $0x210] sm:$0xff]
    %v2648 = vld [vmem:[#allocation6 + $0x218] sm:$0xff]
    %v2649 = vld [vmem:[#allocation6 + $0x220] sm:$0xff]
    %v2650 = vld [vmem:[#allocation6 + $0x228] sm:$0xff]
    %v2651 = vld [vmem:[#allocation6 + $0x230] sm:$0xff]
    %v2652 = vld [vmem:[#allocation6 + $0x238] sm:$0xff]
    %v2653 = vld [vmem:[#allocation6 + $0x240] sm:$0xff]
    %v2654 = vld [vmem:[#allocation6 + $0x248] sm:$0xff]
    %v2655 = vld [vmem:[#allocation6 + $0x250] sm:$0xff]
    %v2656 = vld [vmem:[#allocation6 + $0x258] sm:$0xff]
    %v2657 = vld [vmem:[#allocation6 + $0x260] sm:$0xff]
    %v2658 = vld [vmem:[#allocation6 + $0x268] sm:$0xff]
    %v2659 = vld [vmem:[#allocation6 + $0x270] sm:$0xff]
    %v2660 = vld [vmem:[#allocation6 + $0x278] sm:$0xff]
    %v2661 = vld [vmem:[#allocation6 + $0x280] sm:$0xff]
    %v2662 = vld [vmem:[#allocation6 + $0x288] sm:$0xff]
    %v2663 = vld [vmem:[#allocation6 + $0x290] sm:$0xff]
    %v2664 = vld [vmem:[#allocation6 + $0x298] sm:$0xff]
    %v2665 = vld [vmem:[#allocation6 + $0x2a0] sm:$0xff]
    %v2666 = vld [vmem:[#allocation6 + $0x2a8] sm:$0xff]
    %v2667 = vld [vmem:[#allocation6 + $0x2b0] sm:$0xff]
    %v2668 = vld [vmem:[#allocation6 + $0x2b8] sm:$0xff]
    %v2669 = vld [vmem:[#allocation6 + $0x2c0] sm:$0xff]
    %v2670 = vld [vmem:[#allocation6 + $0x2c8] sm:$0xff]
    %v2671 = vld [vmem:[#allocation6 + $0x2d0] sm:$0xff]
    %v2672 = vld [vmem:[#allocation6 + $0x2d8] sm:$0xff]
    %v2673 = vld [vmem:[#allocation6 + $0x2e0] sm:$0xff]
    %v2674 = vld [vmem:[#allocation6 + $0x2e8] sm:$0xff]
    %v2675 = vld [vmem:[#allocation6 + $0x2f0] sm:$0xff]
    %v2676 = vld [vmem:[#allocation6 + $0x2f8] sm:$0xff]
    %v2677 = vld [vmem:[#allocation6 + $0x300] sm:$0xff]
    %v2678 = vld [vmem:[#allocation6 + $0x308] sm:$0xff]
    %v2679 = vld [vmem:[#allocation6 + $0x310] sm:$0xff]
    %v2680 = vld [vmem:[#allocation6 + $0x318] sm:$0xff]
    %v2681 = vld [vmem:[#allocation6 + $0x320] sm:$0xff]
    %v2682 = vld [vmem:[#allocation6 + $0x328] sm:$0xff]
    %v2683 = vld [vmem:[#allocation6 + $0x330] sm:$0xff]
    %v2684 = vld [vmem:[#allocation6 + $0x338] sm:$0xff]
    %v2685 = vld [vmem:[#allocation6 + $0x340] sm:$0xff]
    %v2686 = vld [vmem:[#allocation6 + $0x348] sm:$0xff]
    %v2687 = vld [vmem:[#allocation6 + $0x350] sm:$0xff]
    %v2688 = vld [vmem:[#allocation6 + $0x358] sm:$0xff]
    %v2689 = vld [vmem:[#allocation6 + $0x360] sm:$0xff]
    %v2690 = vld [vmem:[#allocation6 + $0x368] sm:$0xff]
    %v2691 = vld [vmem:[#allocation6 + $0x370] sm:$0xff]
    %v2692 = vld [vmem:[#allocation6 + $0x378] sm:$0xff]
    %v2693 = vld [vmem:[#allocation6 + $0x380] sm:$0xff]
    %v2694 = vld [vmem:[#allocation6 + $0x388] sm:$0xff]
    %v2695 = vld [vmem:[#allocation6 + $0x390] sm:$0xff]
    %v2696 = vld [vmem:[#allocation6 + $0x398] sm:$0xff]
    %v2697 = vld [vmem:[#allocation6 + $0x3a0] sm:$0xff]
    %v2698 = vld [vmem:[#allocation6 + $0x3a8] sm:$0xff]
    %v2699 = vld [vmem:[#allocation6 + $0x3b0] sm:$0xff]
    %v2700 = vld [vmem:[#allocation6 + $0x3b8] sm:$0xff]
    %v2701 = vld [vmem:[#allocation6 + $0x3c0] sm:$0xff]
    %v2702 = vld [vmem:[#allocation6 + $0x3c8] sm:$0xff]
    %v2703 = vld [vmem:[#allocation6 + $0x3d0] sm:$0xff]
    %v2704 = vld [vmem:[#allocation6 + $0x3d8] sm:$0xff]
    %v2705 = vld [vmem:[#allocation6 + $0x3e0] sm:$0xff]
    %v2706 = vld [vmem:[#allocation6 + $0x3e8] sm:$0xff]
    %v2707 = vld [vmem:[#allocation6 + $0x3f0] sm:$0xff]
    %v2708 = vld [vmem:[#allocation6 + $0x3f8] sm:$0xff]
    %v2709 = vld [vmem:[#allocation6 + $0x400] sm:$0xff]
    %v2710 = vld [vmem:[#allocation6 + $0x408] sm:$0xff]
    %v2711 = vld [vmem:[#allocation6 + $0x410] sm:$0xff]
    %v2712 = vld [vmem:[#allocation6 + $0x418] sm:$0xff]
    %v2713 = vld [vmem:[#allocation6 + $0x420] sm:$0xff]
    %v2714 = vld [vmem:[#allocation6 + $0x428] sm:$0xff]
    %v2715 = vld [vmem:[#allocation6 + $0x430] sm:$0xff]
    %v2716 = vld [vmem:[#allocation6 + $0x438] sm:$0xff]
    %v2717 = vld [vmem:[#allocation6 + $0x440] sm:$0xff]
    %v2718 = vld [vmem:[#allocation6 + $0x448] sm:$0xff]
    %v2719 = vld [vmem:[#allocation6 + $0x450] sm:$0xff]
    %v2720 = vld [vmem:[#allocation6 + $0x458] sm:$0xff]
    %v2721 = vld [vmem:[#allocation6 + $0x460] sm:$0xff]
    %v2722 = vld [vmem:[#allocation6 + $0x468] sm:$0xff]
    %v2723 = vld [vmem:[#allocation6 + $0x470] sm:$0xff]
    %v2724 = vld [vmem:[#allocation6 + $0x478] sm:$0xff]
    %v2725 = vld [vmem:[#allocation6 + $0x480] sm:$0xff]
    %v2726 = vld [vmem:[#allocation6 + $0x488] sm:$0xff]
    %v2727 = vld [vmem:[#allocation6 + $0x490] sm:$0xff]
    %v2728 = vld [vmem:[#allocation6 + $0x498] sm:$0xff]
    %v2729 = vld [vmem:[#allocation6 + $0x4a0] sm:$0xff]
    %v2730 = vld [vmem:[#allocation6 + $0x4a8] sm:$0xff]
    %v2731 = vld [vmem:[#allocation6 + $0x4b0] sm:$0xff]
    %v2732 = vld [vmem:[#allocation6 + $0x4b8] sm:$0xff]
    %v2733 = vld [vmem:[#allocation6 + $0x4c0] sm:$0xff]
    %v2734 = vld [vmem:[#allocation6 + $0x4c8] sm:$0xff]
    %v2735 = vld [vmem:[#allocation6 + $0x4d0] sm:$0xff]
    %v2736 = vld [vmem:[#allocation6 + $0x4d8] sm:$0xff]
    %v2737 = vld [vmem:[#allocation6 + $0x4e0] sm:$0xff]
    %v2738 = vld [vmem:[#allocation6 + $0x4e8] sm:$0xff]
    %v2739 = vld [vmem:[#allocation6 + $0x4f0] sm:$0xff]
    %v2740 = vld [vmem:[#allocation6 + $0x4f8] sm:$0xff]
    %v2741 = vld [vmem:[#allocation6 + $0x500] sm:$0xff]
    %v2742 = vld [vmem:[#allocation6 + $0x508] sm:$0xff]
    %v2743 = vld [vmem:[#allocation6 + $0x510] sm:$0xff]
    %v2744 = vld [vmem:[#allocation6 + $0x518] sm:$0xff]
    %v2745 = vld [vmem:[#allocation6 + $0x520] sm:$0xff]
    %v2746 = vld [vmem:[#allocation6 + $0x528] sm:$0xff]
    %v2747 = vld [vmem:[#allocation6 + $0x530] sm:$0xff]
    %v2748 = vld [vmem:[#allocation6 + $0x538] sm:$0xff]
    %v2749 = vld [vmem:[#allocation6 + $0x540] sm:$0xff]
    %v2750 = vld [vmem:[#allocation6 + $0x548] sm:$0xff]
    %v2751 = vld [vmem:[#allocation6 + $0x550] sm:$0xff]
    %v2752 = vld [vmem:[#allocation6 + $0x558] sm:$0xff]
    %v2753 = vld [vmem:[#allocation6 + $0x560] sm:$0xff]
    %v2754 = vld [vmem:[#allocation6 + $0x568] sm:$0xff]
    %v2755 = vld [vmem:[#allocation6 + $0x570] sm:$0xff]
    %v2756 = vld [vmem:[#allocation6 + $0x578] sm:$0xff]
    %v2757 = vld [vmem:[#allocation6 + $0x580] sm:$0xff]
    %v2758 = vld [vmem:[#allocation6 + $0x588] sm:$0xff]
    %v2759 = vld [vmem:[#allocation6 + $0x590] sm:$0xff]
    %v2760 = vld [vmem:[#allocation6 + $0x598] sm:$0xff]
    %v2761 = vld [vmem:[#allocation6 + $0x5a0] sm:$0xff]
    %v2762 = vld [vmem:[#allocation6 + $0x5a8] sm:$0xff]
    %v2763 = vld [vmem:[#allocation6 + $0x5b0] sm:$0xff]
    %v2764 = vld [vmem:[#allocation6 + $0x5b8] sm:$0xff]
    %v2765 = vld [vmem:[#allocation6 + $0x5c0] sm:$0xff]
    %v2766 = vld [vmem:[#allocation6 + $0x5c8] sm:$0xff]
    %v2767 = vld [vmem:[#allocation6 + $0x5d0] sm:$0xff]
    %v2768 = vld [vmem:[#allocation6 + $0x5d8] sm:$0xff]
    %v2769 = vld [vmem:[#allocation6 + $0x5e0] sm:$0xff]
    %v2770 = vld [vmem:[#allocation6 + $0x5e8] sm:$0xff]
    %v2771 = vld [vmem:[#allocation6 + $0x5f0] sm:$0xff]
    %v2772 = vld [vmem:[#allocation6 + $0x5f8] sm:$0xff]
    %v2773 = vld [vmem:[#allocation6 + $0x600] sm:$0xff]
    %v2774 = vld [vmem:[#allocation6 + $0x608] sm:$0xff]
    %v2775 = vld [vmem:[#allocation6 + $0x610] sm:$0xff]
    %v2776 = vld [vmem:[#allocation6 + $0x618] sm:$0xff]
    %v2777 = vld [vmem:[#allocation6 + $0x620] sm:$0xff]
    %v2778 = vld [vmem:[#allocation6 + $0x628] sm:$0xff]
    %v2779 = vld [vmem:[#allocation6 + $0x630] sm:$0xff]
    %v2780 = vld [vmem:[#allocation6 + $0x638] sm:$0xff]
    %v2781 = vld [vmem:[#allocation6 + $0x640] sm:$0xff]
    %v2782 = vld [vmem:[#allocation6 + $0x648] sm:$0xff]
    %v2783 = vld [vmem:[#allocation6 + $0x650] sm:$0xff]
    %v2784 = vld [vmem:[#allocation6 + $0x658] sm:$0xff]
    %v2785 = vld [vmem:[#allocation6 + $0x660] sm:$0xff]
    %v2786 = vld [vmem:[#allocation6 + $0x668] sm:$0xff]
    %v2787 = vld [vmem:[#allocation6 + $0x670] sm:$0xff]
    %v2788 = vld [vmem:[#allocation6 + $0x678] sm:$0xff]
    %v2789 = vld [vmem:[#allocation6 + $0x680] sm:$0xff]
    %v2790 = vld [vmem:[#allocation6 + $0x688] sm:$0xff]
    %v2791 = vld [vmem:[#allocation6 + $0x690] sm:$0xff]
    %v2792 = vld [vmem:[#allocation6 + $0x698] sm:$0xff]
    %v2793 = vld [vmem:[#allocation6 + $0x6a0] sm:$0xff]
    %v2794 = vld [vmem:[#allocation6 + $0x6a8] sm:$0xff]
    %v2795 = vld [vmem:[#allocation6 + $0x6b0] sm:$0xff]
    %v2796 = vld [vmem:[#allocation6 + $0x6b8] sm:$0xff]
    %v2797 = vld [vmem:[#allocation6 + $0x6c0] sm:$0xff]
    %v2798 = vld [vmem:[#allocation6 + $0x6c8] sm:$0xff]
    %v2799 = vld [vmem:[#allocation6 + $0x6d0] sm:$0xff]
    %v2800 = vld [vmem:[#allocation6 + $0x6d8] sm:$0xff]
    %v2801 = vld [vmem:[#allocation6 + $0x6e0] sm:$0xff]
    %v2802 = vld [vmem:[#allocation6 + $0x6e8] sm:$0xff]
    %v2803 = vld [vmem:[#allocation6 + $0x6f0] sm:$0xff]
    %v2804 = vld [vmem:[#allocation6 + $0x6f8] sm:$0xff]
    %v2805 = vld [vmem:[#allocation6 + $0x700] sm:$0xff]
    %v2806 = vld [vmem:[#allocation6 + $0x708] sm:$0xff]
    %v2807 = vld [vmem:[#allocation6 + $0x710] sm:$0xff]
    %v2808 = vld [vmem:[#allocation6 + $0x718] sm:$0xff]
    %v2809 = vld [vmem:[#allocation6 + $0x720] sm:$0xff]
    %v2810 = vld [vmem:[#allocation6 + $0x728] sm:$0xff]
    %v2811 = vld [vmem:[#allocation6 + $0x730] sm:$0xff]
    %v2812 = vld [vmem:[#allocation6 + $0x738] sm:$0xff]
    %v2813 = vld [vmem:[#allocation6 + $0x740] sm:$0xff]
    %v2814 = vld [vmem:[#allocation6 + $0x748] sm:$0xff]
    %v2815 = vld [vmem:[#allocation6 + $0x750] sm:$0xff]
    %v2816 = vld [vmem:[#allocation6 + $0x758] sm:$0xff]
    %v2817 = vld [vmem:[#allocation6 + $0x760] sm:$0xff]
    %v2818 = vld [vmem:[#allocation6 + $0x768] sm:$0xff]
    %v2819 = vld [vmem:[#allocation6 + $0x770] sm:$0xff]
    %v2820 = vld [vmem:[#allocation6 + $0x778] sm:$0xff]
    %v2821 = vld [vmem:[#allocation6 + $0x780] sm:$0xff]
    %v2822 = vld [vmem:[#allocation6 + $0x788] sm:$0xff]
    %v2823 = vld [vmem:[#allocation6 + $0x790] sm:$0xff]
    %v2824 = vld [vmem:[#allocation6 + $0x798] sm:$0xff]
    %v2825 = vld [vmem:[#allocation6 + $0x7a0] sm:$0xff]
    %v2826 = vld [vmem:[#allocation6 + $0x7a8] sm:$0xff]
    %v2827 = vld [vmem:[#allocation6 + $0x7b0] sm:$0xff]
    %v2828 = vld [vmem:[#allocation6 + $0x7b8] sm:$0xff]
    %v2829 = vld [vmem:[#allocation6 + $0x7c0] sm:$0xff]
    %v2830 = vld [vmem:[#allocation6 + $0x7c8] sm:$0xff]
    %v2831 = vld [vmem:[#allocation6 + $0x7d0] sm:$0xff]
    %v2832 = vld [vmem:[#allocation6 + $0x7d8] sm:$0xff]
    %v2833 = vld [vmem:[#allocation6 + $0x7e0] sm:$0xff]
    %v2834 = vld [vmem:[#allocation6 + $0x7e8] sm:$0xff]
    %v2835 = vld [vmem:[#allocation6 + $0x7f0] sm:$0xff]
    %v2836 = vld [vmem:[#allocation6 + $0x7f8] sm:$0xff]
    %2837 = vmatprep.subr.mxu0 0.0
    %2838 = vmatpush1.msra.mxu0 %v80
    %2839 = vmatprep.subr.mxu0 0.0
    %2840 = vmatpush1.msra.mxu0 %v81
    %2841 = vmatprep.subr.mxu0 0.0
    %2842 = vmatpush1.msra.mxu0 %v82
    %2843 = vmatprep.subr.mxu0 0.0
    %2844 = vmatpush1.msra.mxu0 %v83
    %2845 = vmatprep.subr.mxu0 0.0
    %2846 = vmatpush1.msra.mxu0 %v84
    %2847 = vmatprep.subr.mxu0 0.0
    %2848 = vmatpush1.msra.mxu0 %v85
    %2849 = vmatprep.subr.mxu0 0.0
    %2850 = vmatpush1.msra.mxu0 %v86
    %2851 = vmatprep.subr.mxu0 0.0
    %2852 = vmatpush1.msra.mxu0 %v87
    %2853 = vmatprep.subr.mxu0 0.0
    %2854 = vmatpush1.msra.mxu0 %v88
    %2855 = vmatprep.subr.mxu0 0.0
    %2856 = vmatpush1.msra.mxu0 %v89
    %2857 = vmatprep.subr.mxu0 0.0
    %2858 = vmatpush1.msra.mxu0 %v90
    %2859 = vmatprep.subr.mxu0 0.0
    %2860 = vmatpush1.msra.mxu0 %v91
    %2861 = vmatprep.subr.mxu0 0.0
    %2862 = vmatpush1.msra.mxu0 %v92
    %2863 = vmatprep.subr.mxu0 0.0
    %2864 = vmatpush1.msra.mxu0 %v93
    %2865 = vmatprep.subr.mxu0 0.0
    %2866 = vmatpush1.msra.mxu0 %v94
    %2867 = vmatprep.subr.mxu0 0.0
    %2868 = vmatpush1.msra.mxu0 %v95
    %2869 = vmatprep.subr.mxu0 0.0
    %2870 = vmatpush1.msra.mxu0 %v96
    %2871 = vmatprep.subr.mxu0 0.0
    %2872 = vmatpush1.msra.mxu0 %v97
    %2873 = vmatprep.subr.mxu0 0.0
    %2874 = vmatpush1.msra.mxu0 %v98
    %2875 = vmatprep.subr.mxu0 0.0
    %2876 = vmatpush1.msra.mxu0 %v99
    %2877 = vmatprep.subr.mxu0 0.0
    %2878 = vmatpush1.msra.mxu0 %v100
    %2879 = vmatprep.subr.mxu0 0.0
    %2880 = vmatpush1.msra.mxu0 %v101
    %2881 = vmatprep.subr.mxu0 0.0
    %2882 = vmatpush1.msra.mxu0 %v102
    %2883 = vmatprep.subr.mxu0 0.0
    %2884 = vmatpush1.msra.mxu0 %v103
    %2885 = vmatprep.subr.mxu0 0.0
    %2886 = vmatpush1.msra.mxu0 %v104
    %2887 = vmatprep.subr.mxu0 0.0
    %2888 = vmatpush1.msra.mxu0 %v105
    %2889 = vmatprep.subr.mxu0 0.0
    %2890 = vmatpush1.msra.mxu0 %v106
    %2891 = vmatprep.subr.mxu0 0.0
    %2892 = vmatpush1.msra.mxu0 %v107
    %2893 = vmatprep.subr.mxu0 0.0
    %2894 = vmatpush1.msra.mxu0 %v108
    %2895 = vmatprep.subr.mxu0 0.0
    %2896 = vmatpush1.msra.mxu0 %v109
    %2897 = vmatprep.subr.mxu0 0.0
    %2898 = vmatpush1.msra.mxu0 %v110
    %2899 = vmatprep.subr.mxu0 0.0
    %2900 = vmatpush1.msra.mxu0 %v111
    %2901 = vmatprep.mubr.f32.mxu0 %v2582
    %2902 = vmatmul.mubr.f32.gmra.mrb[0].mxu0 %v2581
    %v2903 = vpop.f32.mrb[0].mxu0
    %v2904 = vadd.f32 0.0, %v2903
    %v2905 = vpop.f32.mrb[0].mxu0
    %2906 = vmatprep.mubr.f32.mxu0 %v2586
    %2907 = vmatmul.mubr.f32.gmra.mrb[0].mxu0 %v2585
    %v2908 = vpop.f32.mrb[0].mxu0
    %v2909 = vadd.f32 0.0, %v2908
    %v2910 = vpop.f32.mrb[0].mxu0
    %2911 = vmatprep.mubr.f32.mxu0 %v2590
    %2912 = vmatmul.mubr.f32.gmra.mrb[0].mxu0 %v2589
    %v2913 = vpop.f32.mrb[0].mxu0
    %v2914 = vadd.f32 0.0, %v2913
    %v2915 = vpop.f32.mrb[0].mxu0
    %2916 = vmatprep.mubr.f32.mxu0 %v2594
    %2917 = vmatmul.mubr.f32.gmra.mrb[0].mxu0 %v2593
    %v2918 = vpop.f32.mrb[0].mxu0
    %v2919 = vadd.f32 0.0, %v2918
    %v2920 = vpop.f32.mrb[0].mxu0
    %2921 = vmatprep.mubr.f32.mxu0 %v2598
    %2922 = vmatmul.mubr.f32.gmra.mrb[0].mxu0 %v2597
    %v2923 = vpop.f32.mrb[0].mxu0
    %v2924 = vadd.f32 0.0, %v2923
    %v2925 = vpop.f32.mrb[0].mxu0
    %2926 = vmatprep.mubr.f32.mxu0 %v2602
    %2927 = vmatmul.mubr.f32.gmra.mrb[0].mxu0 %v2601
    %v2928 = vpop.f32.mrb[0].mxu0
    %v2929 = vadd.f32 0.0, %v2928
    %v2930 = vpop.f32.mrb[0].mxu0
    %2931 = vmatprep.mubr.f32.mxu0 %v2606
    %2932 = vmatmul.mubr.f32.gmra.mrb[0].mxu0 %v2605
    %v2933 = vpop.f32.mrb[0].mxu0
    %v2934 = vadd.f32 0.0, %v2933
    %v2935 = vpop.f32.mrb[0].mxu0
    %2936 = vmatprep.mubr.f32.mxu0 %v2610
    %2937 = vmatmul.mubr.f32.gmra.mrb[0].mxu0 %v2609
    %v2938 = vpop.f32.mrb[0].mxu0
    %v2939 = vadd.f32 0.0, %v2938
    %v2940 = vpop.f32.mrb[0].mxu0
    %2941 = vmatprep.mubr.f32.mxu0 %v2614
    %2942 = vmatmul.mubr.f32.gmra.mrb[0].mxu0 %v2613
    %v2943 = vpop.f32.mrb[0].mxu0
    %v2944 = vadd.f32 0.0, %v2943
    %v2945 = vpop.f32.mrb[0].mxu0
    %2946 = vmatprep.mubr.f32.mxu0 %v2618
    %2947 = vmatmul.mubr.f32.gmra.mrb[0].mxu0 %v2617
    %v2948 = vpop.f32.mrb[0].mxu0
    %v2949 = vadd.f32 0.0, %v2948
    %v2950 = vpop.f32.mrb[0].mxu0
    %2951 = vmatprep.mubr.f32.mxu0 %v2622
    %2952 = vmatmul.mubr.f32.gmra.mrb[0].mxu0 %v2621
    %v2953 = vpop.f32.mrb[0].mxu0
    %v2954 = vadd.f32 0.0, %v2953
    %v2955 = vpop.f32.mrb[0].mxu0
    %2956 = vmatprep.mubr.f32.mxu0 %v2626
    %2957 = vmatmul.mubr.f32.gmra.mrb[0].mxu0 %v2625
    %v2958 = vpop.f32.mrb[0].mxu0
    %v2959 = vadd.f32 0.0, %v2958
    %v2960 = vpop.f32.mrb[0].mxu0
    %2961 = vmatprep.mubr.f32.mxu0 %v2630
    %2962 = vmatmul.mubr.f32.gmra.mrb[0].mxu0 %v2629
    %v2963 = vpop.f32.mrb[0].mxu0
    %v2964 = vadd.f32 0.0, %v2963
    %v2965 = vpop.f32.mrb[0].mxu0
    %2966 = vmatprep.mubr.f32.mxu0 %v2634
    %2967 = vmatmul.mubr.f32.gmra.mrb[0].mxu0 %v2633
    %v2968 = vpop.f32.mrb[0].mxu0
    %v2969 = vadd.f32 0.0, %v2968
    %v2970 = vpop.f32.mrb[0].mxu0
    %2971 = vmatprep.mubr.f32.mxu0 %v2638
    %2972 = vmatmul.mubr.f32.gmra.mrb[0].mxu0 %v2637
    %v2973 = vpop.f32.mrb[0].mxu0
    %v2974 = vadd.f32 0.0, %v2973
    %v2975 = vpop.f32.mrb[0].mxu0
    %2976 = vmatprep.mubr.f32.mxu0 %v2642
    %2977 = vmatmul.mubr.f32.gmra.mrb[0].mxu0 %v2641
    %v2978 = vpop.f32.mrb[0].mxu0
    %v2979 = vadd.f32 0.0, %v2978
    %v2980 = vpop.f32.mrb[0].mxu0
    %2981 = vmatprep.mubr.f32.mxu0 %v2646
    %2982 = vmatmul.mubr.f32.gmra.mrb[0].mxu0 %v2645
    %v2983 = vpop.f32.mrb[0].mxu0
    %v2984 = vadd.f32 0.0, %v2983
    %v2985 = vpop.f32.mrb[0].mxu0
    %2986 = vmatprep.mubr.f32.mxu0 %v2650
    %2987 = vmatmul.mubr.f32.gmra.mrb[0].mxu0 %v2649
    %v2988 = vpop.f32.mrb[0].mxu0
    %v2989 = vadd.f32 0.0, %v2988
    %v2990 = vpop.f32.mrb[0].mxu0
    %2991 = vmatprep.mubr.f32.mxu0 %v2654
    %2992 = vmatmul.mubr.f32.gmra.mrb[0].mxu0 %v2653
    %v2993 = vpop.f32.mrb[0].mxu0
    %v2994 = vadd.f32 0.0, %v2993
    %v2995 = vpop.f32.mrb[0].mxu0
    %2996 = vmatprep.mubr.f32.mxu0 %v2658
    %2997 = vmatmul.mubr.f32.gmra.mrb[0].mxu0 %v2657
    %v2998 = vpop.f32.mrb[0].mxu0
    %v2999 = vadd.f32 0.0, %v2998
    %v3000 = vpop.f32.mrb[0].mxu0
    %3001 = vmatprep.mubr.f32.mxu0 %v2662
    %3002 = vmatmul.mubr.f32.gmra.mrb[0].mxu0 %v2661
    %v3003 = vpop.f32.mrb[0].mxu0
    %v3004 = vadd.f32 0.0, %v3003
    %v3005 = vpop.f32.mrb[0].mxu0
    %3006 = vmatprep.mubr.f32.mxu0 %v2666
    %3007 = vmatmul.mubr.f32.gmra.mrb[0].mxu0 %v2665
    %v3008 = vpop.f32.mrb[0].mxu0
    %v3009 = vadd.f32 0.0, %v3008
    %v3010 = vpop.f32.mrb[0].mxu0
    %3011 = vmatprep.mubr.f32.mxu0 %v2670
    %3012 = vmatmul.mubr.f32.gmra.mrb[0].mxu0 %v2669
    %v3013 = vpop.f32.mrb[0].mxu0
    %v3014 = vadd.f32 0.0, %v3013
    %v3015 = vpop.f32.mrb[0].mxu0
    %3016 = vmatprep.mubr.f32.mxu0 %v2674
    %3017 = vmatmul.mubr.f32.gmra.mrb[0].mxu0 %v2673
    %v3018 = vpop.f32.mrb[0].mxu0
    %v3019 = vadd.f32 0.0, %v3018
    %v3020 = vpop.f32.mrb[0].mxu0
    %3021 = vmatprep.mubr.f32.mxu0 %v2678
    %3022 = vmatmul.mubr.f32.gmra.mrb[0].mxu0 %v2677
    %v3023 = vpop.f32.mrb[0].mxu0
    %v3024 = vadd.f32 0.0, %v3023
    %v3025 = vpop.f32.mrb[0].mxu0
    %3026 = vmatprep.mubr.f32.mxu0 %v2682
    %3027 = vmatmul.mubr.f32.gmra.mrb[0].mxu0 %v2681
    %v3028 = vpop.f32.mrb[0].mxu0
    %v3029 = vadd.f32 0.0, %v3028
    %v3030 = vpop.f32.mrb[0].mxu0
    %3031 = vmatprep.mubr.f32.mxu0 %v2686
    %3032 = vmatmul.mubr.f32.gmra.mrb[0].mxu0 %v2685
    %v3033 = vpop.f32.mrb[0].mxu0
    %v3034 = vadd.f32 0.0, %v3033
    %v3035 = vpop.f32.mrb[0].mxu0
    %3036 = vmatprep.mubr.f32.mxu0 %v2690
    %3037 = vmatmul.mubr.f32.gmra.mrb[0].mxu0 %v2689
    %v3038 = vpop.f32.mrb[0].mxu0
    %v3039 = vadd.f32 0.0, %v3038
    %v3040 = vpop.f32.mrb[0].mxu0
    %3041 = vmatprep.mubr.f32.mxu0 %v2694
    %3042 = vmatmul.mubr.f32.gmra.mrb[0].mxu0 %v2693
    %v3043 = vpop.f32.mrb[0].mxu0
    %v3044 = vadd.f32 0.0, %v3043
    %v3045 = vpop.f32.mrb[0].mxu0
    %3046 = vmatprep.mubr.f32.mxu0 %v2698
    %3047 = vmatmul.mubr.f32.gmra.mrb[0].mxu0 %v2697
    %v3048 = vpop.f32.mrb[0].mxu0
    %v3049 = vadd.f32 0.0, %v3048
    %v3050 = vpop.f32.mrb[0].mxu0
    %3051 = vmatprep.mubr.f32.mxu0 %v2702
    %3052 = vmatmul.mubr.f32.gmra.mrb[0].mxu0 %v2701
    %v3053 = vpop.f32.mrb[0].mxu0
    %v3054 = vadd.f32 0.0, %v3053
    %v3055 = vpop.f32.mrb[0].mxu0
    %3056 = vmatprep.mubr.f32.mxu0 %v2706
    %3057 = vmatmul.mubr.f32.gmra.mrb[0].mxu0 %v2705
    %v3058 = vpop.f32.mrb[0].mxu0
    %v3059 = vadd.f32 0.0, %v3058
    %v3060 = vpop.f32.mrb[0].mxu0
    %3061 = vmatprep.mubr.f32.mxu0 %v2710
    %3062 = vmatmul.mubr.f32.gmra.mrb[0].mxu0 %v2709
    %v3063 = vpop.f32.mrb[0].mxu0
    %v3064 = vadd.f32 0.0, %v3063
    %v3065 = vpop.f32.mrb[0].mxu0
    %3066 = vmatprep.mubr.f32.mxu0 %v2714
    %3067 = vmatmul.mubr.f32.gmra.mrb[0].mxu0 %v2713
    %v3068 = vpop.f32.mrb[0].mxu0
    %v3069 = vadd.f32 0.0, %v3068
    %v3070 = vpop.f32.mrb[0].mxu0
    %3071 = vmatprep.mubr.f32.mxu0 %v2718
    %3072 = vmatmul.mubr.f32.gmra.mrb[0].mxu0 %v2717
    %v3073 = vpop.f32.mrb[0].mxu0
    %v3074 = vadd.f32 0.0, %v3073
    %v3075 = vpop.f32.mrb[0].mxu0
    %3076 = vmatprep.mubr.f32.mxu0 %v2722
    %3077 = vmatmul.mubr.f32.gmra.mrb[0].mxu0 %v2721
    %v3078 = vpop.f32.mrb[0].mxu0
    %v3079 = vadd.f32 0.0, %v3078
    %v3080 = vpop.f32.mrb[0].mxu0
    %3081 = vmatprep.mubr.f32.mxu0 %v2726
    %3082 = vmatmul.mubr.f32.gmra.mrb[0].mxu0 %v2725
    %v3083 = vpop.f32.mrb[0].mxu0
    %v3084 = vadd.f32 0.0, %v3083
    %v3085 = vpop.f32.mrb[0].mxu0
    %3086 = vmatprep.mubr.f32.mxu0 %v2730
    %3087 = vmatmul.mubr.f32.gmra.mrb[0].mxu0 %v2729
    %v3088 = vpop.f32.mrb[0].mxu0
    %v3089 = vadd.f32 0.0, %v3088
    %v3090 = vpop.f32.mrb[0].mxu0
    %3091 = vmatprep.mubr.f32.mxu0 %v2734
    %3092 = vmatmul.mubr.f32.gmra.mrb[0].mxu0 %v2733
    %v3093 = vpop.f32.mrb[0].mxu0
    %v3094 = vadd.f32 0.0, %v3093
    %v3095 = vpop.f32.mrb[0].mxu0
    %3096 = vmatprep.mubr.f32.mxu0 %v2738
    %3097 = vmatmul.mubr.f32.gmra.mrb[0].mxu0 %v2737
    %v3098 = vpop.f32.mrb[0].mxu0
    %v3099 = vadd.f32 0.0, %v3098
    %v3100 = vpop.f32.mrb[0].mxu0
    %3101 = vmatprep.mubr.f32.mxu0 %v2742
    %3102 = vmatmul.mubr.f32.gmra.mrb[0].mxu0 %v2741
    %v3103 = vpop.f32.mrb[0].mxu0
    %v3104 = vadd.f32 0.0, %v3103
    %v3105 = vpop.f32.mrb[0].mxu0
    %3106 = vmatprep.mubr.f32.mxu0 %v2746
    %3107 = vmatmul.mubr.f32.gmra.mrb[0].mxu0 %v2745
    %v3108 = vpop.f32.mrb[0].mxu0
    %v3109 = vadd.f32 0.0, %v3108
    %v3110 = vpop.f32.mrb[0].mxu0
    %3111 = vmatprep.mubr.f32.mxu0 %v2750
    %3112 = vmatmul.mubr.f32.gmra.mrb[0].mxu0 %v2749
    %v3113 = vpop.f32.mrb[0].mxu0
    %v3114 = vadd.f32 0.0, %v3113
    %v3115 = vpop.f32.mrb[0].mxu0
    %3116 = vmatprep.mubr.f32.mxu0 %v2754
    %3117 = vmatmul.mubr.f32.gmra.mrb[0].mxu0 %v2753
    %v3118 = vpop.f32.mrb[0].mxu0
    %v3119 = vadd.f32 0.0, %v3118
    %v3120 = vpop.f32.mrb[0].mxu0
    %3121 = vmatprep.mubr.f32.mxu0 %v2758
    %3122 = vmatmul.mubr.f32.gmra.mrb[0].mxu0 %v2757
    %v3123 = vpop.f32.mrb[0].mxu0
    %v3124 = vadd.f32 0.0, %v3123
    %v3125 = vpop.f32.mrb[0].mxu0
    %3126 = vmatprep.mubr.f32.mxu0 %v2762
    %3127 = vmatmul.mubr.f32.gmra.mrb[0].mxu0 %v2761
    %v3128 = vpop.f32.mrb[0].mxu0
    %v3129 = vadd.f32 0.0, %v3128
    %v3130 = vpop.f32.mrb[0].mxu0
    %3131 = vmatprep.mubr.f32.mxu0 %v2766
    %3132 = vmatmul.mubr.f32.gmra.mrb[0].mxu0 %v2765
    %v3133 = vpop.f32.mrb[0].mxu0
    %v3134 = vadd.f32 0.0, %v3133
    %v3135 = vpop.f32.mrb[0].mxu0
    %3136 = vmatprep.mubr.f32.mxu0 %v2770
    %3137 = vmatmul.mubr.f32.gmra.mrb[0].mxu0 %v2769
    %v3138 = vpop.f32.mrb[0].mxu0
    %v3139 = vadd.f32 0.0, %v3138
    %v3140 = vpop.f32.mrb[0].mxu0
    %3141 = vmatprep.mubr.f32.mxu0 %v2774
    %3142 = vmatmul.mubr.f32.gmra.mrb[0].mxu0 %v2773
    %v3143 = vpop.f32.mrb[0].mxu0
    %v3144 = vadd.f32 0.0, %v3143
    %v3145 = vpop.f32.mrb[0].mxu0
    %3146 = vmatprep.mubr.f32.mxu0 %v2778
    %3147 = vmatmul.mubr.f32.gmra.mrb[0].mxu0 %v2777
    %v3148 = vpop.f32.mrb[0].mxu0
    %v3149 = vadd.f32 0.0, %v3148
    %v3150 = vpop.f32.mrb[0].mxu0
    %3151 = vmatprep.mubr.f32.mxu0 %v2782
    %3152 = vmatmul.mubr.f32.gmra.mrb[0].mxu0 %v2781
    %v3153 = vpop.f32.mrb[0].mxu0
    %v3154 = vadd.f32 0.0, %v3153
    %v3155 = vpop.f32.mrb[0].mxu0
    %3156 = vmatprep.mubr.f32.mxu0 %v2786
    %3157 = vmatmul.mubr.f32.gmra.mrb[0].mxu0 %v2785
    %v3158 = vpop.f32.mrb[0].mxu0
    %v3159 = vadd.f32 0.0, %v3158
    %v3160 = vpop.f32.mrb[0].mxu0
    %3161 = vmatprep.mubr.f32.mxu0 %v2790
    %3162 = vmatmul.mubr.f32.gmra.mrb[0].mxu0 %v2789
    %v3163 = vpop.f32.mrb[0].mxu0
    %v3164 = vadd.f32 0.0, %v3163
    %v3165 = vpop.f32.mrb[0].mxu0
    %3166 = vmatprep.mubr.f32.mxu0 %v2794
    %3167 = vmatmul.mubr.f32.gmra.mrb[0].mxu0 %v2793
    %v3168 = vpop.f32.mrb[0].mxu0
    %v3169 = vadd.f32 0.0, %v3168
    %v3170 = vpop.f32.mrb[0].mxu0
    %3171 = vmatprep.mubr.f32.mxu0 %v2798
    %3172 = vmatmul.mubr.f32.gmra.mrb[0].mxu0 %v2797
    %v3173 = vpop.f32.mrb[0].mxu0
    %v3174 = vadd.f32 0.0, %v3173
    %v3175 = vpop.f32.mrb[0].mxu0
    %3176 = vmatprep.mubr.f32.mxu0 %v2802
    %3177 = vmatmul.mubr.f32.gmra.mrb[0].mxu0 %v2801
    %v3178 = vpop.f32.mrb[0].mxu0
    %v3179 = vadd.f32 0.0, %v3178
    %v3180 = vpop.f32.mrb[0].mxu0
    %3181 = vmatprep.mubr.f32.mxu0 %v2806
    %3182 = vmatmul.mubr.f32.gmra.mrb[0].mxu0 %v2805
    %v3183 = vpop.f32.mrb[0].mxu0
    %v3184 = vadd.f32 0.0, %v3183
    %v3185 = vpop.f32.mrb[0].mxu0
    %3186 = vmatprep.mubr.f32.mxu0 %v2810
    %3187 = vmatmul.mubr.f32.gmra.mrb[0].mxu0 %v2809
    %v3188 = vpop.f32.mrb[0].mxu0
    %v3189 = vadd.f32 0.0, %v3188
    %v3190 = vpop.f32.mrb[0].mxu0
    %3191 = vmatprep.mubr.f32.mxu0 %v2814
    %3192 = vmatmul.mubr.f32.gmra.mrb[0].mxu0 %v2813
    %v3193 = vpop.f32.mrb[0].mxu0
    %v3194 = vadd.f32 0.0, %v3193
    %v3195 = vpop.f32.mrb[0].mxu0
    %3196 = vmatprep.mubr.f32.mxu0 %v2818
    %3197 = vmatmul.mubr.f32.gmra.mrb[0].mxu0 %v2817
    %v3198 = vpop.f32.mrb[0].mxu0
    %v3199 = vadd.f32 0.0, %v3198
    %v3200 = vpop.f32.mrb[0].mxu0
    %3201 = vmatprep.mubr.f32.mxu0 %v2822
    %3202 = vmatmul.mubr.f32.gmra.mrb[0].mxu0 %v2821
    %v3203 = vpop.f32.mrb[0].mxu0
    %v3204 = vadd.f32 0.0, %v3203
    %v3205 = vpop.f32.mrb[0].mxu0
    %3206 = vmatprep.mubr.f32.mxu0 %v2826
    %3207 = vmatmul.mubr.f32.gmra.mrb[0].mxu0 %v2825
    %v3208 = vpop.f32.mrb[0].mxu0
    %v3209 = vadd.f32 0.0, %v3208
    %v3210 = vpop.f32.mrb[0].mxu0
    %3211 = vmatprep.mubr.f32.mxu0 %v2830
    %3212 = vmatmul.mubr.f32.gmra.mrb[0].mxu0 %v2829
    %v3213 = vpop.f32.mrb[0].mxu0
    %v3214 = vadd.f32 0.0, %v3213
    %v3215 = vpop.f32.mrb[0].mxu0
    %3216 = vmatprep.mubr.f32.mxu0 %v2834
    %3217 = vmatmul.mubr.f32.gmra.mrb[0].mxu0 %v2833
    %v3218 = vpop.f32.mrb[0].mxu0
    %v3219 = vadd.f32 0.0, %v3218
    %v3220 = vpop.f32.mrb[0].mxu0
    %3221 = vdwg.mxu0
    %3222 = vmatprep.subr.mxu0 0.0
    %3223 = vmatpush1.msra.mxu0 %v112
    %3224 = vmatprep.subr.mxu0 0.0
    %3225 = vmatpush1.msra.mxu0 %v113
    %3226 = vmatprep.subr.mxu0 0.0
    %3227 = vmatpush1.msra.mxu0 %v114
    %3228 = vmatprep.subr.mxu0 0.0
    %3229 = vmatpush1.msra.mxu0 %v115
    %3230 = vmatprep.subr.mxu0 0.0
    %3231 = vmatpush1.msra.mxu0 %v116
    %3232 = vmatprep.subr.mxu0 0.0
    %3233 = vmatpush1.msra.mxu0 %v117
    %3234 = vmatprep.subr.mxu0 0.0
    %3235 = vmatpush1.msra.mxu0 %v118
    %3236 = vmatprep.subr.mxu0 0.0
    %3237 = vmatpush1.msra.mxu0 %v119
    %3238 = vmatprep.subr.mxu0 0.0
    %3239 = vmatpush1.msra.mxu0 %v120
    %3240 = vmatprep.subr.mxu0 0.0
    %3241 = vmatpush1.msra.mxu0 %v121
    %3242 = vmatprep.subr.mxu0 0.0
    %3243 = vmatpush1.msra.mxu0 %v122
    %3244 = vmatprep.subr.mxu0 0.0
    %3245 = vmatpush1.msra.mxu0 %v123
    %3246 = vmatprep.subr.mxu0 0.0
    %3247 = vmatpush1.msra.mxu0 %v124
    %3248 = vmatprep.subr.mxu0 0.0
    %3249 = vmatpush1.msra.mxu0 %v125
    %3250 = vmatprep.subr.mxu0 0.0
    %3251 = vmatpush1.msra.mxu0 %v126
    %3252 = vmatprep.subr.mxu0 0.0
    %3253 = vmatpush1.msra.mxu0 %v127
    %3254 = vmatprep.subr.mxu0 0.0
    %3255 = vmatpush1.msra.mxu0 %v128
    %3256 = vmatprep.subr.mxu0 0.0
    %3257 = vmatpush1.msra.mxu0 %v129
    %3258 = vmatprep.subr.mxu0 0.0
    %3259 = vmatpush1.msra.mxu0 %v130
    %3260 = vmatprep.subr.mxu0 0.0
    %3261 = vmatpush1.msra.mxu0 %v131
    %3262 = vmatprep.subr.mxu0 0.0
    %3263 = vmatpush1.msra.mxu0 %v132
    %3264 = vmatprep.subr.mxu0 0.0
    %3265 = vmatpush1.msra.mxu0 %v133
    %3266 = vmatprep.subr.mxu0 0.0
    %3267 = vmatpush1.msra.mxu0 %v134
    %3268 = vmatprep.subr.mxu0 0.0
    %3269 = vmatpush1.msra.mxu0 %v135
    %3270 = vmatprep.subr.mxu0 0.0
    %3271 = vmatpush1.msra.mxu0 %v136
    %3272 = vmatprep.subr.mxu0 0.0
    %3273 = vmatpush1.msra.mxu0 %v137
    %3274 = vmatprep.subr.mxu0 0.0
    %3275 = vmatpush1.msra.mxu0 %v138
    %3276 = vmatprep.subr.mxu0 0.0
    %3277 = vmatpush1.msra.mxu0 %v139
    %3278 = vmatprep.subr.mxu0 0.0
    %3279 = vmatpush1.msra.mxu0 %v140
    %3280 = vmatprep.subr.mxu0 0.0
    %3281 = vmatpush1.msra.mxu0 %v141
    %3282 = vmatprep.subr.mxu0 0.0
    %3283 = vmatpush1.msra.mxu0 %v142
    %3284 = vmatprep.subr.mxu0 0.0
    %3285 = vmatpush1.msra.mxu0 %v143
    %3286 = vmatprep.mubr.f32.mxu0 %v2584
    %3287 = vmatmul.mubr.f32.gmra.mrb[0].mxu0 %v2583
    %v3288 = vpop.f32.mrb[0].mxu0
    %v3289 = vadd.f32 %v2904, %v3288
    %v3290 = vpop.f32.mrb[0].mxu0
    %3291 = vmatprep.mubr.f32.mxu0 %v2588
    %3292 = vmatmul.mubr.f32.gmra.mrb[0].mxu0 %v2587
    %v3293 = vpop.f32.mrb[0].mxu0
    %v3294 = vadd.f32 %v2909, %v3293
    %v3295 = vpop.f32.mrb[0].mxu0
    %3296 = vmatprep.mubr.f32.mxu0 %v2592
    %3297 = vmatmul.mubr.f32.gmra.mrb[0].mxu0 %v2591
    %v3298 = vpop.f32.mrb[0].mxu0
    %v3299 = vadd.f32 %v2914, %v3298
    %v3300 = vpop.f32.mrb[0].mxu0
    %3301 = vmatprep.mubr.f32.mxu0 %v2596
    %3302 = vmatmul.mubr.f32.gmra.mrb[0].mxu0 %v2595
    %v3303 = vpop.f32.mrb[0].mxu0
    %v3304 = vadd.f32 %v2919, %v3303
    %v3305 = vpop.f32.mrb[0].mxu0
    %3306 = vmatprep.mubr.f32.mxu0 %v2600
    %3307 = vmatmul.mubr.f32.gmra.mrb[0].mxu0 %v2599
    %v3308 = vpop.f32.mrb[0].mxu0
    %v3309 = vadd.f32 %v2924, %v3308
    %v3310 = vpop.f32.mrb[0].mxu0
    %3311 = vmatprep.mubr.f32.mxu0 %v2604
    %3312 = vmatmul.mubr.f32.gmra.mrb[0].mxu0 %v2603
    %v3313 = vpop.f32.mrb[0].mxu0
    %v3314 = vadd.f32 %v2929, %v3313
    %v3315 = vpop.f32.mrb[0].mxu0
    %3316 = vmatprep.mubr.f32.mxu0 %v2608
    %3317 = vmatmul.mubr.f32.gmra.mrb[0].mxu0 %v2607
    %v3318 = vpop.f32.mrb[0].mxu0
    %v3319 = vadd.f32 %v2934, %v3318
    %v3320 = vpop.f32.mrb[0].mxu0
    %3321 = vmatprep.mubr.f32.mxu0 %v2612
    %3322 = vmatmul.mubr.f32.gmra.mrb[0].mxu0 %v2611
    %v3323 = vpop.f32.mrb[0].mxu0
    %v3324 = vadd.f32 %v2939, %v3323
    %v3325 = vpop.f32.mrb[0].mxu0
    %3326 = vmatprep.mubr.f32.mxu0 %v2616
    %3327 = vmatmul.mubr.f32.gmra.mrb[0].mxu0 %v2615
    %v3328 = vpop.f32.mrb[0].mxu0
    %v3329 = vadd.f32 %v2944, %v3328
    %v3330 = vpop.f32.mrb[0].mxu0
    %3331 = vmatprep.mubr.f32.mxu0 %v2620
    %3332 = vmatmul.mubr.f32.gmra.mrb[0].mxu0 %v2619
    %v3333 = vpop.f32.mrb[0].mxu0
    %v3334 = vadd.f32 %v2949, %v3333
    %v3335 = vpop.f32.mrb[0].mxu0
    %3336 = vmatprep.mubr.f32.mxu0 %v2624
    %3337 = vmatmul.mubr.f32.gmra.mrb[0].mxu0 %v2623
    %v3338 = vpop.f32.mrb[0].mxu0
    %v3339 = vadd.f32 %v2954, %v3338
    %v3340 = vpop.f32.mrb[0].mxu0
    %3341 = vmatprep.mubr.f32.mxu0 %v2628
    %3342 = vmatmul.mubr.f32.gmra.mrb[0].mxu0 %v2627
    %v3343 = vpop.f32.mrb[0].mxu0
    %v3344 = vadd.f32 %v2959, %v3343
    %v3345 = vpop.f32.mrb[0].mxu0
    %3346 = vmatprep.mubr.f32.mxu0 %v2632
    %3347 = vmatmul.mubr.f32.gmra.mrb[0].mxu0 %v2631
    %v3348 = vpop.f32.mrb[0].mxu0
    %v3349 = vadd.f32 %v2964, %v3348
    %v3350 = vpop.f32.mrb[0].mxu0
    %3351 = vmatprep.mubr.f32.mxu0 %v2636
    %3352 = vmatmul.mubr.f32.gmra.mrb[0].mxu0 %v2635
    %v3353 = vpop.f32.mrb[0].mxu0
    %v3354 = vadd.f32 %v2969, %v3353
    %v3355 = vpop.f32.mrb[0].mxu0
    %3356 = vmatprep.mubr.f32.mxu0 %v2640
    %3357 = vmatmul.mubr.f32.gmra.mrb[0].mxu0 %v2639
    %v3358 = vpop.f32.mrb[0].mxu0
    %v3359 = vadd.f32 %v2974, %v3358
    %v3360 = vpop.f32.mrb[0].mxu0
    %3361 = vmatprep.mubr.f32.mxu0 %v2644
    %3362 = vmatmul.mubr.f32.gmra.mrb[0].mxu0 %v2643
    %v3363 = vpop.f32.mrb[0].mxu0
    %v3364 = vadd.f32 %v2979, %v3363
    %v3365 = vpop.f32.mrb[0].mxu0
    %3366 = vmatprep.mubr.f32.mxu0 %v2648
    %3367 = vmatmul.mubr.f32.gmra.mrb[0].mxu0 %v2647
    %v3368 = vpop.f32.mrb[0].mxu0
    %v3369 = vadd.f32 %v2984, %v3368
    %v3370 = vpop.f32.mrb[0].mxu0
    %3371 = vmatprep.mubr.f32.mxu0 %v2652
    %3372 = vmatmul.mubr.f32.gmra.mrb[0].mxu0 %v2651
    %v3373 = vpop.f32.mrb[0].mxu0
    %v3374 = vadd.f32 %v2989, %v3373
    %v3375 = vpop.f32.mrb[0].mxu0
    %3376 = vmatprep.mubr.f32.mxu0 %v2656
    %3377 = vmatmul.mubr.f32.gmra.mrb[0].mxu0 %v2655
    %v3378 = vpop.f32.mrb[0].mxu0
    %v3379 = vadd.f32 %v2994, %v3378
    %v3380 = vpop.f32.mrb[0].mxu0
    %3381 = vmatprep.mubr.f32.mxu0 %v2660
    %3382 = vmatmul.mubr.f32.gmra.mrb[0].mxu0 %v2659
    %v3383 = vpop.f32.mrb[0].mxu0
    %v3384 = vadd.f32 %v2999, %v3383
    %v3385 = vpop.f32.mrb[0].mxu0
    %3386 = vmatprep.mubr.f32.mxu0 %v2664
    %3387 = vmatmul.mubr.f32.gmra.mrb[0].mxu0 %v2663
    %v3388 = vpop.f32.mrb[0].mxu0
    %v3389 = vadd.f32 %v3004, %v3388
    %v3390 = vpop.f32.mrb[0].mxu0
    %3391 = vmatprep.mubr.f32.mxu0 %v2668
    %3392 = vmatmul.mubr.f32.gmra.mrb[0].mxu0 %v2667
    %v3393 = vpop.f32.mrb[0].mxu0
    %v3394 = vadd.f32 %v3009, %v3393
    %v3395 = vpop.f32.mrb[0].mxu0
    %3396 = vmatprep.mubr.f32.mxu0 %v2672
    %3397 = vmatmul.mubr.f32.gmra.mrb[0].mxu0 %v2671
    %v3398 = vpop.f32.mrb[0].mxu0
    %v3399 = vadd.f32 %v3014, %v3398
    %v3400 = vpop.f32.mrb[0].mxu0
    %3401 = vmatprep.mubr.f32.mxu0 %v2676
    %3402 = vmatmul.mubr.f32.gmra.mrb[0].mxu0 %v2675
    %v3403 = vpop.f32.mrb[0].mxu0
    %v3404 = vadd.f32 %v3019, %v3403
    %v3405 = vpop.f32.mrb[0].mxu0
    %3406 = vmatprep.mubr.f32.mxu0 %v2680
    %3407 = vmatmul.mubr.f32.gmra.mrb[0].mxu0 %v2679
    %v3408 = vpop.f32.mrb[0].mxu0
    %v3409 = vadd.f32 %v3024, %v3408
    %v3410 = vpop.f32.mrb[0].mxu0
    %3411 = vmatprep.mubr.f32.mxu0 %v2684
    %3412 = vmatmul.mubr.f32.gmra.mrb[0].mxu0 %v2683
    %v3413 = vpop.f32.mrb[0].mxu0
    %v3414 = vadd.f32 %v3029, %v3413
    %v3415 = vpop.f32.mrb[0].mxu0
    %3416 = vmatprep.mubr.f32.mxu0 %v2688
    %3417 = vmatmul.mubr.f32.gmra.mrb[0].mxu0 %v2687
    %v3418 = vpop.f32.mrb[0].mxu0
    %v3419 = vadd.f32 %v3034, %v3418
    %v3420 = vpop.f32.mrb[0].mxu0
    %3421 = vmatprep.mubr.f32.mxu0 %v2692
    %3422 = vmatmul.mubr.f32.gmra.mrb[0].mxu0 %v2691
    %v3423 = vpop.f32.mrb[0].mxu0
    %v3424 = vadd.f32 %v3039, %v3423
    %v3425 = vpop.f32.mrb[0].mxu0
    %3426 = vmatprep.mubr.f32.mxu0 %v2696
    %3427 = vmatmul.mubr.f32.gmra.mrb[0].mxu0 %v2695
    %v3428 = vpop.f32.mrb[0].mxu0
    %v3429 = vadd.f32 %v3044, %v3428
    %v3430 = vpop.f32.mrb[0].mxu0
    %3431 = vmatprep.mubr.f32.mxu0 %v2700
    %3432 = vmatmul.mubr.f32.gmra.mrb[0].mxu0 %v2699
    %v3433 = vpop.f32.mrb[0].mxu0
    %v3434 = vadd.f32 %v3049, %v3433
    %v3435 = vpop.f32.mrb[0].mxu0
    %3436 = vmatprep.mubr.f32.mxu0 %v2704
    %3437 = vmatmul.mubr.f32.gmra.mrb[0].mxu0 %v2703
    %v3438 = vpop.f32.mrb[0].mxu0
    %v3439 = vadd.f32 %v3054, %v3438
    %v3440 = vpop.f32.mrb[0].mxu0
    %3441 = vmatprep.mubr.f32.mxu0 %v2708
    %3442 = vmatmul.mubr.f32.gmra.mrb[0].mxu0 %v2707
    %v3443 = vpop.f32.mrb[0].mxu0
    %v3444 = vadd.f32 %v3059, %v3443
    %v3445 = vpop.f32.mrb[0].mxu0
    %3446 = vmatprep.mubr.f32.mxu0 %v2712
    %3447 = vmatmul.mubr.f32.gmra.mrb[0].mxu0 %v2711
    %v3448 = vpop.f32.mrb[0].mxu0
    %v3449 = vadd.f32 %v3064, %v3448
    %v3450 = vpop.f32.mrb[0].mxu0
    %3451 = vmatprep.mubr.f32.mxu0 %v2716
    %3452 = vmatmul.mubr.f32.gmra.mrb[0].mxu0 %v2715
    %v3453 = vpop.f32.mrb[0].mxu0
    %v3454 = vadd.f32 %v3069, %v3453
    %v3455 = vpop.f32.mrb[0].mxu0
    %3456 = vmatprep.mubr.f32.mxu0 %v2720
    %3457 = vmatmul.mubr.f32.gmra.mrb[0].mxu0 %v2719
    %v3458 = vpop.f32.mrb[0].mxu0
    %v3459 = vadd.f32 %v3074, %v3458
    %v3460 = vpop.f32.mrb[0].mxu0
    %3461 = vmatprep.mubr.f32.mxu0 %v2724
    %3462 = vmatmul.mubr.f32.gmra.mrb[0].mxu0 %v2723
    %v3463 = vpop.f32.mrb[0].mxu0
    %v3464 = vadd.f32 %v3079, %v3463
    %v3465 = vpop.f32.mrb[0].mxu0
    %3466 = vmatprep.mubr.f32.mxu0 %v2728
    %3467 = vmatmul.mubr.f32.gmra.mrb[0].mxu0 %v2727
    %v3468 = vpop.f32.mrb[0].mxu0
    %v3469 = vadd.f32 %v3084, %v3468
    %v3470 = vpop.f32.mrb[0].mxu0
    %3471 = vmatprep.mubr.f32.mxu0 %v2732
    %3472 = vmatmul.mubr.f32.gmra.mrb[0].mxu0 %v2731
    %v3473 = vpop.f32.mrb[0].mxu0
    %v3474 = vadd.f32 %v3089, %v3473
    %v3475 = vpop.f32.mrb[0].mxu0
    %3476 = vmatprep.mubr.f32.mxu0 %v2736
    %3477 = vmatmul.mubr.f32.gmra.mrb[0].mxu0 %v2735
    %v3478 = vpop.f32.mrb[0].mxu0
    %v3479 = vadd.f32 %v3094, %v3478
    %v3480 = vpop.f32.mrb[0].mxu0
    %3481 = vmatprep.mubr.f32.mxu0 %v2740
    %3482 = vmatmul.mubr.f32.gmra.mrb[0].mxu0 %v2739
    %v3483 = vpop.f32.mrb[0].mxu0
    %v3484 = vadd.f32 %v3099, %v3483
    %v3485 = vpop.f32.mrb[0].mxu0
    %3486 = vmatprep.mubr.f32.mxu0 %v2744
    %3487 = vmatmul.mubr.f32.gmra.mrb[0].mxu0 %v2743
    %v3488 = vpop.f32.mrb[0].mxu0
    %v3489 = vadd.f32 %v3104, %v3488
    %v3490 = vpop.f32.mrb[0].mxu0
    %3491 = vmatprep.mubr.f32.mxu0 %v2748
    %3492 = vmatmul.mubr.f32.gmra.mrb[0].mxu0 %v2747
    %v3493 = vpop.f32.mrb[0].mxu0
    %v3494 = vadd.f32 %v3109, %v3493
    %v3495 = vpop.f32.mrb[0].mxu0
    %3496 = vmatprep.mubr.f32.mxu0 %v2752
    %3497 = vmatmul.mubr.f32.gmra.mrb[0].mxu0 %v2751
    %v3498 = vpop.f32.mrb[0].mxu0
    %v3499 = vadd.f32 %v3114, %v3498
    %v3500 = vpop.f32.mrb[0].mxu0
    %3501 = vmatprep.mubr.f32.mxu0 %v2756
    %3502 = vmatmul.mubr.f32.gmra.mrb[0].mxu0 %v2755
    %v3503 = vpop.f32.mrb[0].mxu0
    %v3504 = vadd.f32 %v3119, %v3503
    %v3505 = vpop.f32.mrb[0].mxu0
    %3506 = vmatprep.mubr.f32.mxu0 %v2760
    %3507 = vmatmul.mubr.f32.gmra.mrb[0].mxu0 %v2759
    %v3508 = vpop.f32.mrb[0].mxu0
    %v3509 = vadd.f32 %v3124, %v3508
    %v3510 = vpop.f32.mrb[0].mxu0
    %3511 = vmatprep.mubr.f32.mxu0 %v2764
    %3512 = vmatmul.mubr.f32.gmra.mrb[0].mxu0 %v2763
    %v3513 = vpop.f32.mrb[0].mxu0
    %v3514 = vadd.f32 %v3129, %v3513
    %v3515 = vpop.f32.mrb[0].mxu0
    %3516 = vmatprep.mubr.f32.mxu0 %v2768
    %3517 = vmatmul.mubr.f32.gmra.mrb[0].mxu0 %v2767
    %v3518 = vpop.f32.mrb[0].mxu0
    %v3519 = vadd.f32 %v3134, %v3518
    %v3520 = vpop.f32.mrb[0].mxu0
    %3521 = vmatprep.mubr.f32.mxu0 %v2772
    %3522 = vmatmul.mubr.f32.gmra.mrb[0].mxu0 %v2771
    %v3523 = vpop.f32.mrb[0].mxu0
    %v3524 = vadd.f32 %v3139, %v3523
    %v3525 = vpop.f32.mrb[0].mxu0
    %3526 = vmatprep.mubr.f32.mxu0 %v2776
    %3527 = vmatmul.mubr.f32.gmra.mrb[0].mxu0 %v2775
    %v3528 = vpop.f32.mrb[0].mxu0
    %v3529 = vadd.f32 %v3144, %v3528
    %v3530 = vpop.f32.mrb[0].mxu0
    %3531 = vmatprep.mubr.f32.mxu0 %v2780
    %3532 = vmatmul.mubr.f32.gmra.mrb[0].mxu0 %v2779
    %v3533 = vpop.f32.mrb[0].mxu0
    %v3534 = vadd.f32 %v3149, %v3533
    %v3535 = vpop.f32.mrb[0].mxu0
    %3536 = vmatprep.mubr.f32.mxu0 %v2784
    %3537 = vmatmul.mubr.f32.gmra.mrb[0].mxu0 %v2783
    %v3538 = vpop.f32.mrb[0].mxu0
    %v3539 = vadd.f32 %v3154, %v3538
    %v3540 = vpop.f32.mrb[0].mxu0
    %3541 = vmatprep.mubr.f32.mxu0 %v2788
    %3542 = vmatmul.mubr.f32.gmra.mrb[0].mxu0 %v2787
    %v3543 = vpop.f32.mrb[0].mxu0
    %v3544 = vadd.f32 %v3159, %v3543
    %v3545 = vpop.f32.mrb[0].mxu0
    %3546 = vmatprep.mubr.f32.mxu0 %v2792
    %3547 = vmatmul.mubr.f32.gmra.mrb[0].mxu0 %v2791
    %v3548 = vpop.f32.mrb[0].mxu0
    %v3549 = vadd.f32 %v3164, %v3548
    %v3550 = vpop.f32.mrb[0].mxu0
    %3551 = vmatprep.mubr.f32.mxu0 %v2796
    %3552 = vmatmul.mubr.f32.gmra.mrb[0].mxu0 %v2795
    %v3553 = vpop.f32.mrb[0].mxu0
    %v3554 = vadd.f32 %v3169, %v3553
    %v3555 = vpop.f32.mrb[0].mxu0
    %3556 = vmatprep.mubr.f32.mxu0 %v2800
    %3557 = vmatmul.mubr.f32.gmra.mrb[0].mxu0 %v2799
    %v3558 = vpop.f32.mrb[0].mxu0
    %v3559 = vadd.f32 %v3174, %v3558
    %v3560 = vpop.f32.mrb[0].mxu0
    %3561 = vmatprep.mubr.f32.mxu0 %v2804
    %3562 = vmatmul.mubr.f32.gmra.mrb[0].mxu0 %v2803
    %v3563 = vpop.f32.mrb[0].mxu0
    %v3564 = vadd.f32 %v3179, %v3563
    %v3565 = vpop.f32.mrb[0].mxu0
    %3566 = vmatprep.mubr.f32.mxu0 %v2808
    %3567 = vmatmul.mubr.f32.gmra.mrb[0].mxu0 %v2807
    %v3568 = vpop.f32.mrb[0].mxu0
    %v3569 = vadd.f32 %v3184, %v3568
    %v3570 = vpop.f32.mrb[0].mxu0
    %3571 = vmatprep.mubr.f32.mxu0 %v2812
    %3572 = vmatmul.mubr.f32.gmra.mrb[0].mxu0 %v2811
    %v3573 = vpop.f32.mrb[0].mxu0
    %v3574 = vadd.f32 %v3189, %v3573
    %v3575 = vpop.f32.mrb[0].mxu0
    %3576 = vmatprep.mubr.f32.mxu0 %v2816
    %3577 = vmatmul.mubr.f32.gmra.mrb[0].mxu0 %v2815
    %v3578 = vpop.f32.mrb[0].mxu0
    %v3579 = vadd.f32 %v3194, %v3578
    %v3580 = vpop.f32.mrb[0].mxu0
    %3581 = vmatprep.mubr.f32.mxu0 %v2820
    %3582 = vmatmul.mubr.f32.gmra.mrb[0].mxu0 %v2819
    %v3583 = vpop.f32.mrb[0].mxu0
    %v3584 = vadd.f32 %v3199, %v3583
    %v3585 = vpop.f32.mrb[0].mxu0
    %3586 = vmatprep.mubr.f32.mxu0 %v2824
    %3587 = vmatmul.mubr.f32.gmra.mrb[0].mxu0 %v2823
    %v3588 = vpop.f32.mrb[0].mxu0
    %v3589 = vadd.f32 %v3204, %v3588
    %v3590 = vpop.f32.mrb[0].mxu0
    %3591 = vmatprep.mubr.f32.mxu0 %v2828
    %3592 = vmatmul.mubr.f32.gmra.mrb[0].mxu0 %v2827
    %v3593 = vpop.f32.mrb[0].mxu0
    %v3594 = vadd.f32 %v3209, %v3593
    %v3595 = vpop.f32.mrb[0].mxu0
    %3596 = vmatprep.mubr.f32.mxu0 %v2832
    %3597 = vmatmul.mubr.f32.gmra.mrb[0].mxu0 %v2831
    %v3598 = vpop.f32.mrb[0].mxu0
    %v3599 = vadd.f32 %v3214, %v3598
    %v3600 = vpop.f32.mrb[0].mxu0
    %3601 = vmatprep.mubr.f32.mxu0 %v2836
    %3602 = vmatmul.mubr.f32.gmra.mrb[0].mxu0 %v2835
    %v3603 = vpop.f32.mrb[0].mxu0
    %v3604 = vadd.f32 %v3219, %v3603
    %v3605 = vpop.f32.mrb[0].mxu0
    %3606 = vdwg.mxu0
    %vm3607 = vcmp.gt.f32.partialorder %v3289, 0.0
    %vm3608 = vcmp.gt.f32.partialorder %v3294, 0.0
    %vm3609 = vcmp.gt.f32.partialorder %v3299, 0.0
    %vm3610 = vcmp.gt.f32.partialorder %v3304, 0.0
    %vm3611 = vcmp.gt.f32.partialorder %v3309, 0.0
    %vm3612 = vcmp.gt.f32.partialorder %v3314, 0.0
    %vm3613 = vcmp.gt.f32.partialorder %v3319, 0.0
    %vm3614 = vcmp.gt.f32.partialorder %v3324, 0.0
    %vm3615 = vcmp.gt.f32.partialorder %v3329, 0.0
    %vm3616 = vcmp.gt.f32.partialorder %v3334, 0.0
    %vm3617 = vcmp.gt.f32.partialorder %v3339, 0.0
    %vm3618 = vcmp.gt.f32.partialorder %v3344, 0.0
    %vm3619 = vcmp.gt.f32.partialorder %v3349, 0.0
    %vm3620 = vcmp.gt.f32.partialorder %v3354, 0.0
    %vm3621 = vcmp.gt.f32.partialorder %v3359, 0.0
    %vm3622 = vcmp.gt.f32.partialorder %v3364, 0.0
    %vm3623 = vcmp.gt.f32.partialorder %v3369, 0.0
    %vm3624 = vcmp.gt.f32.partialorder %v3374, 0.0
    %vm3625 = vcmp.gt.f32.partialorder %v3379, 0.0
    %vm3626 = vcmp.gt.f32.partialorder %v3384, 0.0
    %vm3627 = vcmp.gt.f32.partialorder %v3389, 0.0
    %vm3628 = vcmp.gt.f32.partialorder %v3394, 0.0
    %vm3629 = vcmp.gt.f32.partialorder %v3399, 0.0
    %vm3630 = vcmp.gt.f32.partialorder %v3404, 0.0
    %vm3631 = vcmp.gt.f32.partialorder %v3409, 0.0
    %vm3632 = vcmp.gt.f32.partialorder %v3414, 0.0
    %vm3633 = vcmp.gt.f32.partialorder %v3419, 0.0
    %vm3634 = vcmp.gt.f32.partialorder %v3424, 0.0
    %vm3635 = vcmp.gt.f32.partialorder %v3429, 0.0
    %vm3636 = vcmp.gt.f32.partialorder %v3434, 0.0
    %vm3637 = vcmp.gt.f32.partialorder %v3439, 0.0
    %vm3638 = vcmp.gt.f32.partialorder %v3444, 0.0
    %vm3639 = vcmp.gt.f32.partialorder %v3449, 0.0
    %vm3640 = vcmp.gt.f32.partialorder %v3454, 0.0
    %vm3641 = vcmp.gt.f32.partialorder %v3459, 0.0
    %vm3642 = vcmp.gt.f32.partialorder %v3464, 0.0
    %vm3643 = vcmp.gt.f32.partialorder %v3469, 0.0
    %vm3644 = vcmp.gt.f32.partialorder %v3474, 0.0
    %vm3645 = vcmp.gt.f32.partialorder %v3479, 0.0
    %vm3646 = vcmp.gt.f32.partialorder %v3484, 0.0
    %vm3647 = vcmp.gt.f32.partialorder %v3489, 0.0
    %vm3648 = vcmp.gt.f32.partialorder %v3494, 0.0
    %vm3649 = vcmp.gt.f32.partialorder %v3499, 0.0
    %vm3650 = vcmp.gt.f32.partialorder %v3504, 0.0
    %vm3651 = vcmp.gt.f32.partialorder %v3509, 0.0
    %vm3652 = vcmp.gt.f32.partialorder %v3514, 0.0
    %vm3653 = vcmp.gt.f32.partialorder %v3519, 0.0
    %vm3654 = vcmp.gt.f32.partialorder %v3524, 0.0
    %vm3655 = vcmp.gt.f32.partialorder %v3529, 0.0
    %vm3656 = vcmp.gt.f32.partialorder %v3534, 0.0
    %vm3657 = vcmp.gt.f32.partialorder %v3539, 0.0
    %vm3658 = vcmp.gt.f32.partialorder %v3544, 0.0
    %vm3659 = vcmp.gt.f32.partialorder %v3549, 0.0
    %vm3660 = vcmp.gt.f32.partialorder %v3554, 0.0
    %vm3661 = vcmp.gt.f32.partialorder %v3559, 0.0
    %vm3662 = vcmp.gt.f32.partialorder %v3564, 0.0
    %vm3663 = vcmp.gt.f32.partialorder %v3569, 0.0
    %vm3664 = vcmp.gt.f32.partialorder %v3574, 0.0
    %vm3665 = vcmp.gt.f32.partialorder %v3579, 0.0
    %vm3666 = vcmp.gt.f32.partialorder %v3584, 0.0
    %vm3667 = vcmp.gt.f32.partialorder %v3589, 0.0
    %vm3668 = vcmp.gt.f32.partialorder %v3594, 0.0
    %vm3669 = vcmp.gt.f32.partialorder %v3599, 0.0
    %vm3670 = vcmp.gt.f32.partialorder %v3604, 0.0
    %v3671 = vmul.f32 %v3289, 0.2
    %v3672 = vmul.f32 %v3294, 0.2
    %v3673 = vmul.f32 %v3299, 0.2
    %v3674 = vmul.f32 %v3304, 0.2
    %v3675 = vmul.f32 %v3309, 0.2
    %v3676 = vmul.f32 %v3314, 0.2
    %v3677 = vmul.f32 %v3319, 0.2
    %v3678 = vmul.f32 %v3324, 0.2
    %v3679 = vmul.f32 %v3329, 0.2
    %v3680 = vmul.f32 %v3334, 0.2
    %v3681 = vmul.f32 %v3339, 0.2
    %v3682 = vmul.f32 %v3344, 0.2
    %v3683 = vmul.f32 %v3349, 0.2
    %v3684 = vmul.f32 %v3354, 0.2
    %v3685 = vmul.f32 %v3359, 0.2
    %v3686 = vmul.f32 %v3364, 0.2
    %v3687 = vmul.f32 %v3369, 0.2
    %v3688 = vmul.f32 %v3374, 0.2
    %v3689 = vmul.f32 %v3379, 0.2
    %v3690 = vmul.f32 %v3384, 0.2
    %v3691 = vmul.f32 %v3389, 0.2
    %v3692 = vmul.f32 %v3394, 0.2
    %v3693 = vmul.f32 %v3399, 0.2
    %v3694 = vmul.f32 %v3404, 0.2
    %v3695 = vmul.f32 %v3409, 0.2
    %v3696 = vmul.f32 %v3414, 0.2
    %v3697 = vmul.f32 %v3419, 0.2
    %v3698 = vmul.f32 %v3424, 0.2
    %v3699 = vmul.f32 %v3429, 0.2
    %v3700 = vmul.f32 %v3434, 0.2
    %v3701 = vmul.f32 %v3439, 0.2
    %v3702 = vmul.f32 %v3444, 0.2
    %v3703 = vmul.f32 %v3449, 0.2
    %v3704 = vmul.f32 %v3454, 0.2
    %v3705 = vmul.f32 %v3459, 0.2
    %v3706 = vmul.f32 %v3464, 0.2
    %v3707 = vmul.f32 %v3469, 0.2
    %v3708 = vmul.f32 %v3474, 0.2
    %v3709 = vmul.f32 %v3479, 0.2
    %v3710 = vmul.f32 %v3484, 0.2
    %v3711 = vmul.f32 %v3489, 0.2
    %v3712 = vmul.f32 %v3494, 0.2
    %v3713 = vmul.f32 %v3499, 0.2
    %v3714 = vmul.f32 %v3504, 0.2
    %v3715 = vmul.f32 %v3509, 0.2
    %v3716 = vmul.f32 %v3514, 0.2
    %v3717 = vmul.f32 %v3519, 0.2
    %v3718 = vmul.f32 %v3524, 0.2
    %v3719 = vmul.f32 %v3529, 0.2
    %v3720 = vmul.f32 %v3534, 0.2
    %v3721 = vmul.f32 %v3539, 0.2
    %v3722 = vmul.f32 %v3544, 0.2
    %v3723 = vmul.f32 %v3549, 0.2
    %v3724 = vmul.f32 %v3554, 0.2
    %v3725 = vmul.f32 %v3559, 0.2
    %v3726 = vmul.f32 %v3564, 0.2
    %v3727 = vmul.f32 %v3569, 0.2
    %v3728 = vmul.f32 %v3574, 0.2
    %v3729 = vmul.f32 %v3579, 0.2
    %v3730 = vmul.f32 %v3584, 0.2
    %v3731 = vmul.f32 %v3589, 0.2
    %v3732 = vmul.f32 %v3594, 0.2
    %v3733 = vmul.f32 %v3599, 0.2
    %v3734 = vmul.f32 %v3604, 0.2
    %v3735 = vsel %vm3607, %v3289, %v3671
    %v3736 = vsel %vm3608, %v3294, %v3672
    %v3737 = vsel %vm3609, %v3299, %v3673
    %v3738 = vsel %vm3610, %v3304, %v3674
    %v3739 = vsel %vm3611, %v3309, %v3675
    %v3740 = vsel %vm3612, %v3314, %v3676
    %v3741 = vsel %vm3613, %v3319, %v3677
    %v3742 = vsel %vm3614, %v3324, %v3678
    %v3743 = vsel %vm3615, %v3329, %v3679
    %v3744 = vsel %vm3616, %v3334, %v3680
    %v3745 = vsel %vm3617, %v3339, %v3681
    %v3746 = vsel %vm3618, %v3344, %v3682
    %v3747 = vsel %vm3619, %v3349, %v3683
    %v3748 = vsel %vm3620, %v3354, %v3684
    %v3749 = vsel %vm3621, %v3359, %v3685
    %v3750 = vsel %vm3622, %v3364, %v3686
    %v3751 = vsel %vm3623, %v3369, %v3687
    %v3752 = vsel %vm3624, %v3374, %v3688
    %v3753 = vsel %vm3625, %v3379, %v3689
    %v3754 = vsel %vm3626, %v3384, %v3690
    %v3755 = vsel %vm3627, %v3389, %v3691
    %v3756 = vsel %vm3628, %v3394, %v3692
    %v3757 = vsel %vm3629, %v3399, %v3693
    %v3758 = vsel %vm3630, %v3404, %v3694
    %v3759 = vsel %vm3631, %v3409, %v3695
    %v3760 = vsel %vm3632, %v3414, %v3696
    %v3761 = vsel %vm3633, %v3419, %v3697
    %v3762 = vsel %vm3634, %v3424, %v3698
    %v3763 = vsel %vm3635, %v3429, %v3699
    %v3764 = vsel %vm3636, %v3434, %v3700
    %v3765 = vsel %vm3637, %v3439, %v3701
    %v3766 = vsel %vm3638, %v3444, %v3702
    %v3767 = vsel %vm3639, %v3449, %v3703
    %v3768 = vsel %vm3640, %v3454, %v3704
    %v3769 = vsel %vm3641, %v3459, %v3705
    %v3770 = vsel %vm3642, %v3464, %v3706
    %v3771 = vsel %vm3643, %v3469, %v3707
    %v3772 = vsel %vm3644, %v3474, %v3708
    %v3773 = vsel %vm3645, %v3479, %v3709
    %v3774 = vsel %vm3646, %v3484, %v3710
    %v3775 = vsel %vm3647, %v3489, %v3711
    %v3776 = vsel %vm3648, %v3494, %v3712
    %v3777 = vsel %vm3649, %v3499, %v3713
    %v3778 = vsel %vm3650, %v3504, %v3714
    %v3779 = vsel %vm3651, %v3509, %v3715
    %v3780 = vsel %vm3652, %v3514, %v3716
    %v3781 = vsel %vm3653, %v3519, %v3717
    %v3782 = vsel %vm3654, %v3524, %v3718
    %v3783 = vsel %vm3655, %v3529, %v3719
    %v3784 = vsel %vm3656, %v3534, %v3720
    %v3785 = vsel %vm3657, %v3539, %v3721
    %v3786 = vsel %vm3658, %v3544, %v3722
    %v3787 = vsel %vm3659, %v3549, %v3723
    %v3788 = vsel %vm3660, %v3554, %v3724
    %v3789 = vsel %vm3661, %v3559, %v3725
    %v3790 = vsel %vm3662, %v3564, %v3726
    %v3791 = vsel %vm3663, %v3569, %v3727
    %v3792 = vsel %vm3664, %v3574, %v3728
    %v3793 = vsel %vm3665, %v3579, %v3729
    %v3794 = vsel %vm3666, %v3584, %v3730
    %v3795 = vsel %vm3667, %v3589, %v3731
    %v3796 = vsel %vm3668, %v3594, %v3732
    %v3797 = vsel %vm3669, %v3599, %v3733
    %v3798 = vsel %vm3670, %v3604, %v3734
    %v3799 = vld [vmem:[#allocation7] sm:$0xff]
    %v3800 = vld [vmem:[#allocation7 + $0x8] sm:$0xff]
    %v3801 = vld [vmem:[#allocation7 + $0x10] sm:$0xff]
    %v3802 = vld [vmem:[#allocation7 + $0x18] sm:$0xff]
    %v3803 = vld [vmem:[#allocation7 + $0x20] sm:$0xff]
    %v3804 = vld [vmem:[#allocation7 + $0x28] sm:$0xff]
    %v3805 = vld [vmem:[#allocation7 + $0x30] sm:$0xff]
    %v3806 = vld [vmem:[#allocation7 + $0x38] sm:$0xff]
    %v3807 = vld [vmem:[#allocation7 + $0x40] sm:$0xff]
    %v3808 = vld [vmem:[#allocation7 + $0x48] sm:$0xff]
    %v3809 = vld [vmem:[#allocation7 + $0x50] sm:$0xff]
    %v3810 = vld [vmem:[#allocation7 + $0x58] sm:$0xff]
    %v3811 = vld [vmem:[#allocation7 + $0x60] sm:$0xff]
    %v3812 = vld [vmem:[#allocation7 + $0x68] sm:$0xff]
    %v3813 = vld [vmem:[#allocation7 + $0x70] sm:$0xff]
    %v3814 = vld [vmem:[#allocation7 + $0x78] sm:$0xff]
    %v3815 = vld [vmem:[#allocation7 + $0x80] sm:$0xff]
    %v3816 = vld [vmem:[#allocation7 + $0x88] sm:$0xff]
    %v3817 = vld [vmem:[#allocation7 + $0x90] sm:$0xff]
    %v3818 = vld [vmem:[#allocation7 + $0x98] sm:$0xff]
    %v3819 = vld [vmem:[#allocation7 + $0xa0] sm:$0xff]
    %v3820 = vld [vmem:[#allocation7 + $0xa8] sm:$0xff]
    %v3821 = vld [vmem:[#allocation7 + $0xb0] sm:$0xff]
    %v3822 = vld [vmem:[#allocation7 + $0xb8] sm:$0xff]
    %v3823 = vld [vmem:[#allocation7 + $0xc0] sm:$0xff]
    %v3824 = vld [vmem:[#allocation7 + $0xc8] sm:$0xff]
    %v3825 = vld [vmem:[#allocation7 + $0xd0] sm:$0xff]
    %v3826 = vld [vmem:[#allocation7 + $0xd8] sm:$0xff]
    %v3827 = vld [vmem:[#allocation7 + $0xe0] sm:$0xff]
    %v3828 = vld [vmem:[#allocation7 + $0xe8] sm:$0xff]
    %v3829 = vld [vmem:[#allocation7 + $0xf0] sm:$0xff]
    %v3830 = vld [vmem:[#allocation7 + $0xf8] sm:$0xff]
    %v3831 = vld [vmem:[#allocation7 + $0x100] sm:$0xff]
    %v3832 = vld [vmem:[#allocation7 + $0x108] sm:$0xff]
    %v3833 = vld [vmem:[#allocation7 + $0x110] sm:$0xff]
    %v3834 = vld [vmem:[#allocation7 + $0x118] sm:$0xff]
    %v3835 = vld [vmem:[#allocation7 + $0x120] sm:$0xff]
    %v3836 = vld [vmem:[#allocation7 + $0x128] sm:$0xff]
    %v3837 = vld [vmem:[#allocation7 + $0x130] sm:$0xff]
    %v3838 = vld [vmem:[#allocation7 + $0x138] sm:$0xff]
    %v3839 = vld [vmem:[#allocation7 + $0x140] sm:$0xff]
    %v3840 = vld [vmem:[#allocation7 + $0x148] sm:$0xff]
    %v3841 = vld [vmem:[#allocation7 + $0x150] sm:$0xff]
    %v3842 = vld [vmem:[#allocation7 + $0x158] sm:$0xff]
    %v3843 = vld [vmem:[#allocation7 + $0x160] sm:$0xff]
    %v3844 = vld [vmem:[#allocation7 + $0x168] sm:$0xff]
    %v3845 = vld [vmem:[#allocation7 + $0x170] sm:$0xff]
    %v3846 = vld [vmem:[#allocation7 + $0x178] sm:$0xff]
    %v3847 = vld [vmem:[#allocation7 + $0x180] sm:$0xff]
    %v3848 = vld [vmem:[#allocation7 + $0x188] sm:$0xff]
    %v3849 = vld [vmem:[#allocation7 + $0x190] sm:$0xff]
    %v3850 = vld [vmem:[#allocation7 + $0x198] sm:$0xff]
    %v3851 = vld [vmem:[#allocation7 + $0x1a0] sm:$0xff]
    %v3852 = vld [vmem:[#allocation7 + $0x1a8] sm:$0xff]
    %v3853 = vld [vmem:[#allocation7 + $0x1b0] sm:$0xff]
    %v3854 = vld [vmem:[#allocation7 + $0x1b8] sm:$0xff]
    %v3855 = vld [vmem:[#allocation7 + $0x1c0] sm:$0xff]
    %v3856 = vld [vmem:[#allocation7 + $0x1c8] sm:$0xff]
    %v3857 = vld [vmem:[#allocation7 + $0x1d0] sm:$0xff]
    %v3858 = vld [vmem:[#allocation7 + $0x1d8] sm:$0xff]
    %v3859 = vld [vmem:[#allocation7 + $0x1e0] sm:$0xff]
    %v3860 = vld [vmem:[#allocation7 + $0x1e8] sm:$0xff]
    %v3861 = vld [vmem:[#allocation7 + $0x1f0] sm:$0xff]
    %v3862 = vld [vmem:[#allocation7 + $0x1f8] sm:$0xff]
    %v3863 = vld [vmem:[#allocation7 + $0x200] sm:$0xff]
    %v3864 = vld [vmem:[#allocation7 + $0x208] sm:$0xff]
    %v3865 = vld [vmem:[#allocation7 + $0x210] sm:$0xff]
    %v3866 = vld [vmem:[#allocation7 + $0x218] sm:$0xff]
    %v3867 = vld [vmem:[#allocation7 + $0x220] sm:$0xff]
    %v3868 = vld [vmem:[#allocation7 + $0x228] sm:$0xff]
    %v3869 = vld [vmem:[#allocation7 + $0x230] sm:$0xff]
    %v3870 = vld [vmem:[#allocation7 + $0x238] sm:$0xff]
    %v3871 = vld [vmem:[#allocation7 + $0x240] sm:$0xff]
    %v3872 = vld [vmem:[#allocation7 + $0x248] sm:$0xff]
    %v3873 = vld [vmem:[#allocation7 + $0x250] sm:$0xff]
    %v3874 = vld [vmem:[#allocation7 + $0x258] sm:$0xff]
    %v3875 = vld [vmem:[#allocation7 + $0x260] sm:$0xff]
    %v3876 = vld [vmem:[#allocation7 + $0x268] sm:$0xff]
    %v3877 = vld [vmem:[#allocation7 + $0x270] sm:$0xff]
    %v3878 = vld [vmem:[#allocation7 + $0x278] sm:$0xff]
    %v3879 = vld [vmem:[#allocation7 + $0x280] sm:$0xff]
    %v3880 = vld [vmem:[#allocation7 + $0x288] sm:$0xff]
    %v3881 = vld [vmem:[#allocation7 + $0x290] sm:$0xff]
    %v3882 = vld [vmem:[#allocation7 + $0x298] sm:$0xff]
    %v3883 = vld [vmem:[#allocation7 + $0x2a0] sm:$0xff]
    %v3884 = vld [vmem:[#allocation7 + $0x2a8] sm:$0xff]
    %v3885 = vld [vmem:[#allocation7 + $0x2b0] sm:$0xff]
    %v3886 = vld [vmem:[#allocation7 + $0x2b8] sm:$0xff]
    %v3887 = vld [vmem:[#allocation7 + $0x2c0] sm:$0xff]
    %v3888 = vld [vmem:[#allocation7 + $0x2c8] sm:$0xff]
    %v3889 = vld [vmem:[#allocation7 + $0x2d0] sm:$0xff]
    %v3890 = vld [vmem:[#allocation7 + $0x2d8] sm:$0xff]
    %v3891 = vld [vmem:[#allocation7 + $0x2e0] sm:$0xff]
    %v3892 = vld [vmem:[#allocation7 + $0x2e8] sm:$0xff]
    %v3893 = vld [vmem:[#allocation7 + $0x2f0] sm:$0xff]
    %v3894 = vld [vmem:[#allocation7 + $0x2f8] sm:$0xff]
    %v3895 = vld [vmem:[#allocation7 + $0x300] sm:$0xff]
    %v3896 = vld [vmem:[#allocation7 + $0x308] sm:$0xff]
    %v3897 = vld [vmem:[#allocation7 + $0x310] sm:$0xff]
    %v3898 = vld [vmem:[#allocation7 + $0x318] sm:$0xff]
    %v3899 = vld [vmem:[#allocation7 + $0x320] sm:$0xff]
    %v3900 = vld [vmem:[#allocation7 + $0x328] sm:$0xff]
    %v3901 = vld [vmem:[#allocation7 + $0x330] sm:$0xff]
    %v3902 = vld [vmem:[#allocation7 + $0x338] sm:$0xff]
    %v3903 = vld [vmem:[#allocation7 + $0x340] sm:$0xff]
    %v3904 = vld [vmem:[#allocation7 + $0x348] sm:$0xff]
    %v3905 = vld [vmem:[#allocation7 + $0x350] sm:$0xff]
    %v3906 = vld [vmem:[#allocation7 + $0x358] sm:$0xff]
    %v3907 = vld [vmem:[#allocation7 + $0x360] sm:$0xff]
    %v3908 = vld [vmem:[#allocation7 + $0x368] sm:$0xff]
    %v3909 = vld [vmem:[#allocation7 + $0x370] sm:$0xff]
    %v3910 = vld [vmem:[#allocation7 + $0x378] sm:$0xff]
    %v3911 = vld [vmem:[#allocation7 + $0x380] sm:$0xff]
    %v3912 = vld [vmem:[#allocation7 + $0x388] sm:$0xff]
    %v3913 = vld [vmem:[#allocation7 + $0x390] sm:$0xff]
    %v3914 = vld [vmem:[#allocation7 + $0x398] sm:$0xff]
    %v3915 = vld [vmem:[#allocation7 + $0x3a0] sm:$0xff]
    %v3916 = vld [vmem:[#allocation7 + $0x3a8] sm:$0xff]
    %v3917 = vld [vmem:[#allocation7 + $0x3b0] sm:$0xff]
    %v3918 = vld [vmem:[#allocation7 + $0x3b8] sm:$0xff]
    %v3919 = vld [vmem:[#allocation7 + $0x3c0] sm:$0xff]
    %v3920 = vld [vmem:[#allocation7 + $0x3c8] sm:$0xff]
    %v3921 = vld [vmem:[#allocation7 + $0x3d0] sm:$0xff]
    %v3922 = vld [vmem:[#allocation7 + $0x3d8] sm:$0xff]
    %v3923 = vld [vmem:[#allocation7 + $0x3e0] sm:$0xff]
    %v3924 = vld [vmem:[#allocation7 + $0x3e8] sm:$0xff]
    %v3925 = vld [vmem:[#allocation7 + $0x3f0] sm:$0xff]
    %v3926 = vld [vmem:[#allocation7 + $0x3f8] sm:$0xff]
    %v3927 = vld [vmem:[#allocation7 + $0x400] sm:$0xff]
    %v3928 = vld [vmem:[#allocation7 + $0x408] sm:$0xff]
    %v3929 = vld [vmem:[#allocation7 + $0x410] sm:$0xff]
    %v3930 = vld [vmem:[#allocation7 + $0x418] sm:$0xff]
    %v3931 = vld [vmem:[#allocation7 + $0x420] sm:$0xff]
    %v3932 = vld [vmem:[#allocation7 + $0x428] sm:$0xff]
    %v3933 = vld [vmem:[#allocation7 + $0x430] sm:$0xff]
    %v3934 = vld [vmem:[#allocation7 + $0x438] sm:$0xff]
    %v3935 = vld [vmem:[#allocation7 + $0x440] sm:$0xff]
    %v3936 = vld [vmem:[#allocation7 + $0x448] sm:$0xff]
    %v3937 = vld [vmem:[#allocation7 + $0x450] sm:$0xff]
    %v3938 = vld [vmem:[#allocation7 + $0x458] sm:$0xff]
    %v3939 = vld [vmem:[#allocation7 + $0x460] sm:$0xff]
    %v3940 = vld [vmem:[#allocation7 + $0x468] sm:$0xff]
    %v3941 = vld [vmem:[#allocation7 + $0x470] sm:$0xff]
    %v3942 = vld [vmem:[#allocation7 + $0x478] sm:$0xff]
    %v3943 = vld [vmem:[#allocation7 + $0x480] sm:$0xff]
    %v3944 = vld [vmem:[#allocation7 + $0x488] sm:$0xff]
    %v3945 = vld [vmem:[#allocation7 + $0x490] sm:$0xff]
    %v3946 = vld [vmem:[#allocation7 + $0x498] sm:$0xff]
    %v3947 = vld [vmem:[#allocation7 + $0x4a0] sm:$0xff]
    %v3948 = vld [vmem:[#allocation7 + $0x4a8] sm:$0xff]
    %v3949 = vld [vmem:[#allocation7 + $0x4b0] sm:$0xff]
    %v3950 = vld [vmem:[#allocation7 + $0x4b8] sm:$0xff]
    %v3951 = vld [vmem:[#allocation7 + $0x4c0] sm:$0xff]
    %v3952 = vld [vmem:[#allocation7 + $0x4c8] sm:$0xff]
    %v3953 = vld [vmem:[#allocation7 + $0x4d0] sm:$0xff]
    %v3954 = vld [vmem:[#allocation7 + $0x4d8] sm:$0xff]
    %v3955 = vld [vmem:[#allocation7 + $0x4e0] sm:$0xff]
    %v3956 = vld [vmem:[#allocation7 + $0x4e8] sm:$0xff]
    %v3957 = vld [vmem:[#allocation7 + $0x4f0] sm:$0xff]
    %v3958 = vld [vmem:[#allocation7 + $0x4f8] sm:$0xff]
    %v3959 = vld [vmem:[#allocation7 + $0x500] sm:$0xff]
    %v3960 = vld [vmem:[#allocation7 + $0x508] sm:$0xff]
    %v3961 = vld [vmem:[#allocation7 + $0x510] sm:$0xff]
    %v3962 = vld [vmem:[#allocation7 + $0x518] sm:$0xff]
    %v3963 = vld [vmem:[#allocation7 + $0x520] sm:$0xff]
    %v3964 = vld [vmem:[#allocation7 + $0x528] sm:$0xff]
    %v3965 = vld [vmem:[#allocation7 + $0x530] sm:$0xff]
    %v3966 = vld [vmem:[#allocation7 + $0x538] sm:$0xff]
    %v3967 = vld [vmem:[#allocation7 + $0x540] sm:$0xff]
    %v3968 = vld [vmem:[#allocation7 + $0x548] sm:$0xff]
    %v3969 = vld [vmem:[#allocation7 + $0x550] sm:$0xff]
    %v3970 = vld [vmem:[#allocation7 + $0x558] sm:$0xff]
    %v3971 = vld [vmem:[#allocation7 + $0x560] sm:$0xff]
    %v3972 = vld [vmem:[#allocation7 + $0x568] sm:$0xff]
    %v3973 = vld [vmem:[#allocation7 + $0x570] sm:$0xff]
    %v3974 = vld [vmem:[#allocation7 + $0x578] sm:$0xff]
    %v3975 = vld [vmem:[#allocation7 + $0x580] sm:$0xff]
    %v3976 = vld [vmem:[#allocation7 + $0x588] sm:$0xff]
    %v3977 = vld [vmem:[#allocation7 + $0x590] sm:$0xff]
    %v3978 = vld [vmem:[#allocation7 + $0x598] sm:$0xff]
    %v3979 = vld [vmem:[#allocation7 + $0x5a0] sm:$0xff]
    %v3980 = vld [vmem:[#allocation7 + $0x5a8] sm:$0xff]
    %v3981 = vld [vmem:[#allocation7 + $0x5b0] sm:$0xff]
    %v3982 = vld [vmem:[#allocation7 + $0x5b8] sm:$0xff]
    %v3983 = vld [vmem:[#allocation7 + $0x5c0] sm:$0xff]
    %v3984 = vld [vmem:[#allocation7 + $0x5c8] sm:$0xff]
    %v3985 = vld [vmem:[#allocation7 + $0x5d0] sm:$0xff]
    %v3986 = vld [vmem:[#allocation7 + $0x5d8] sm:$0xff]
    %v3987 = vld [vmem:[#allocation7 + $0x5e0] sm:$0xff]
    %v3988 = vld [vmem:[#allocation7 + $0x5e8] sm:$0xff]
    %v3989 = vld [vmem:[#allocation7 + $0x5f0] sm:$0xff]
    %v3990 = vld [vmem:[#allocation7 + $0x5f8] sm:$0xff]
    %v3991 = vld [vmem:[#allocation7 + $0x600] sm:$0xff]
    %v3992 = vld [vmem:[#allocation7 + $0x608] sm:$0xff]
    %v3993 = vld [vmem:[#allocation7 + $0x610] sm:$0xff]
    %v3994 = vld [vmem:[#allocation7 + $0x618] sm:$0xff]
    %v3995 = vld [vmem:[#allocation7 + $0x620] sm:$0xff]
    %v3996 = vld [vmem:[#allocation7 + $0x628] sm:$0xff]
    %v3997 = vld [vmem:[#allocation7 + $0x630] sm:$0xff]
    %v3998 = vld [vmem:[#allocation7 + $0x638] sm:$0xff]
    %v3999 = vld [vmem:[#allocation7 + $0x640] sm:$0xff]
    %v4000 = vld [vmem:[#allocation7 + $0x648] sm:$0xff]
    %v4001 = vld [vmem:[#allocation7 + $0x650] sm:$0xff]
    %v4002 = vld [vmem:[#allocation7 + $0x658] sm:$0xff]
    %v4003 = vld [vmem:[#allocation7 + $0x660] sm:$0xff]
    %v4004 = vld [vmem:[#allocation7 + $0x668] sm:$0xff]
    %v4005 = vld [vmem:[#allocation7 + $0x670] sm:$0xff]
    %v4006 = vld [vmem:[#allocation7 + $0x678] sm:$0xff]
    %v4007 = vld [vmem:[#allocation7 + $0x680] sm:$0xff]
    %v4008 = vld [vmem:[#allocation7 + $0x688] sm:$0xff]
    %v4009 = vld [vmem:[#allocation7 + $0x690] sm:$0xff]
    %v4010 = vld [vmem:[#allocation7 + $0x698] sm:$0xff]
    %v4011 = vld [vmem:[#allocation7 + $0x6a0] sm:$0xff]
    %v4012 = vld [vmem:[#allocation7 + $0x6a8] sm:$0xff]
    %v4013 = vld [vmem:[#allocation7 + $0x6b0] sm:$0xff]
    %v4014 = vld [vmem:[#allocation7 + $0x6b8] sm:$0xff]
    %v4015 = vld [vmem:[#allocation7 + $0x6c0] sm:$0xff]
    %v4016 = vld [vmem:[#allocation7 + $0x6c8] sm:$0xff]
    %v4017 = vld [vmem:[#allocation7 + $0x6d0] sm:$0xff]
    %v4018 = vld [vmem:[#allocation7 + $0x6d8] sm:$0xff]
    %v4019 = vld [vmem:[#allocation7 + $0x6e0] sm:$0xff]
    %v4020 = vld [vmem:[#allocation7 + $0x6e8] sm:$0xff]
    %v4021 = vld [vmem:[#allocation7 + $0x6f0] sm:$0xff]
    %v4022 = vld [vmem:[#allocation7 + $0x6f8] sm:$0xff]
    %v4023 = vld [vmem:[#allocation7 + $0x700] sm:$0xff]
    %v4024 = vld [vmem:[#allocation7 + $0x708] sm:$0xff]
    %v4025 = vld [vmem:[#allocation7 + $0x710] sm:$0xff]
    %v4026 = vld [vmem:[#allocation7 + $0x718] sm:$0xff]
    %v4027 = vld [vmem:[#allocation7 + $0x720] sm:$0xff]
    %v4028 = vld [vmem:[#allocation7 + $0x728] sm:$0xff]
    %v4029 = vld [vmem:[#allocation7 + $0x730] sm:$0xff]
    %v4030 = vld [vmem:[#allocation7 + $0x738] sm:$0xff]
    %v4031 = vld [vmem:[#allocation7 + $0x740] sm:$0xff]
    %v4032 = vld [vmem:[#allocation7 + $0x748] sm:$0xff]
    %v4033 = vld [vmem:[#allocation7 + $0x750] sm:$0xff]
    %v4034 = vld [vmem:[#allocation7 + $0x758] sm:$0xff]
    %v4035 = vld [vmem:[#allocation7 + $0x760] sm:$0xff]
    %v4036 = vld [vmem:[#allocation7 + $0x768] sm:$0xff]
    %v4037 = vld [vmem:[#allocation7 + $0x770] sm:$0xff]
    %v4038 = vld [vmem:[#allocation7 + $0x778] sm:$0xff]
    %v4039 = vld [vmem:[#allocation7 + $0x780] sm:$0xff]
    %v4040 = vld [vmem:[#allocation7 + $0x788] sm:$0xff]
    %v4041 = vld [vmem:[#allocation7 + $0x790] sm:$0xff]
    %v4042 = vld [vmem:[#allocation7 + $0x798] sm:$0xff]
    %v4043 = vld [vmem:[#allocation7 + $0x7a0] sm:$0xff]
    %v4044 = vld [vmem:[#allocation7 + $0x7a8] sm:$0xff]
    %v4045 = vld [vmem:[#allocation7 + $0x7b0] sm:$0xff]
    %v4046 = vld [vmem:[#allocation7 + $0x7b8] sm:$0xff]
    %v4047 = vld [vmem:[#allocation7 + $0x7c0] sm:$0xff]
    %v4048 = vld [vmem:[#allocation7 + $0x7c8] sm:$0xff]
    %v4049 = vld [vmem:[#allocation7 + $0x7d0] sm:$0xff]
    %v4050 = vld [vmem:[#allocation7 + $0x7d8] sm:$0xff]
    %v4051 = vld [vmem:[#allocation7 + $0x7e0] sm:$0xff]
    %v4052 = vld [vmem:[#allocation7 + $0x7e8] sm:$0xff]
    %v4053 = vld [vmem:[#allocation7 + $0x7f0] sm:$0xff]
    %v4054 = vld [vmem:[#allocation7 + $0x7f8] sm:$0xff]
    %4055 = vmatprep.subr.mxu0 0.0
    %4056 = vmatpush1.msra.mxu0 %v3735
    %4057 = vmatprep.subr.mxu0 0.0
    %4058 = vmatpush1.msra.mxu0 %v3736
    %4059 = vmatprep.subr.mxu0 0.0
    %4060 = vmatpush1.msra.mxu0 %v3737
    %4061 = vmatprep.subr.mxu0 0.0
    %4062 = vmatpush1.msra.mxu0 %v3738
    %4063 = vmatprep.subr.mxu0 0.0
    %4064 = vmatpush1.msra.mxu0 %v3739
    %4065 = vmatprep.subr.mxu0 0.0
    %4066 = vmatpush1.msra.mxu0 %v3740
    %4067 = vmatprep.subr.mxu0 0.0
    %4068 = vmatpush1.msra.mxu0 %v3741
    %4069 = vmatprep.subr.mxu0 0.0
    %4070 = vmatpush1.msra.mxu0 %v3742
    %4071 = vmatprep.subr.mxu0 0.0
    %4072 = vmatpush1.msra.mxu0 %v3743
    %4073 = vmatprep.subr.mxu0 0.0
    %4074 = vmatpush1.msra.mxu0 %v3744
    %4075 = vmatprep.subr.mxu0 0.0
    %4076 = vmatpush1.msra.mxu0 %v3745
    %4077 = vmatprep.subr.mxu0 0.0
    %4078 = vmatpush1.msra.mxu0 %v3746
    %4079 = vmatprep.subr.mxu0 0.0
    %4080 = vmatpush1.msra.mxu0 %v3747
    %4081 = vmatprep.subr.mxu0 0.0
    %4082 = vmatpush1.msra.mxu0 %v3748
    %4083 = vmatprep.subr.mxu0 0.0
    %4084 = vmatpush1.msra.mxu0 %v3749
    %4085 = vmatprep.subr.mxu0 0.0
    %4086 = vmatpush1.msra.mxu0 %v3750
    %4087 = vmatprep.subr.mxu0 0.0
    %4088 = vmatpush1.msra.mxu0 %v3751
    %4089 = vmatprep.subr.mxu0 0.0
    %4090 = vmatpush1.msra.mxu0 %v3752
    %4091 = vmatprep.subr.mxu0 0.0
    %4092 = vmatpush1.msra.mxu0 %v3753
    %4093 = vmatprep.subr.mxu0 0.0
    %4094 = vmatpush1.msra.mxu0 %v3754
    %4095 = vmatprep.subr.mxu0 0.0
    %4096 = vmatpush1.msra.mxu0 %v3755
    %4097 = vmatprep.subr.mxu0 0.0
    %4098 = vmatpush1.msra.mxu0 %v3756
    %4099 = vmatprep.subr.mxu0 0.0
    %4100 = vmatpush1.msra.mxu0 %v3757
    %4101 = vmatprep.subr.mxu0 0.0
    %4102 = vmatpush1.msra.mxu0 %v3758
    %4103 = vmatprep.subr.mxu0 0.0
    %4104 = vmatpush1.msra.mxu0 %v3759
    %4105 = vmatprep.subr.mxu0 0.0
    %4106 = vmatpush1.msra.mxu0 %v3760
    %4107 = vmatprep.subr.mxu0 0.0
    %4108 = vmatpush1.msra.mxu0 %v3761
    %4109 = vmatprep.subr.mxu0 0.0
    %4110 = vmatpush1.msra.mxu0 %v3762
    %4111 = vmatprep.subr.mxu0 0.0
    %4112 = vmatpush1.msra.mxu0 %v3763
    %4113 = vmatprep.subr.mxu0 0.0
    %4114 = vmatpush1.msra.mxu0 %v3764
    %4115 = vmatprep.subr.mxu0 0.0
    %4116 = vmatpush1.msra.mxu0 %v3765
    %4117 = vmatprep.subr.mxu0 0.0
    %4118 = vmatpush1.msra.mxu0 %v3766
    %4119 = vmatprep.mubr.f32.mxu0 %v3800
    %4120 = vmatmul.mubr.f32.gmra.mrb[0].mxu0 %v3799
    %v4121 = vpop.f32.mrb[0].mxu0
    %v4122 = vadd.f32 0.0, %v4121
    %v4123 = vpop.f32.mrb[0].mxu0
    %4124 = vmatprep.mubr.f32.mxu0 %v3804
    %4125 = vmatmul.mubr.f32.gmra.mrb[0].mxu0 %v3803
    %v4126 = vpop.f32.mrb[0].mxu0
    %v4127 = vadd.f32 0.0, %v4126
    %v4128 = vpop.f32.mrb[0].mxu0
    %4129 = vmatprep.mubr.f32.mxu0 %v3808
    %4130 = vmatmul.mubr.f32.gmra.mrb[0].mxu0 %v3807
    %v4131 = vpop.f32.mrb[0].mxu0
    %v4132 = vadd.f32 0.0, %v4131
    %v4133 = vpop.f32.mrb[0].mxu0
    %4134 = vmatprep.mubr.f32.mxu0 %v3812
    %4135 = vmatmul.mubr.f32.gmra.mrb[0].mxu0 %v3811
    %v4136 = vpop.f32.mrb[0].mxu0
    %v4137 = vadd.f32 0.0, %v4136
    %v4138 = vpop.f32.mrb[0].mxu0
    %4139 = vmatprep.mubr.f32.mxu0 %v3816
    %4140 = vmatmul.mubr.f32.gmra.mrb[0].mxu0 %v3815
    %v4141 = vpop.f32.mrb[0].mxu0
    %v4142 = vadd.f32 0.0, %v4141
    %v4143 = vpop.f32.mrb[0].mxu0
    %4144 = vmatprep.mubr.f32.mxu0 %v3820
    %4145 = vmatmul.mubr.f32.gmra.mrb[0].mxu0 %v3819
    %v4146 = vpop.f32.mrb[0].mxu0
    %v4147 = vadd.f32 0.0, %v4146
    %v4148 = vpop.f32.mrb[0].mxu0
    %4149 = vmatprep.mubr.f32.mxu0 %v3824
    %4150 = vmatmul.mubr.f32.gmra.mrb[0].mxu0 %v3823
    %v4151 = vpop.f32.mrb[0].mxu0
    %v4152 = vadd.f32 0.0, %v4151
    %v4153 = vpop.f32.mrb[0].mxu0
    %4154 = vmatprep.mubr.f32.mxu0 %v3828
    %4155 = vmatmul.mubr.f32.gmra.mrb[0].mxu0 %v3827
    %v4156 = vpop.f32.mrb[0].mxu0
    %v4157 = vadd.f32 0.0, %v4156
    %v4158 = vpop.f32.mrb[0].mxu0
    %4159 = vmatprep.mubr.f32.mxu0 %v3832
    %4160 = vmatmul.mubr.f32.gmra.mrb[0].mxu0 %v3831
    %v4161 = vpop.f32.mrb[0].mxu0
    %v4162 = vadd.f32 0.0, %v4161
    %v4163 = vpop.f32.mrb[0].mxu0
    %4164 = vmatprep.mubr.f32.mxu0 %v3836
    %4165 = vmatmul.mubr.f32.gmra.mrb[0].mxu0 %v3835
    %v4166 = vpop.f32.mrb[0].mxu0
    %v4167 = vadd.f32 0.0, %v4166
    %v4168 = vpop.f32.mrb[0].mxu0
    %4169 = vmatprep.mubr.f32.mxu0 %v3840
    %4170 = vmatmul.mubr.f32.gmra.mrb[0].mxu0 %v3839
    %v4171 = vpop.f32.mrb[0].mxu0
    %v4172 = vadd.f32 0.0, %v4171
    %v4173 = vpop.f32.mrb[0].mxu0
    %4174 = vmatprep.mubr.f32.mxu0 %v3844
    %4175 = vmatmul.mubr.f32.gmra.mrb[0].mxu0 %v3843
    %v4176 = vpop.f32.mrb[0].mxu0
    %v4177 = vadd.f32 0.0, %v4176
    %v4178 = vpop.f32.mrb[0].mxu0
    %4179 = vmatprep.mubr.f32.mxu0 %v3848
    %4180 = vmatmul.mubr.f32.gmra.mrb[0].mxu0 %v3847
    %v4181 = vpop.f32.mrb[0].mxu0
    %v4182 = vadd.f32 0.0, %v4181
    %v4183 = vpop.f32.mrb[0].mxu0
    %4184 = vmatprep.mubr.f32.mxu0 %v3852
    %4185 = vmatmul.mubr.f32.gmra.mrb[0].mxu0 %v3851
    %v4186 = vpop.f32.mrb[0].mxu0
    %v4187 = vadd.f32 0.0, %v4186
    %v4188 = vpop.f32.mrb[0].mxu0
    %4189 = vmatprep.mubr.f32.mxu0 %v3856
    %4190 = vmatmul.mubr.f32.gmra.mrb[0].mxu0 %v3855
    %v4191 = vpop.f32.mrb[0].mxu0
    %v4192 = vadd.f32 0.0, %v4191
    %v4193 = vpop.f32.mrb[0].mxu0
    %4194 = vmatprep.mubr.f32.mxu0 %v3860
    %4195 = vmatmul.mubr.f32.gmra.mrb[0].mxu0 %v3859
    %v4196 = vpop.f32.mrb[0].mxu0
    %v4197 = vadd.f32 0.0, %v4196
    %v4198 = vpop.f32.mrb[0].mxu0
    %4199 = vmatprep.mubr.f32.mxu0 %v3864
    %4200 = vmatmul.mubr.f32.gmra.mrb[0].mxu0 %v3863
    %v4201 = vpop.f32.mrb[0].mxu0
    %v4202 = vadd.f32 0.0, %v4201
    %v4203 = vpop.f32.mrb[0].mxu0
    %4204 = vmatprep.mubr.f32.mxu0 %v3868
    %4205 = vmatmul.mubr.f32.gmra.mrb[0].mxu0 %v3867
    %v4206 = vpop.f32.mrb[0].mxu0
    %v4207 = vadd.f32 0.0, %v4206
    %v4208 = vpop.f32.mrb[0].mxu0
    %4209 = vmatprep.mubr.f32.mxu0 %v3872
    %4210 = vmatmul.mubr.f32.gmra.mrb[0].mxu0 %v3871
    %v4211 = vpop.f32.mrb[0].mxu0
    %v4212 = vadd.f32 0.0, %v4211
    %v4213 = vpop.f32.mrb[0].mxu0
    %4214 = vmatprep.mubr.f32.mxu0 %v3876
    %4215 = vmatmul.mubr.f32.gmra.mrb[0].mxu0 %v3875
    %v4216 = vpop.f32.mrb[0].mxu0
    %v4217 = vadd.f32 0.0, %v4216
    %v4218 = vpop.f32.mrb[0].mxu0
    %4219 = vmatprep.mubr.f32.mxu0 %v3880
    %4220 = vmatmul.mubr.f32.gmra.mrb[0].mxu0 %v3879
    %v4221 = vpop.f32.mrb[0].mxu0
    %v4222 = vadd.f32 0.0, %v4221
    %v4223 = vpop.f32.mrb[0].mxu0
    %4224 = vmatprep.mubr.f32.mxu0 %v3884
    %4225 = vmatmul.mubr.f32.gmra.mrb[0].mxu0 %v3883
    %v4226 = vpop.f32.mrb[0].mxu0
    %v4227 = vadd.f32 0.0, %v4226
    %v4228 = vpop.f32.mrb[0].mxu0
    %4229 = vmatprep.mubr.f32.mxu0 %v3888
    %4230 = vmatmul.mubr.f32.gmra.mrb[0].mxu0 %v3887
    %v4231 = vpop.f32.mrb[0].mxu0
    %v4232 = vadd.f32 0.0, %v4231
    %v4233 = vpop.f32.mrb[0].mxu0
    %4234 = vmatprep.mubr.f32.mxu0 %v3892
    %4235 = vmatmul.mubr.f32.gmra.mrb[0].mxu0 %v3891
    %v4236 = vpop.f32.mrb[0].mxu0
    %v4237 = vadd.f32 0.0, %v4236
    %v4238 = vpop.f32.mrb[0].mxu0
    %4239 = vmatprep.mubr.f32.mxu0 %v3896
    %4240 = vmatmul.mubr.f32.gmra.mrb[0].mxu0 %v3895
    %v4241 = vpop.f32.mrb[0].mxu0
    %v4242 = vadd.f32 0.0, %v4241
    %v4243 = vpop.f32.mrb[0].mxu0
    %4244 = vmatprep.mubr.f32.mxu0 %v3900
    %4245 = vmatmul.mubr.f32.gmra.mrb[0].mxu0 %v3899
    %v4246 = vpop.f32.mrb[0].mxu0
    %v4247 = vadd.f32 0.0, %v4246
    %v4248 = vpop.f32.mrb[0].mxu0
    %4249 = vmatprep.mubr.f32.mxu0 %v3904
    %4250 = vmatmul.mubr.f32.gmra.mrb[0].mxu0 %v3903
    %v4251 = vpop.f32.mrb[0].mxu0
    %v4252 = vadd.f32 0.0, %v4251
    %v4253 = vpop.f32.mrb[0].mxu0
    %4254 = vmatprep.mubr.f32.mxu0 %v3908
    %4255 = vmatmul.mubr.f32.gmra.mrb[0].mxu0 %v3907
    %v4256 = vpop.f32.mrb[0].mxu0
    %v4257 = vadd.f32 0.0, %v4256
    %v4258 = vpop.f32.mrb[0].mxu0
    %4259 = vmatprep.mubr.f32.mxu0 %v3912
    %4260 = vmatmul.mubr.f32.gmra.mrb[0].mxu0 %v3911
    %v4261 = vpop.f32.mrb[0].mxu0
    %v4262 = vadd.f32 0.0, %v4261
    %v4263 = vpop.f32.mrb[0].mxu0
    %4264 = vmatprep.mubr.f32.mxu0 %v3916
    %4265 = vmatmul.mubr.f32.gmra.mrb[0].mxu0 %v3915
    %v4266 = vpop.f32.mrb[0].mxu0
    %v4267 = vadd.f32 0.0, %v4266
    %v4268 = vpop.f32.mrb[0].mxu0
    %4269 = vmatprep.mubr.f32.mxu0 %v3920
    %4270 = vmatmul.mubr.f32.gmra.mrb[0].mxu0 %v3919
    %v4271 = vpop.f32.mrb[0].mxu0
    %v4272 = vadd.f32 0.0, %v4271
    %v4273 = vpop.f32.mrb[0].mxu0
    %4274 = vmatprep.mubr.f32.mxu0 %v3924
    %4275 = vmatmul.mubr.f32.gmra.mrb[0].mxu0 %v3923
    %v4276 = vpop.f32.mrb[0].mxu0
    %v4277 = vadd.f32 0.0, %v4276
    %v4278 = vpop.f32.mrb[0].mxu0
    %4279 = vmatprep.mubr.f32.mxu0 %v3928
    %4280 = vmatmul.mubr.f32.gmra.mrb[0].mxu0 %v3927
    %v4281 = vpop.f32.mrb[0].mxu0
    %v4282 = vadd.f32 0.0, %v4281
    %v4283 = vpop.f32.mrb[0].mxu0
    %4284 = vmatprep.mubr.f32.mxu0 %v3932
    %4285 = vmatmul.mubr.f32.gmra.mrb[0].mxu0 %v3931
    %v4286 = vpop.f32.mrb[0].mxu0
    %v4287 = vadd.f32 0.0, %v4286
    %v4288 = vpop.f32.mrb[0].mxu0
    %4289 = vmatprep.mubr.f32.mxu0 %v3936
    %4290 = vmatmul.mubr.f32.gmra.mrb[0].mxu0 %v3935
    %v4291 = vpop.f32.mrb[0].mxu0
    %v4292 = vadd.f32 0.0, %v4291
    %v4293 = vpop.f32.mrb[0].mxu0
    %4294 = vmatprep.mubr.f32.mxu0 %v3940
    %4295 = vmatmul.mubr.f32.gmra.mrb[0].mxu0 %v3939
    %v4296 = vpop.f32.mrb[0].mxu0
    %v4297 = vadd.f32 0.0, %v4296
    %v4298 = vpop.f32.mrb[0].mxu0
    %4299 = vmatprep.mubr.f32.mxu0 %v3944
    %4300 = vmatmul.mubr.f32.gmra.mrb[0].mxu0 %v3943
    %v4301 = vpop.f32.mrb[0].mxu0
    %v4302 = vadd.f32 0.0, %v4301
    %v4303 = vpop.f32.mrb[0].mxu0
    %4304 = vmatprep.mubr.f32.mxu0 %v3948
    %4305 = vmatmul.mubr.f32.gmra.mrb[0].mxu0 %v3947
    %v4306 = vpop.f32.mrb[0].mxu0
    %v4307 = vadd.f32 0.0, %v4306
    %v4308 = vpop.f32.mrb[0].mxu0
    %4309 = vmatprep.mubr.f32.mxu0 %v3952
    %4310 = vmatmul.mubr.f32.gmra.mrb[0].mxu0 %v3951
    %v4311 = vpop.f32.mrb[0].mxu0
    %v4312 = vadd.f32 0.0, %v4311
    %v4313 = vpop.f32.mrb[0].mxu0
    %4314 = vmatprep.mubr.f32.mxu0 %v3956
    %4315 = vmatmul.mubr.f32.gmra.mrb[0].mxu0 %v3955
    %v4316 = vpop.f32.mrb[0].mxu0
    %v4317 = vadd.f32 0.0, %v4316
    %v4318 = vpop.f32.mrb[0].mxu0
    %4319 = vmatprep.mubr.f32.mxu0 %v3960
    %4320 = vmatmul.mubr.f32.gmra.mrb[0].mxu0 %v3959
    %v4321 = vpop.f32.mrb[0].mxu0
    %v4322 = vadd.f32 0.0, %v4321
    %v4323 = vpop.f32.mrb[0].mxu0
    %4324 = vmatprep.mubr.f32.mxu0 %v3964
    %4325 = vmatmul.mubr.f32.gmra.mrb[0].mxu0 %v3963
    %v4326 = vpop.f32.mrb[0].mxu0
    %v4327 = vadd.f32 0.0, %v4326
    %v4328 = vpop.f32.mrb[0].mxu0
    %4329 = vmatprep.mubr.f32.mxu0 %v3968
    %4330 = vmatmul.mubr.f32.gmra.mrb[0].mxu0 %v3967
    %v4331 = vpop.f32.mrb[0].mxu0
    %v4332 = vadd.f32 0.0, %v4331
    %v4333 = vpop.f32.mrb[0].mxu0
    %4334 = vmatprep.mubr.f32.mxu0 %v3972
    %4335 = vmatmul.mubr.f32.gmra.mrb[0].mxu0 %v3971
    %v4336 = vpop.f32.mrb[0].mxu0
    %v4337 = vadd.f32 0.0, %v4336
    %v4338 = vpop.f32.mrb[0].mxu0
    %4339 = vmatprep.mubr.f32.mxu0 %v3976
    %4340 = vmatmul.mubr.f32.gmra.mrb[0].mxu0 %v3975
    %v4341 = vpop.f32.mrb[0].mxu0
    %v4342 = vadd.f32 0.0, %v4341
    %v4343 = vpop.f32.mrb[0].mxu0
    %4344 = vmatprep.mubr.f32.mxu0 %v3980
    %4345 = vmatmul.mubr.f32.gmra.mrb[0].mxu0 %v3979
    %v4346 = vpop.f32.mrb[0].mxu0
    %v4347 = vadd.f32 0.0, %v4346
    %v4348 = vpop.f32.mrb[0].mxu0
    %4349 = vmatprep.mubr.f32.mxu0 %v3984
    %4350 = vmatmul.mubr.f32.gmra.mrb[0].mxu0 %v3983
    %v4351 = vpop.f32.mrb[0].mxu0
    %v4352 = vadd.f32 0.0, %v4351
    %v4353 = vpop.f32.mrb[0].mxu0
    %4354 = vmatprep.mubr.f32.mxu0 %v3988
    %4355 = vmatmul.mubr.f32.gmra.mrb[0].mxu0 %v3987
    %v4356 = vpop.f32.mrb[0].mxu0
    %v4357 = vadd.f32 0.0, %v4356
    %v4358 = vpop.f32.mrb[0].mxu0
    %4359 = vmatprep.mubr.f32.mxu0 %v3992
    %4360 = vmatmul.mubr.f32.gmra.mrb[0].mxu0 %v3991
    %v4361 = vpop.f32.mrb[0].mxu0
    %v4362 = vadd.f32 0.0, %v4361
    %v4363 = vpop.f32.mrb[0].mxu0
    %4364 = vmatprep.mubr.f32.mxu0 %v3996
    %4365 = vmatmul.mubr.f32.gmra.mrb[0].mxu0 %v3995
    %v4366 = vpop.f32.mrb[0].mxu0
    %v4367 = vadd.f32 0.0, %v4366
    %v4368 = vpop.f32.mrb[0].mxu0
    %4369 = vmatprep.mubr.f32.mxu0 %v4000
    %4370 = vmatmul.mubr.f32.gmra.mrb[0].mxu0 %v3999
    %v4371 = vpop.f32.mrb[0].mxu0
    %v4372 = vadd.f32 0.0, %v4371
    %v4373 = vpop.f32.mrb[0].mxu0
    %4374 = vmatprep.mubr.f32.mxu0 %v4004
    %4375 = vmatmul.mubr.f32.gmra.mrb[0].mxu0 %v4003
    %v4376 = vpop.f32.mrb[0].mxu0
    %v4377 = vadd.f32 0.0, %v4376
    %v4378 = vpop.f32.mrb[0].mxu0
    %4379 = vmatprep.mubr.f32.mxu0 %v4008
    %4380 = vmatmul.mubr.f32.gmra.mrb[0].mxu0 %v4007
    %v4381 = vpop.f32.mrb[0].mxu0
    %v4382 = vadd.f32 0.0, %v4381
    %v4383 = vpop.f32.mrb[0].mxu0
    %4384 = vmatprep.mubr.f32.mxu0 %v4012
    %4385 = vmatmul.mubr.f32.gmra.mrb[0].mxu0 %v4011
    %v4386 = vpop.f32.mrb[0].mxu0
    %v4387 = vadd.f32 0.0, %v4386
    %v4388 = vpop.f32.mrb[0].mxu0
    %4389 = vmatprep.mubr.f32.mxu0 %v4016
    %4390 = vmatmul.mubr.f32.gmra.mrb[0].mxu0 %v4015
    %v4391 = vpop.f32.mrb[0].mxu0
    %v4392 = vadd.f32 0.0, %v4391
    %v4393 = vpop.f32.mrb[0].mxu0
    %4394 = vmatprep.mubr.f32.mxu0 %v4020
    %4395 = vmatmul.mubr.f32.gmra.mrb[0].mxu0 %v4019
    %v4396 = vpop.f32.mrb[0].mxu0
    %v4397 = vadd.f32 0.0, %v4396
    %v4398 = vpop.f32.mrb[0].mxu0
    %4399 = vmatprep.mubr.f32.mxu0 %v4024
    %4400 = vmatmul.mubr.f32.gmra.mrb[0].mxu0 %v4023
    %v4401 = vpop.f32.mrb[0].mxu0
    %v4402 = vadd.f32 0.0, %v4401
    %v4403 = vpop.f32.mrb[0].mxu0
    %4404 = vmatprep.mubr.f32.mxu0 %v4028
    %4405 = vmatmul.mubr.f32.gmra.mrb[0].mxu0 %v4027
    %v4406 = vpop.f32.mrb[0].mxu0
    %v4407 = vadd.f32 0.0, %v4406
    %v4408 = vpop.f32.mrb[0].mxu0
    %4409 = vmatprep.mubr.f32.mxu0 %v4032
    %4410 = vmatmul.mubr.f32.gmra.mrb[0].mxu0 %v4031
    %v4411 = vpop.f32.mrb[0].mxu0
    %v4412 = vadd.f32 0.0, %v4411
    %v4413 = vpop.f32.mrb[0].mxu0
    %4414 = vmatprep.mubr.f32.mxu0 %v4036
    %4415 = vmatmul.mubr.f32.gmra.mrb[0].mxu0 %v4035
    %v4416 = vpop.f32.mrb[0].mxu0
    %v4417 = vadd.f32 0.0, %v4416
    %v4418 = vpop.f32.mrb[0].mxu0
    %4419 = vmatprep.mubr.f32.mxu0 %v4040
    %4420 = vmatmul.mubr.f32.gmra.mrb[0].mxu0 %v4039
    %v4421 = vpop.f32.mrb[0].mxu0
    %v4422 = vadd.f32 0.0, %v4421
    %v4423 = vpop.f32.mrb[0].mxu0
    %4424 = vmatprep.mubr.f32.mxu0 %v4044
    %4425 = vmatmul.mubr.f32.gmra.mrb[0].mxu0 %v4043
    %v4426 = vpop.f32.mrb[0].mxu0
    %v4427 = vadd.f32 0.0, %v4426
    %v4428 = vpop.f32.mrb[0].mxu0
    %4429 = vmatprep.mubr.f32.mxu0 %v4048
    %4430 = vmatmul.mubr.f32.gmra.mrb[0].mxu0 %v4047
    %v4431 = vpop.f32.mrb[0].mxu0
    %v4432 = vadd.f32 0.0, %v4431
    %v4433 = vpop.f32.mrb[0].mxu0
    %4434 = vmatprep.mubr.f32.mxu0 %v4052
    %4435 = vmatmul.mubr.f32.gmra.mrb[0].mxu0 %v4051
    %v4436 = vpop.f32.mrb[0].mxu0
    %v4437 = vadd.f32 0.0, %v4436
    %v4438 = vpop.f32.mrb[0].mxu0
    %4439 = vdwg.mxu0
    %4440 = vmatprep.subr.mxu0 0.0
    %4441 = vmatpush1.msra.mxu0 %v3767
    %4442 = vmatprep.subr.mxu0 0.0
    %4443 = vmatpush1.msra.mxu0 %v3768
    %4444 = vmatprep.subr.mxu0 0.0
    %4445 = vmatpush1.msra.mxu0 %v3769
    %4446 = vmatprep.subr.mxu0 0.0
    %4447 = vmatpush1.msra.mxu0 %v3770
    %4448 = vmatprep.subr.mxu0 0.0
    %4449 = vmatpush1.msra.mxu0 %v3771
    %4450 = vmatprep.subr.mxu0 0.0
    %4451 = vmatpush1.msra.mxu0 %v3772
    %4452 = vmatprep.subr.mxu0 0.0
    %4453 = vmatpush1.msra.mxu0 %v3773
    %4454 = vmatprep.subr.mxu0 0.0
    %4455 = vmatpush1.msra.mxu0 %v3774
    %4456 = vmatprep.subr.mxu0 0.0
    %4457 = vmatpush1.msra.mxu0 %v3775
    %4458 = vmatprep.subr.mxu0 0.0
    %4459 = vmatpush1.msra.mxu0 %v3776
    %4460 = vmatprep.subr.mxu0 0.0
    %4461 = vmatpush1.msra.mxu0 %v3777
    %4462 = vmatprep.subr.mxu0 0.0
    %4463 = vmatpush1.msra.mxu0 %v3778
    %4464 = vmatprep.subr.mxu0 0.0
    %4465 = vmatpush1.msra.mxu0 %v3779
    %4466 = vmatprep.subr.mxu0 0.0
    %4467 = vmatpush1.msra.mxu0 %v3780
    %4468 = vmatprep.subr.mxu0 0.0
    %4469 = vmatpush1.msra.mxu0 %v3781
    %4470 = vmatprep.subr.mxu0 0.0
    %4471 = vmatpush1.msra.mxu0 %v3782
    %4472 = vmatprep.subr.mxu0 0.0
    %4473 = vmatpush1.msra.mxu0 %v3783
    %4474 = vmatprep.subr.mxu0 0.0
    %4475 = vmatpush1.msra.mxu0 %v3784
    %4476 = vmatprep.subr.mxu0 0.0
    %4477 = vmatpush1.msra.mxu0 %v3785
    %4478 = vmatprep.subr.mxu0 0.0
    %4479 = vmatpush1.msra.mxu0 %v3786
    %4480 = vmatprep.subr.mxu0 0.0
    %4481 = vmatpush1.msra.mxu0 %v3787
    %4482 = vmatprep.subr.mxu0 0.0
    %4483 = vmatpush1.msra.mxu0 %v3788
    %4484 = vmatprep.subr.mxu0 0.0
    %4485 = vmatpush1.msra.mxu0 %v3789
    %4486 = vmatprep.subr.mxu0 0.0
    %4487 = vmatpush1.msra.mxu0 %v3790
    %4488 = vmatprep.subr.mxu0 0.0
    %4489 = vmatpush1.msra.mxu0 %v3791
    %4490 = vmatprep.subr.mxu0 0.0
    %4491 = vmatpush1.msra.mxu0 %v3792
    %4492 = vmatprep.subr.mxu0 0.0
    %4493 = vmatpush1.msra.mxu0 %v3793
    %4494 = vmatprep.subr.mxu0 0.0
    %4495 = vmatpush1.msra.mxu0 %v3794
    %4496 = vmatprep.subr.mxu0 0.0
    %4497 = vmatpush1.msra.mxu0 %v3795
    %4498 = vmatprep.subr.mxu0 0.0
    %4499 = vmatpush1.msra.mxu0 %v3796
    %4500 = vmatprep.subr.mxu0 0.0
    %4501 = vmatpush1.msra.mxu0 %v3797
    %4502 = vmatprep.subr.mxu0 0.0
    %4503 = vmatpush1.msra.mxu0 %v3798
    %4504 = vmatprep.mubr.f32.mxu0 %v3802
    %4505 = vmatmul.mubr.f32.gmra.mrb[0].mxu0 %v3801
    %v4506 = vpop.f32.mrb[0].mxu0
    %v4507 = vadd.f32 %v4122, %v4506
    %v4508 = vpop.f32.mrb[0].mxu0
    %4509 = vmatprep.mubr.f32.mxu0 %v3806
    %4510 = vmatmul.mubr.f32.gmra.mrb[0].mxu0 %v3805
    %v4511 = vpop.f32.mrb[0].mxu0
    %v4512 = vadd.f32 %v4127, %v4511
    %v4513 = vpop.f32.mrb[0].mxu0
    %4514 = vmatprep.mubr.f32.mxu0 %v3810
    %4515 = vmatmul.mubr.f32.gmra.mrb[0].mxu0 %v3809
    %v4516 = vpop.f32.mrb[0].mxu0
    %v4517 = vadd.f32 %v4132, %v4516
    %v4518 = vpop.f32.mrb[0].mxu0
    %4519 = vmatprep.mubr.f32.mxu0 %v3814
    %4520 = vmatmul.mubr.f32.gmra.mrb[0].mxu0 %v3813
    %v4521 = vpop.f32.mrb[0].mxu0
    %v4522 = vadd.f32 %v4137, %v4521
    %v4523 = vpop.f32.mrb[0].mxu0
    %4524 = vmatprep.mubr.f32.mxu0 %v3818
    %4525 = vmatmul.mubr.f32.gmra.mrb[0].mxu0 %v3817
    %v4526 = vpop.f32.mrb[0].mxu0
    %v4527 = vadd.f32 %v4142, %v4526
    %v4528 = vpop.f32.mrb[0].mxu0
    %4529 = vmatprep.mubr.f32.mxu0 %v3822
    %4530 = vmatmul.mubr.f32.gmra.mrb[0].mxu0 %v3821
    %v4531 = vpop.f32.mrb[0].mxu0
    %v4532 = vadd.f32 %v4147, %v4531
    %v4533 = vpop.f32.mrb[0].mxu0
    %4534 = vmatprep.mubr.f32.mxu0 %v3826
    %4535 = vmatmul.mubr.f32.gmra.mrb[0].mxu0 %v3825
    %v4536 = vpop.f32.mrb[0].mxu0
    %v4537 = vadd.f32 %v4152, %v4536
    %v4538 = vpop.f32.mrb[0].mxu0
    %4539 = vmatprep.mubr.f32.mxu0 %v3830
    %4540 = vmatmul.mubr.f32.gmra.mrb[0].mxu0 %v3829
    %v4541 = vpop.f32.mrb[0].mxu0
    %v4542 = vadd.f32 %v4157, %v4541
    %v4543 = vpop.f32.mrb[0].mxu0
    %4544 = vmatprep.mubr.f32.mxu0 %v3834
    %4545 = vmatmul.mubr.f32.gmra.mrb[0].mxu0 %v3833
    %v4546 = vpop.f32.mrb[0].mxu0
    %v4547 = vadd.f32 %v4162, %v4546
    %v4548 = vpop.f32.mrb[0].mxu0
    %4549 = vmatprep.mubr.f32.mxu0 %v3838
    %4550 = vmatmul.mubr.f32.gmra.mrb[0].mxu0 %v3837
    %v4551 = vpop.f32.mrb[0].mxu0
    %v4552 = vadd.f32 %v4167, %v4551
    %v4553 = vpop.f32.mrb[0].mxu0
    %4554 = vmatprep.mubr.f32.mxu0 %v3842
    %4555 = vmatmul.mubr.f32.gmra.mrb[0].mxu0 %v3841
    %v4556 = vpop.f32.mrb[0].mxu0
    %v4557 = vadd.f32 %v4172, %v4556
    %v4558 = vpop.f32.mrb[0].mxu0
    %4559 = vmatprep.mubr.f32.mxu0 %v3846
    %4560 = vmatmul.mubr.f32.gmra.mrb[0].mxu0 %v3845
    %v4561 = vpop.f32.mrb[0].mxu0
    %v4562 = vadd.f32 %v4177, %v4561
    %v4563 = vpop.f32.mrb[0].mxu0
    %4564 = vmatprep.mubr.f32.mxu0 %v3850
    %4565 = vmatmul.mubr.f32.gmra.mrb[0].mxu0 %v3849
    %v4566 = vpop.f32.mrb[0].mxu0
    %v4567 = vadd.f32 %v4182, %v4566
    %v4568 = vpop.f32.mrb[0].mxu0
    %4569 = vmatprep.mubr.f32.mxu0 %v3854
    %4570 = vmatmul.mubr.f32.gmra.mrb[0].mxu0 %v3853
    %v4571 = vpop.f32.mrb[0].mxu0
    %v4572 = vadd.f32 %v4187, %v4571
    %v4573 = vpop.f32.mrb[0].mxu0
    %4574 = vmatprep.mubr.f32.mxu0 %v3858
    %4575 = vmatmul.mubr.f32.gmra.mrb[0].mxu0 %v3857
    %v4576 = vpop.f32.mrb[0].mxu0
    %v4577 = vadd.f32 %v4192, %v4576
    %v4578 = vpop.f32.mrb[0].mxu0
    %4579 = vmatprep.mubr.f32.mxu0 %v3862
    %4580 = vmatmul.mubr.f32.gmra.mrb[0].mxu0 %v3861
    %v4581 = vpop.f32.mrb[0].mxu0
    %v4582 = vadd.f32 %v4197, %v4581
    %v4583 = vpop.f32.mrb[0].mxu0
    %4584 = vmatprep.mubr.f32.mxu0 %v3866
    %4585 = vmatmul.mubr.f32.gmra.mrb[0].mxu0 %v3865
    %v4586 = vpop.f32.mrb[0].mxu0
    %v4587 = vadd.f32 %v4202, %v4586
    %v4588 = vpop.f32.mrb[0].mxu0
    %4589 = vmatprep.mubr.f32.mxu0 %v3870
    %4590 = vmatmul.mubr.f32.gmra.mrb[0].mxu0 %v3869
    %v4591 = vpop.f32.mrb[0].mxu0
    %v4592 = vadd.f32 %v4207, %v4591
    %v4593 = vpop.f32.mrb[0].mxu0
    %4594 = vmatprep.mubr.f32.mxu0 %v3874
    %4595 = vmatmul.mubr.f32.gmra.mrb[0].mxu0 %v3873
    %v4596 = vpop.f32.mrb[0].mxu0
    %v4597 = vadd.f32 %v4212, %v4596
    %v4598 = vpop.f32.mrb[0].mxu0
    %4599 = vmatprep.mubr.f32.mxu0 %v3878
    %4600 = vmatmul.mubr.f32.gmra.mrb[0].mxu0 %v3877
    %v4601 = vpop.f32.mrb[0].mxu0
    %v4602 = vadd.f32 %v4217, %v4601
    %v4603 = vpop.f32.mrb[0].mxu0
    %4604 = vmatprep.mubr.f32.mxu0 %v3882
    %4605 = vmatmul.mubr.f32.gmra.mrb[0].mxu0 %v3881
    %v4606 = vpop.f32.mrb[0].mxu0
    %v4607 = vadd.f32 %v4222, %v4606
    %v4608 = vpop.f32.mrb[0].mxu0
    %4609 = vmatprep.mubr.f32.mxu0 %v3886
    %4610 = vmatmul.mubr.f32.gmra.mrb[0].mxu0 %v3885
    %v4611 = vpop.f32.mrb[0].mxu0
    %v4612 = vadd.f32 %v4227, %v4611
    %v4613 = vpop.f32.mrb[0].mxu0
    %4614 = vmatprep.mubr.f32.mxu0 %v3890
    %4615 = vmatmul.mubr.f32.gmra.mrb[0].mxu0 %v3889
    %v4616 = vpop.f32.mrb[0].mxu0
    %v4617 = vadd.f32 %v4232, %v4616
    %v4618 = vpop.f32.mrb[0].mxu0
    %4619 = vmatprep.mubr.f32.mxu0 %v3894
    %4620 = vmatmul.mubr.f32.gmra.mrb[0].mxu0 %v3893
    %v4621 = vpop.f32.mrb[0].mxu0
    %v4622 = vadd.f32 %v4237, %v4621
    %v4623 = vpop.f32.mrb[0].mxu0
    %4624 = vmatprep.mubr.f32.mxu0 %v3898
    %4625 = vmatmul.mubr.f32.gmra.mrb[0].mxu0 %v3897
    %v4626 = vpop.f32.mrb[0].mxu0
    %v4627 = vadd.f32 %v4242, %v4626
    %v4628 = vpop.f32.mrb[0].mxu0
    %4629 = vmatprep.mubr.f32.mxu0 %v3902
    %4630 = vmatmul.mubr.f32.gmra.mrb[0].mxu0 %v3901
    %v4631 = vpop.f32.mrb[0].mxu0
    %v4632 = vadd.f32 %v4247, %v4631
    %v4633 = vpop.f32.mrb[0].mxu0
    %4634 = vmatprep.mubr.f32.mxu0 %v3906
    %4635 = vmatmul.mubr.f32.gmra.mrb[0].mxu0 %v3905
    %v4636 = vpop.f32.mrb[0].mxu0
    %v4637 = vadd.f32 %v4252, %v4636
    %v4638 = vpop.f32.mrb[0].mxu0
    %4639 = vmatprep.mubr.f32.mxu0 %v3910
    %4640 = vmatmul.mubr.f32.gmra.mrb[0].mxu0 %v3909
    %v4641 = vpop.f32.mrb[0].mxu0
    %v4642 = vadd.f32 %v4257, %v4641
    %v4643 = vpop.f32.mrb[0].mxu0
    %4644 = vmatprep.mubr.f32.mxu0 %v3914
    %4645 = vmatmul.mubr.f32.gmra.mrb[0].mxu0 %v3913
    %v4646 = vpop.f32.mrb[0].mxu0
    %v4647 = vadd.f32 %v4262, %v4646
    %v4648 = vpop.f32.mrb[0].mxu0
    %4649 = vmatprep.mubr.f32.mxu0 %v3918
    %4650 = vmatmul.mubr.f32.gmra.mrb[0].mxu0 %v3917
    %v4651 = vpop.f32.mrb[0].mxu0
    %v4652 = vadd.f32 %v4267, %v4651
    %v4653 = vpop.f32.mrb[0].mxu0
    %4654 = vmatprep.mubr.f32.mxu0 %v3922
    %4655 = vmatmul.mubr.f32.gmra.mrb[0].mxu0 %v3921
    %v4656 = vpop.f32.mrb[0].mxu0
    %v4657 = vadd.f32 %v4272, %v4656
    %v4658 = vpop.f32.mrb[0].mxu0
    %4659 = vmatprep.mubr.f32.mxu0 %v3926
    %4660 = vmatmul.mubr.f32.gmra.mrb[0].mxu0 %v3925
    %v4661 = vpop.f32.mrb[0].mxu0
    %v4662 = vadd.f32 %v4277, %v4661
    %v4663 = vpop.f32.mrb[0].mxu0
    %4664 = vmatprep.mubr.f32.mxu0 %v3930
    %4665 = vmatmul.mubr.f32.gmra.mrb[0].mxu0 %v3929
    %v4666 = vpop.f32.mrb[0].mxu0
    %v4667 = vadd.f32 %v4282, %v4666
    %v4668 = vpop.f32.mrb[0].mxu0
    %4669 = vmatprep.mubr.f32.mxu0 %v3934
    %4670 = vmatmul.mubr.f32.gmra.mrb[0].mxu0 %v3933
    %v4671 = vpop.f32.mrb[0].mxu0
    %v4672 = vadd.f32 %v4287, %v4671
    %v4673 = vpop.f32.mrb[0].mxu0
    %4674 = vmatprep.mubr.f32.mxu0 %v3938
    %4675 = vmatmul.mubr.f32.gmra.mrb[0].mxu0 %v3937
    %v4676 = vpop.f32.mrb[0].mxu0
    %v4677 = vadd.f32 %v4292, %v4676
    %v4678 = vpop.f32.mrb[0].mxu0
    %4679 = vmatprep.mubr.f32.mxu0 %v3942
    %4680 = vmatmul.mubr.f32.gmra.mrb[0].mxu0 %v3941
    %v4681 = vpop.f32.mrb[0].mxu0
    %v4682 = vadd.f32 %v4297, %v4681
    %v4683 = vpop.f32.mrb[0].mxu0
    %4684 = vmatprep.mubr.f32.mxu0 %v3946
    %4685 = vmatmul.mubr.f32.gmra.mrb[0].mxu0 %v3945
    %v4686 = vpop.f32.mrb[0].mxu0
    %v4687 = vadd.f32 %v4302, %v4686
    %v4688 = vpop.f32.mrb[0].mxu0
    %4689 = vmatprep.mubr.f32.mxu0 %v3950
    %4690 = vmatmul.mubr.f32.gmra.mrb[0].mxu0 %v3949
    %v4691 = vpop.f32.mrb[0].mxu0
    %v4692 = vadd.f32 %v4307, %v4691
    %v4693 = vpop.f32.mrb[0].mxu0
    %4694 = vmatprep.mubr.f32.mxu0 %v3954
    %4695 = vmatmul.mubr.f32.gmra.mrb[0].mxu0 %v3953
    %v4696 = vpop.f32.mrb[0].mxu0
    %v4697 = vadd.f32 %v4312, %v4696
    %v4698 = vpop.f32.mrb[0].mxu0
    %4699 = vmatprep.mubr.f32.mxu0 %v3958
    %4700 = vmatmul.mubr.f32.gmra.mrb[0].mxu0 %v3957
    %v4701 = vpop.f32.mrb[0].mxu0
    %v4702 = vadd.f32 %v4317, %v4701
    %v4703 = vpop.f32.mrb[0].mxu0
    %4704 = vmatprep.mubr.f32.mxu0 %v3962
    %4705 = vmatmul.mubr.f32.gmra.mrb[0].mxu0 %v3961
    %v4706 = vpop.f32.mrb[0].mxu0
    %v4707 = vadd.f32 %v4322, %v4706
    %v4708 = vpop.f32.mrb[0].mxu0
    %4709 = vmatprep.mubr.f32.mxu0 %v3966
    %4710 = vmatmul.mubr.f32.gmra.mrb[0].mxu0 %v3965
    %v4711 = vpop.f32.mrb[0].mxu0
    %v4712 = vadd.f32 %v4327, %v4711
    %v4713 = vpop.f32.mrb[0].mxu0
    %4714 = vmatprep.mubr.f32.mxu0 %v3970
    %4715 = vmatmul.mubr.f32.gmra.mrb[0].mxu0 %v3969
    %v4716 = vpop.f32.mrb[0].mxu0
    %v4717 = vadd.f32 %v4332, %v4716
    %v4718 = vpop.f32.mrb[0].mxu0
    %4719 = vmatprep.mubr.f32.mxu0 %v3974
    %4720 = vmatmul.mubr.f32.gmra.mrb[0].mxu0 %v3973
    %v4721 = vpop.f32.mrb[0].mxu0
    %v4722 = vadd.f32 %v4337, %v4721
    %v4723 = vpop.f32.mrb[0].mxu0
    %4724 = vmatprep.mubr.f32.mxu0 %v3978
    %4725 = vmatmul.mubr.f32.gmra.mrb[0].mxu0 %v3977
    %v4726 = vpop.f32.mrb[0].mxu0
    %v4727 = vadd.f32 %v4342, %v4726
    %v4728 = vpop.f32.mrb[0].mxu0
    %4729 = vmatprep.mubr.f32.mxu0 %v3982
    %4730 = vmatmul.mubr.f32.gmra.mrb[0].mxu0 %v3981
    %v4731 = vpop.f32.mrb[0].mxu0
    %v4732 = vadd.f32 %v4347, %v4731
    %v4733 = vpop.f32.mrb[0].mxu0
    %4734 = vmatprep.mubr.f32.mxu0 %v3986
    %4735 = vmatmul.mubr.f32.gmra.mrb[0].mxu0 %v3985
    %v4736 = vpop.f32.mrb[0].mxu0
    %v4737 = vadd.f32 %v4352, %v4736
    %v4738 = vpop.f32.mrb[0].mxu0
    %4739 = vmatprep.mubr.f32.mxu0 %v3990
    %4740 = vmatmul.mubr.f32.gmra.mrb[0].mxu0 %v3989
    %v4741 = vpop.f32.mrb[0].mxu0
    %v4742 = vadd.f32 %v4357, %v4741
    %v4743 = vpop.f32.mrb[0].mxu0
    %4744 = vmatprep.mubr.f32.mxu0 %v3994
    %4745 = vmatmul.mubr.f32.gmra.mrb[0].mxu0 %v3993
    %v4746 = vpop.f32.mrb[0].mxu0
    %v4747 = vadd.f32 %v4362, %v4746
    %v4748 = vpop.f32.mrb[0].mxu0
    %4749 = vmatprep.mubr.f32.mxu0 %v3998
    %4750 = vmatmul.mubr.f32.gmra.mrb[0].mxu0 %v3997
    %v4751 = vpop.f32.mrb[0].mxu0
    %v4752 = vadd.f32 %v4367, %v4751
    %v4753 = vpop.f32.mrb[0].mxu0
    %4754 = vmatprep.mubr.f32.mxu0 %v4002
    %4755 = vmatmul.mubr.f32.gmra.mrb[0].mxu0 %v4001
    %v4756 = vpop.f32.mrb[0].mxu0
    %v4757 = vadd.f32 %v4372, %v4756
    %v4758 = vpop.f32.mrb[0].mxu0
    %4759 = vmatprep.mubr.f32.mxu0 %v4006
    %4760 = vmatmul.mubr.f32.gmra.mrb[0].mxu0 %v4005
    %v4761 = vpop.f32.mrb[0].mxu0
    %v4762 = vadd.f32 %v4377, %v4761
    %v4763 = vpop.f32.mrb[0].mxu0
    %4764 = vmatprep.mubr.f32.mxu0 %v4010
    %4765 = vmatmul.mubr.f32.gmra.mrb[0].mxu0 %v4009
    %v4766 = vpop.f32.mrb[0].mxu0
    %v4767 = vadd.f32 %v4382, %v4766
    %v4768 = vpop.f32.mrb[0].mxu0
    %4769 = vmatprep.mubr.f32.mxu0 %v4014
    %4770 = vmatmul.mubr.f32.gmra.mrb[0].mxu0 %v4013
    %v4771 = vpop.f32.mrb[0].mxu0
    %v4772 = vadd.f32 %v4387, %v4771
    %v4773 = vpop.f32.mrb[0].mxu0
    %4774 = vmatprep.mubr.f32.mxu0 %v4018
    %4775 = vmatmul.mubr.f32.gmra.mrb[0].mxu0 %v4017
    %v4776 = vpop.f32.mrb[0].mxu0
    %v4777 = vadd.f32 %v4392, %v4776
    %v4778 = vpop.f32.mrb[0].mxu0
    %4779 = vmatprep.mubr.f32.mxu0 %v4022
    %4780 = vmatmul.mubr.f32.gmra.mrb[0].mxu0 %v4021
    %v4781 = vpop.f32.mrb[0].mxu0
    %v4782 = vadd.f32 %v4397, %v4781
    %v4783 = vpop.f32.mrb[0].mxu0
    %4784 = vmatprep.mubr.f32.mxu0 %v4026
    %4785 = vmatmul.mubr.f32.gmra.mrb[0].mxu0 %v4025
    %v4786 = vpop.f32.mrb[0].mxu0
    %v4787 = vadd.f32 %v4402, %v4786
    %v4788 = vpop.f32.mrb[0].mxu0
    %4789 = vmatprep.mubr.f32.mxu0 %v4030
    %4790 = vmatmul.mubr.f32.gmra.mrb[0].mxu0 %v4029
    %v4791 = vpop.f32.mrb[0].mxu0
    %v4792 = vadd.f32 %v4407, %v4791
    %v4793 = vpop.f32.mrb[0].mxu0
    %4794 = vmatprep.mubr.f32.mxu0 %v4034
    %4795 = vmatmul.mubr.f32.gmra.mrb[0].mxu0 %v4033
    %v4796 = vpop.f32.mrb[0].mxu0
    %v4797 = vadd.f32 %v4412, %v4796
    %v4798 = vpop.f32.mrb[0].mxu0
    %4799 = vmatprep.mubr.f32.mxu0 %v4038
    %4800 = vmatmul.mubr.f32.gmra.mrb[0].mxu0 %v4037
    %v4801 = vpop.f32.mrb[0].mxu0
    %v4802 = vadd.f32 %v4417, %v4801
    %v4803 = vpop.f32.mrb[0].mxu0
    %4804 = vmatprep.mubr.f32.mxu0 %v4042
    %4805 = vmatmul.mubr.f32.gmra.mrb[0].mxu0 %v4041
    %v4806 = vpop.f32.mrb[0].mxu0
    %v4807 = vadd.f32 %v4422, %v4806
    %v4808 = vpop.f32.mrb[0].mxu0
    %4809 = vmatprep.mubr.f32.mxu0 %v4046
    %4810 = vmatmul.mubr.f32.gmra.mrb[0].mxu0 %v4045
    %v4811 = vpop.f32.mrb[0].mxu0
    %v4812 = vadd.f32 %v4427, %v4811
    %v4813 = vpop.f32.mrb[0].mxu0
    %4814 = vmatprep.mubr.f32.mxu0 %v4050
    %4815 = vmatmul.mubr.f32.gmra.mrb[0].mxu0 %v4049
    %v4816 = vpop.f32.mrb[0].mxu0
    %v4817 = vadd.f32 %v4432, %v4816
    %v4818 = vpop.f32.mrb[0].mxu0
    %4819 = vmatprep.mubr.f32.mxu0 %v4054
    %4820 = vmatmul.mubr.f32.gmra.mrb[0].mxu0 %v4053
    %v4821 = vpop.f32.mrb[0].mxu0
    %v4822 = vadd.f32 %v4437, %v4821
    %v4823 = vpop.f32.mrb[0].mxu0
    %4824 = vdwg.mxu0
    %4825 = vst.msk [vmem:[%s7] sm:$0xff] %vm2516, %v4507
    %4826 = vst.msk [vmem:[%s7 + $0x8] sm:$0xff] %vm2516, %v4512
    %4827 = vst.msk [vmem:[%s7 + $0x10] sm:$0xff] %vm2516, %v4517
    %4828 = vst.msk [vmem:[%s7 + $0x18] sm:$0xff] %vm2516, %v4522
    %4829 = vst.msk [vmem:[%s7 + $0x20] sm:$0xff] %vm2516, %v4527
    %4830 = vst.msk [vmem:[%s7 + $0x28] sm:$0xff] %vm2516, %v4532
    %4831 = vst.msk [vmem:[%s7 + $0x30] sm:$0xff] %vm2516, %v4537
    %4832 = vst.msk [vmem:[%s7 + $0x38] sm:$0xff] %vm2516, %v4542
    %4833 = vst.msk [vmem:[%s7 + $0x40] sm:$0xff] %vm2516, %v4547
    %4834 = vst.msk [vmem:[%s7 + $0x48] sm:$0xff] %vm2516, %v4552
    %4835 = vst.msk [vmem:[%s7 + $0x50] sm:$0xff] %vm2516, %v4557
    %4836 = vst.msk [vmem:[%s7 + $0x58] sm:$0xff] %vm2516, %v4562
    %4837 = vst.msk [vmem:[%s7 + $0x60] sm:$0xff] %vm2516, %v4567
    %4838 = vst.msk [vmem:[%s7 + $0x68] sm:$0xff] %vm2516, %v4572
    %4839 = vst.msk [vmem:[%s7 + $0x70] sm:$0xff] %vm2516, %v4577
    %4840 = vst.msk [vmem:[%s7 + $0x78] sm:$0xff] %vm2516, %v4582
    %4841 = vst.msk [vmem:[%s7 + $0x80] sm:$0xff] %vm2516, %v4587
    %4842 = vst.msk [vmem:[%s7 + $0x88] sm:$0xff] %vm2516, %v4592
    %4843 = vst.msk [vmem:[%s7 + $0x90] sm:$0xff] %vm2516, %v4597
    %4844 = vst.msk [vmem:[%s7 + $0x98] sm:$0xff] %vm2516, %v4602
    %4845 = vst.msk [vmem:[%s7 + $0xa0] sm:$0xff] %vm2516, %v4607
    %4846 = vst.msk [vmem:[%s7 + $0xa8] sm:$0xff] %vm2516, %v4612
    %4847 = vst.msk [vmem:[%s7 + $0xb0] sm:$0xff] %vm2516, %v4617
    %4848 = vst.msk [vmem:[%s7 + $0xb8] sm:$0xff] %vm2516, %v4622
    %4849 = vst.msk [vmem:[%s7 + $0xc0] sm:$0xff] %vm2516, %v4627
    %4850 = vst.msk [vmem:[%s7 + $0xc8] sm:$0xff] %vm2516, %v4632
    %4851 = vst.msk [vmem:[%s7 + $0xd0] sm:$0xff] %vm2516, %v4637
    %4852 = vst.msk [vmem:[%s7 + $0xd8] sm:$0xff] %vm2516, %v4642
    %4853 = vst.msk [vmem:[%s7 + $0xe0] sm:$0xff] %vm2516, %v4647
    %4854 = vst.msk [vmem:[%s7 + $0xe8] sm:$0xff] %vm2516, %v4652
    %4855 = vst.msk [vmem:[%s7 + $0xf0] sm:$0xff] %vm2516, %v4657
    %4856 = vst.msk [vmem:[%s7 + $0xf8] sm:$0xff] %vm2516, %v4662
    %4857 = vst.msk [vmem:[%s7 + $0x100] sm:$0xff] %vm2516, %v4667
    %4858 = vst.msk [vmem:[%s7 + $0x108] sm:$0xff] %vm2516, %v4672
    %4859 = vst.msk [vmem:[%s7 + $0x110] sm:$0xff] %vm2516, %v4677
    %4860 = vst.msk [vmem:[%s7 + $0x118] sm:$0xff] %vm2516, %v4682
    %4861 = vst.msk [vmem:[%s7 + $0x120] sm:$0xff] %vm2516, %v4687
    %4862 = vst.msk [vmem:[%s7 + $0x128] sm:$0xff] %vm2516, %v4692
    %4863 = vst.msk [vmem:[%s7 + $0x130] sm:$0xff] %vm2516, %v4697
    %4864 = vst.msk [vmem:[%s7 + $0x138] sm:$0xff] %vm2516, %v4702
    %4865 = vst.msk [vmem:[%s7 + $0x140] sm:$0xff] %vm2516, %v4707
    %4866 = vst.msk [vmem:[%s7 + $0x148] sm:$0xff] %vm2516, %v4712
    %4867 = vst.msk [vmem:[%s7 + $0x150] sm:$0xff] %vm2516, %v4717
    %4868 = vst.msk [vmem:[%s7 + $0x158] sm:$0xff] %vm2516, %v4722
    %4869 = vst.msk [vmem:[%s7 + $0x160] sm:$0xff] %vm2516, %v4727
    %4870 = vst.msk [vmem:[%s7 + $0x168] sm:$0xff] %vm2516, %v4732
    %4871 = vst.msk [vmem:[%s7 + $0x170] sm:$0xff] %vm2516, %v4737
    %4872 = vst.msk [vmem:[%s7 + $0x178] sm:$0xff] %vm2516, %v4742
    %4873 = vst.msk [vmem:[%s7 + $0x180] sm:$0xff] %vm2516, %v4747
    %4874 = vst.msk [vmem:[%s7 + $0x188] sm:$0xff] %vm2516, %v4752
    %4875 = vst.msk [vmem:[%s7 + $0x190] sm:$0xff] %vm2516, %v4757
    %4876 = vst.msk [vmem:[%s7 + $0x198] sm:$0xff] %vm2516, %v4762
    %4877 = vst.msk [vmem:[%s7 + $0x1a0] sm:$0xff] %vm2516, %v4767
    %4878 = vst.msk [vmem:[%s7 + $0x1a8] sm:$0xff] %vm2516, %v4772
    %4879 = vst.msk [vmem:[%s7 + $0x1b0] sm:$0xff] %vm2516, %v4777
    %4880 = vst.msk [vmem:[%s7 + $0x1b8] sm:$0xff] %vm2516, %v4782
    %4881 = vst.msk [vmem:[%s7 + $0x1c0] sm:$0xff] %vm2516, %v4787
    %4882 = vst.msk [vmem:[%s7 + $0x1c8] sm:$0xff] %vm2516, %v4792
    %4883 = vst.msk [vmem:[%s7 + $0x1d0] sm:$0xff] %vm2516, %v4797
    %4884 = vst.msk [vmem:[%s7 + $0x1d8] sm:$0xff] %vm2516, %v4802
    %4885 = vst.msk [vmem:[%s7 + $0x1e0] sm:$0xff] %vm2516, %v4807
    %4886 = vst.msk [vmem:[%s7 + $0x1e8] sm:$0xff] %vm2516, %v4812
    %4887 = vst.msk [vmem:[%s7 + $0x1f0] sm:$0xff] %vm2516, %v4817
    %4888 = vst.msk [vmem:[%s7 + $0x1f8] sm:$0xff] %vm2516, %v4822
    // Predicated region
    $region42: #{tpu_custom_call.1} parent=1 // pred_check
      _
    $region43: #{tpu_custom_call.1} parent=1 // pred_check_branch
      %4890 = sbr.rel (0) target = $region45
    $region44: #{tpu_custom_call.1} parent=1 // pred_region
      _
    $region45: #{tpu_custom_call.1} parent=1 // pred_fallthru
      _
    // Predicated region
    $region46: #{tpu_custom_call.1} parent=1 // pred_check
      _
    $region47: #{tpu_custom_call.1} parent=1 // pred_check_branch
      %4892 = sbr.rel (0) target = $region49
    $region48: #{tpu_custom_call.1} parent=1 // pred_region
      _
    $region49: #{tpu_custom_call.1} parent=1 // pred_fallthru
      _
    // Predicated region
    $region50: #{tpu_custom_call.1} parent=1 // pred_check
      _
    $region51: #{tpu_custom_call.1} parent=1 // pred_check_branch
      %4894 = sbr.rel (0) target = $region53
    $region52: #{tpu_custom_call.1} parent=1 // pred_region
      _
    $region53: #{tpu_custom_call.1} parent=1 // pred_fallthru
      _
    // Predicated region
    $region54: #{tpu_custom_call.1} parent=1 // pred_check
      _
    $region55: #{tpu_custom_call.1} parent=1 // pred_check_branch
      %4896 = sbr.rel (0) target = $region57
    $region56: #{tpu_custom_call.1} parent=1 // pred_region
      _
    $region57: #{tpu_custom_call.1} parent=1 // pred_fallthru
      _
    %4897 = vsyncpa [#allocation3], 1
    %4898 = vsyncpa [#allocation5], 1
    %4899 = vsyncpa [#allocation8], 1

</llo_original>
